<compile_context>
chip_gen: v5e
topology: v5e:2x2
jax: 0.10.0
libtpu: 0.0.40
codegen_flags: <defaults>
</compile_context>

<pallas_src>
import functools

import jax
import jax.numpy as jnp
from jax.experimental import pallas as pl
from jax.experimental.pallas import tpu as pltpu

# ----------------------------- model config ---------------------------------
BATCH = 2
IMG_SIZE = 32          # (stand-in for 224)
IMG_CH = 3
PATCH = 8              # (stand-in for 32)
VIS_WIDTH = 64         # (stand-in for 768)
VIS_LAYERS = 2
VIS_HEADS = 4

CTX_LEN = 8            # (stand-in for 77)
VOCAB = 64             # (stand-in for 49408)
TXT_WIDTH = 64         # (stand-in for 512)
TXT_LAYERS = 2
TXT_HEADS = 4

EMBED_DIM = 32         # shared CLIP embedding dim (stand-in for 512)
MLP_RATIO = 4

LN_EPS = 1e-5
NORM_EPS = 1e-12

_NT = (((1,), (1,)), ((), ()))   # dot_general dims for A @ B.T (no transpose op)


# ----------------------------- helpers ---------------------------------------
def _ln_f32(x, g, b, eps):
    """LayerNorm over the last axis; x/g/b are f32 arrays, statistics in f32."""
    mu = jnp.mean(x, axis=-1, keepdims=True)
    var = jnp.mean((x - mu) ** 2, axis=-1, keepdims=True)
    return (x - mu) * jax.lax.rsqrt(var + eps) * g + b


# ----------------------------- fused encoder kernel --------------------------
def _encoder_kernel(x_ref, ln1_g, ln1_b, wqkv_ref, bqkv_ref, wo_ref, bo_ref,
                    ln2_g, ln2_b, wfc_ref, bfc_ref, wproj_ref, bproj_ref,
                    o_ref, res_ref, *, num_heads, causal, eps):
    """One grid step = one transformer block for one batch element.

    grid=(B, L): batch axis "parallel", layer axis "arbitrary".  The residual
    stream stays resident in the f32 VMEM scratch `res_ref` across layers.
    """
    f32 = jnp.float32
    bf16 = jnp.bfloat16
    l = pl.program_id(1)

    @pl.when(l == 0)
    def _():
        res_ref[...] = x_ref[0].astype(f32)          # load residual stream (f32 in VMEM)

    x = res_ref[...]                                 # [S, D] f32
    S, D = x.shape
    Dh = D // num_heads

    # ---------------- attention sub-block ----------------
    h = _ln_f32(x, ln1_g[0].astype(f32), ln1_b[0].astype(f32), eps).astype(bf16)

    # Fused lane-dense QKV projection: one [S,D] @ [D,3D] MXU matmul.
    # 1/sqrt(Dh) is already folded into the Q weight columns at init.
    qkv = (jnp.dot(h, wqkv_ref[0], preferred_element_type=f32)
           + bqkv_ref[0].astype(f32))                # [S, 3D]

    if causal:
        # Build the causal mask in-kernel (no DMA'd [S,S] input; vision has none).
        row = jax.lax.broadcasted_iota(jnp.int32, (S, S), 0)
        col = jax.lax.broadcasted_iota(jnp.int32, (S, S), 1)
        allowed = col <= row

    # Per-head attention on static lane slices of the fused QKV result.
    # TODO(synk): at real sizes use lax.fori_loop + VMEM ctx scratch (vreg pressure).
    ctx_parts = []
    for hd in range(num_heads):                      # static unroll, H small
        q = qkv[:, hd * Dh:(hd + 1) * Dh]                    # [S, Dh] (pre-scaled)
        k = qkv[:, D + hd * Dh:D + (hd + 1) * Dh]
        v = qkv[:, 2 * D + hd * Dh:2 * D + (hd + 1) * Dh]

        # scores = q @ k.T via NT dot_general (no explicit transpose); f32 scores.
        s = jax.lax.dot_general(q.astype(bf16), k.astype(bf16), _NT,
                                preferred_element_type=f32)  # [S, S]
        if causal:
            s = jnp.where(allowed, s, -1e30)
        s = s - jnp.max(s, axis=-1, keepdims=True)
        p = jnp.exp(s)
        p = p * pl.reciprocal(jnp.sum(p, axis=-1, keepdims=True), approx=True)

        ctx_parts.append(jnp.dot(p.astype(bf16), v.astype(bf16),
                                 preferred_element_type=f32))  # [S, Dh]

    # Lane-contiguous [S, D] context, then ONE K=D out-projection.
    ctx = jnp.concatenate(ctx_parts, axis=-1).astype(bf16)      # [S, D]
    attn = (jnp.dot(ctx, wo_ref[0], preferred_element_type=f32)
            + bo_ref[0].astype(f32))
    x = x + attn                                                 # residual add (f32)

    # ---------------- MLP sub-block (QuickGELU) ----------------
    h2 = _ln_f32(x, ln2_g[0].astype(f32), ln2_b[0].astype(f32), eps).astype(bf16)
    u = jnp.dot(h2, wfc_ref[0], preferred_element_type=f32) + bfc_ref[0].astype(f32)
    u = u * jax.nn.sigmoid(1.702 * u)                # QuickGELU in f32 (EUP sigmoid)
    m = (jnp.dot(u.astype(bf16), wproj_ref[0], preferred_element_type=f32)
         + bproj_ref[0].astype(f32))
    x = x + m

    res_ref[...] = x                                 # keep residual resident in VMEM

    @pl.when(l == pl.num_programs(1) - 1)
    def _():
        o_ref[0] = x.astype(o_ref.dtype)             # single bf16 writeback per batch elem


def encoder(x, p, num_heads, causal):
    """x: [B, S, D] bf16 -> [B, S, D] bf16.  One pallas_call for ALL layers."""
    B, S, D = x.shape
    L = p["w_qkv"].shape[0]
    mlp = p["w_fc"].shape[2]

    xmap = lambda b, l: (b, 0, 0)    # residual stream / output: per-batch block
    wmap = lambda b, l: (l, 0, 0)    # weights: layer-indexed (auto double-buffered)

    return pl.pallas_call(
        functools.partial(_encoder_kernel, num_heads=num_heads,
                          causal=causal, eps=LN_EPS),
        out_shape=jax.ShapeDtypeStruct((B, S, D), jnp.bfloat16),
        grid=(B, L),
        in_specs=[
            pl.BlockSpec((1, S, D), xmap),            # residual stream
            pl.BlockSpec((1, 1, D), wmap),            # ln1 gamma
            pl.BlockSpec((1, 1, D), wmap),            # ln1 beta
            pl.BlockSpec((1, D, 3 * D), wmap),        # fused QKV weight [D,3D]
            pl.BlockSpec((1, 1, 3 * D), wmap),        # fused QKV bias
            pl.BlockSpec((1, D, D), wmap),            # out-proj weight [D,D]
            pl.BlockSpec((1, 1, D), wmap),            # out-proj bias
            pl.BlockSpec((1, 1, D), wmap),            # ln2 gamma
            pl.BlockSpec((1, 1, D), wmap),            # ln2 beta
            pl.BlockSpec((1, D, mlp), wmap),          # mlp fc weight
            pl.BlockSpec((1, 1, mlp), wmap),          # mlp fc bias
            pl.BlockSpec((1, mlp, D), wmap),          # mlp proj weight
            pl.BlockSpec((1, 1, D), wmap),            # mlp proj bias
        ],
        out_specs=pl.BlockSpec((1, S, D), xmap),
        scratch_shapes=[pltpu.VMEM((S, D), jnp.float32)],   # f32 resident residual
        compiler_params=pltpu.CompilerParams(
            dimension_semantics=("parallel", "arbitrary")),
    )(x, p["ln1_g"], p["ln1_b"], p["w_qkv"], p["b_qkv"], p["w_o"], p["b_o"],
      p["ln2_g"], p["ln2_b"], p["w_fc"], p["b_fc"], p["w_proj"], p["b_proj"])


# ----------------------------- fused vision stem -----------------------------
def _vision_stem_kernel(patch_ref, w_ref, cls_ref, pos_ref, g_ref, b_ref, o_ref,
                        *, eps):
    """conv1 (as matmul) + CLS insert + pos-emb add + ln_pre, fused.

    patch_ref row 0 is a zero row (padded in glue), so the patch matmul yields
    a zero CLS slot; the class embedding is added with a row-0 mask (no
    in-kernel sublane concat needed).
    """
    f32 = jnp.float32
    emb = jnp.dot(patch_ref[0], w_ref[...], preferred_element_type=f32)   # [S, D]
    S, D = emb.shape
    row0 = jax.lax.broadcasted_iota(jnp.int32, (S, D), 0) == 0
    x = emb + jnp.where(row0, cls_ref[0].astype(f32), 0.0) + pos_ref[0].astype(f32)
    o_ref[0] = _ln_f32(x, g_ref[0].astype(f32), b_ref[0].astype(f32),
                       eps).astype(o_ref.dtype)


def vision_stem(patches, vp):
    """patches: [B, S, P] bf16 (row 0 zero-padded CLS slot) -> [B, S, D] bf16."""
    B, S, P = patches.shape
    D = vp["patch_w"].shape[1]
    return pl.pallas_call(
        functools.partial(_vision_stem_kernel, eps=LN_EPS),
        out_shape=jax.ShapeDtypeStruct((B, S, D), jnp.bfloat16),
        grid=(B,),
        in_specs=[
            pl.BlockSpec((1, S, P), lambda b: (b, 0, 0)),
            pl.BlockSpec((P, D), lambda b: (0, 0)),
            pl.BlockSpec((1, 1, D), lambda b: (0, 0, 0)),
            pl.BlockSpec((1, S, D), lambda b: (0, 0, 0)),
            pl.BlockSpec((1, 1, D), lambda b: (0, 0, 0)),
            pl.BlockSpec((1, 1, D), lambda b: (0, 0, 0)),
        ],
        out_specs=pl.BlockSpec((1, S, D), lambda b: (b, 0, 0)),
        compiler_params=pltpu.CompilerParams(dimension_semantics=("parallel",)),
    )(patches, vp["patch_w"], vp["class_emb"], vp["pos_emb"],
      vp["ln_pre_g"], vp["ln_pre_b"])


# ----------------------------- fused output head -----------------------------
def _head_kernel(x_ref, g_ref, b_ref, w_ref, o_ref, *, eps_ln, eps_norm):
    """Fused LN -> projection -> L2 normalize (F.normalize(p=2, dim=1))."""
    f32 = jnp.float32
    x = x_ref[...].astype(f32)                                # [B, D]
    h = _ln_f32(x, g_ref[...].astype(f32), b_ref[...].astype(f32), eps_ln)
    f = jnp.dot(h.astype(jnp.bfloat16), w_ref[...],
                preferred_element_type=f32)                   # [B, E]
    inv = jax.lax.rsqrt(jnp.maximum(jnp.sum(f * f, axis=-1, keepdims=True),
                                    eps_norm * eps_norm))
    o_ref[...] = (f * inv).astype(o_ref.dtype)


def head_project(x, gamma, beta, w):
    B, D = x.shape
    E = w.shape[1]
    return pl.pallas_call(
        functools.partial(_head_kernel, eps_ln=LN_EPS, eps_norm=NORM_EPS),
        out_shape=jax.ShapeDtypeStruct((B, E), jnp.float32),
        grid=(1,),
        in_specs=[pl.BlockSpec((B, D), lambda i: (0, 0)),
                  pl.BlockSpec((1, D), lambda i: (0, 0)),
                  pl.BlockSpec((1, D), lambda i: (0, 0)),
                  pl.BlockSpec((D, E), lambda i: (0, 0))],
        out_specs=pl.BlockSpec((B, E), lambda i: (0, 0)),
    )(x, gamma, beta, w)


# ----------------------------- parameter init -------------------------------
def _bf(a):
    return jnp.asarray(a).astype(jnp.bfloat16)


def init_encoder_params(key, num_layers, d, mlp, num_heads):
    """Per-layer params stacked on a leading layer axis for the fused encoder."""
    dh = d // num_heads
    attn_scale = 1.0 / (dh ** 0.5)
    s = 0.02

    def per_layer(k):
        k0, k1, k2, k3 = jax.random.split(k, 4)
        w_qkv = s * jax.random.normal(k0, (d, 3 * d), jnp.float32)
        # Fold 1/sqrt(Dh) into the Q columns (and bias, here zero) so the
        # kernel never multiplies the [S,S] scores by a scalar.
        w_qkv = w_qkv.at[:, :d].multiply(attn_scale)
        return dict(
            ln1_g=jnp.ones((1, d), jnp.float32), ln1_b=jnp.zeros((1, d), jnp.float32),
            w_qkv=w_qkv, b_qkv=jnp.zeros((1, 3 * d), jnp.float32),
            w_o=s * jax.random.normal(k1, (d, d), jnp.float32),
            b_o=jnp.zeros((1, d), jnp.float32),
            ln2_g=jnp.ones((1, d), jnp.float32), ln2_b=jnp.zeros((1, d), jnp.float32),
            w_fc=s * jax.random.normal(k2, (d, mlp), jnp.float32),
            b_fc=jnp.zeros((1, mlp), jnp.float32),
            w_proj=s * jax.random.normal(k3, (mlp, d), jnp.float32),
            b_proj=jnp.zeros((1, d), jnp.float32),
        )

    layers = [per_layer(k) for k in jax.random.split(key, num_layers)]
    return {name: _bf(jnp.stack([layer[name] for layer in layers], axis=0))
            for name in layers[0]}


def init_clip_params(key):
    # TODO(synk): clip.load('ViT-B/32') checkpoint loading has no in-script
    # equivalent; deterministic synthetic weights stand in for the pretrained model.
    kv, kt = jax.random.split(key)
    s = 0.02
    n_patches = (IMG_SIZE // PATCH) ** 2

    kvs = jax.random.split(kv, 5)
    vision = dict(
        patch_w=_bf(s * jax.random.normal(kvs[0], (IMG_CH * PATCH * PATCH, VIS_WIDTH), jnp.float32)),
        class_emb=_bf(s * jax.random.normal(kvs[1], (1, 1, VIS_WIDTH), jnp.float32)),
        pos_emb=_bf(s * jax.random.normal(kvs[2], (1, n_patches + 1, VIS_WIDTH), jnp.float32)),
        ln_pre_g=_bf(jnp.ones((1, 1, VIS_WIDTH))), ln_pre_b=_bf(jnp.zeros((1, 1, VIS_WIDTH))),
        ln_post_g=_bf(jnp.ones((1, VIS_WIDTH))), ln_post_b=_bf(jnp.zeros((1, VIS_WIDTH))),
        proj=_bf(s * jax.random.normal(kvs[3], (VIS_WIDTH, EMBED_DIM), jnp.float32)),
        blocks=init_encoder_params(kvs[4], VIS_LAYERS, VIS_WIDTH,
                                   MLP_RATIO * VIS_WIDTH, VIS_HEADS),
    )

    kts = jax.random.split(kt, 4)
    text = dict(
        tok_emb=_bf(s * jax.random.normal(kts[0], (VOCAB, TXT_WIDTH), jnp.float32)),
        pos_emb=_bf(s * jax.random.normal(kts[1], (CTX_LEN, TXT_WIDTH), jnp.float32)),
        ln_final_g=_bf(jnp.ones((1, TXT_WIDTH))), ln_final_b=_bf(jnp.zeros((1, TXT_WIDTH))),
        proj=_bf(s * jax.random.normal(kts[2], (TXT_WIDTH, EMBED_DIM), jnp.float32)),
        blocks=init_encoder_params(kts[3], TXT_LAYERS, TXT_WIDTH,
                                   MLP_RATIO * TXT_WIDTH, TXT_HEADS),
    )
    return dict(vision=vision, text=text)


# ----------------------------- encoders -------------------------------------
def encode_image(images, vp):
    # NCHW in; patch extraction (= stride-PATCH conv) as reshape/transpose glue.
    B, C, H, W = images.shape
    gh, gw = H // PATCH, W // PATCH
    pdim = C * PATCH * PATCH
    patches = images.reshape(B, C, gh, PATCH, gw, PATCH)
    patches = patches.transpose(0, 2, 4, 1, 3, 5).reshape(B, gh * gw, pdim)
    # Row 0 = zero CLS slot; the stem kernel adds class_emb there (no in-kernel concat).
    patches = jnp.concatenate(
        [jnp.zeros((B, 1, pdim), patches.dtype), patches], axis=1).astype(jnp.bfloat16)

    x = vision_stem(patches, vp)                              # conv1 + CLS + pos + ln_pre (fused)
    x = encoder(x, vp["blocks"], VIS_HEADS, causal=False)     # all layers, one pallas_call

    cls_tok = x[:, 0, :]                                      # CLS pooling (glue)
    return head_project(cls_tok, vp["ln_post_g"], vp["ln_post_b"], vp["proj"])


def encode_text(tokens, tp):
    # TODO(synk): CLIP BPE tokenization / truncate_texts operate on Python strings
    # and have no Pallas equivalent; integer tokens are supplied directly.
    B, S = tokens.shape
    x = jnp.take(tp["tok_emb"], tokens, axis=0) + tp["pos_emb"][None]   # embedding gather (glue)

    x = encoder(x.astype(jnp.bfloat16), tp["blocks"], TXT_HEADS, causal=True)

    # ln_final is per-token, so it commutes with EOT selection: pool first, then
    # run the fused LN -> text_projection -> L2-normalize head on [B, D].
    eot = jnp.argmax(tokens, axis=-1)                         # EOT token = highest id
    pooled = x[jnp.arange(B), eot]                            # [B, D] (glue gather)
    return head_project(pooled, tp["ln_final_g"], tp["ln_final_b"], tp["proj"])


def clip_feature_extract(images, tokens, params):
    img_feat = encode_image(images, params["vision"])
    txt_feat = encode_text(tokens, params["text"])
    return img_feat, txt_feat    # already L2-normalized (F.normalize(p=2, dim=1))


# ----------------------------- main ------------------------------------------
if __name__ == "__main__":
    key = jax.random.PRNGKey(0)
    k_params, k_img, k_tok = jax.random.split(key, 3)

    params = init_clip_params(k_params)

    images = jax.random.normal(k_img, (BATCH, IMG_CH, IMG_SIZE, IMG_SIZE), jnp.float32)
    tokens = jax.random.randint(k_tok, (BATCH, CTX_LEN), 1, VOCAB - 1, dtype=jnp.int32)
    tokens = tokens.at[:, -1].set(VOCAB - 1)                  # EOT token at end

    img_f, txt_f = jax.jit(clip_feature_extract)(images, tokens, params)
    jax.block_until_ready((img_f, txt_f))

    assert img_f.shape == (BATCH, EMBED_DIM) and txt_f.shape == (BATCH, EMBED_DIM)
    assert img_f.dtype == jnp.float32 and txt_f.dtype == jnp.float32
    assert bool(jnp.all(jnp.isfinite(img_f))) and bool(jnp.all(jnp.isfinite(txt_f)))
    # L2 norms should be ~1 after normalization
    assert bool(jnp.allclose(jnp.linalg.norm(img_f, axis=1), 1.0, atol=1e-4))
    assert bool(jnp.allclose(jnp.linalg.norm(txt_f, axis=1), 1.0, atol=1e-4))
    print("KERNEL_OK")
</pallas_src>

<mosaic_0001>
module attributes {stable_mosaic.version = 11 : i64} {
  func.func @_vision_stem_kernel(%arg0: i32, %arg1: memref<1x17x192xbf16, #tpu.memory_space<vmem>>, %arg2: memref<192x64xbf16, #tpu.memory_space<vmem>>, %arg3: memref<1x1x64xbf16, #tpu.memory_space<vmem>>, %arg4: memref<1x17x64xbf16, #tpu.memory_space<vmem>>, %arg5: memref<1x1x64xbf16, #tpu.memory_space<vmem>>, %arg6: memref<1x1x64xbf16, #tpu.memory_space<vmem>>, %arg7: memref<1x17x64xbf16, #tpu.memory_space<vmem>>) attributes {dimension_semantics = [#tpu.dimension_semantics<parallel>], iteration_bounds = array<i64: 2>, scalar_prefetch = 0 : i64, scratch_operands = 0 : i64, tpu.core_type = #tpu.core_type<tc>, window_params = [{transform_indices = @transform_0, window_bounds = array<i64: 1, 17, 192>}, {pipeline_mode = #tpu.pipeline_mode<synchronous>, transform_indices = @transform_1, window_bounds = array<i64: 192, 64>}, {pipeline_mode = #tpu.pipeline_mode<synchronous>, transform_indices = @transform_2, window_bounds = array<i64: 1, 1, 64>}, {pipeline_mode = #tpu.pipeline_mode<synchronous>, transform_indices = @transform_3, window_bounds = array<i64: 1, 17, 64>}, {pipeline_mode = #tpu.pipeline_mode<synchronous>, transform_indices = @transform_4, window_bounds = array<i64: 1, 1, 64>}, {pipeline_mode = #tpu.pipeline_mode<synchronous>, transform_indices = @transform_5, window_bounds = array<i64: 1, 1, 64>}, {transform_indices = @transform_6, window_bounds = array<i64: 1, 17, 64>}]} {
    %c0 = arith.constant 0 : index
    %c0_0 = arith.constant 0 : index
    %c0_1 = arith.constant 0 : index
    %0 = vector.load %arg1[%c0, %c0_0, %c0_1] : memref<1x17x192xbf16, #tpu.memory_space<vmem>>, vector<1x17x192xbf16>
    %1 = vector.shape_cast %0 : vector<1x17x192xbf16> to vector<17x192xbf16>
    %c0_2 = arith.constant 0 : index
    %c0_3 = arith.constant 0 : index
    %2 = vector.load %arg2[%c0_2, %c0_3] : memref<192x64xbf16, #tpu.memory_space<vmem>>, vector<192x64xbf16>
    %cst = arith.constant dense<0.000000e+00> : vector<17x64xf32>
    %3 = tpu.matmul %1, %2, %cst {dimension_numbers = #tpu.dot_dimension_numbers<[1], [0], [0], [1], [0, 0, 1, 1], [], []>} : vector<17x192xbf16>, vector<192x64xbf16>, vector<17x64xf32> -> vector<17x64xf32>
    %4 = tpu.iota {dimensions = array<i32: 0>} : vector<17x64xi32>
    %c0_i32 = arith.constant 0 : i32
    %5 = vector.broadcast %c0_i32 : i32 to vector<17x64xi32>
    %6 = arith.cmpi eq, %4, %5 : vector<17x64xi32>
    %c0_4 = arith.constant 0 : index
    %c0_5 = arith.constant 0 : index
    %c0_6 = arith.constant 0 : index
    %7 = vector.load %arg3[%c0_4, %c0_5, %c0_6] : memref<1x1x64xbf16, #tpu.memory_space<vmem>>, vector<1x1x64xbf16>
    %8 = vector.shape_cast %7 : vector<1x1x64xbf16> to vector<1x64xbf16>
    %9 = arith.extf %8 : vector<1x64xbf16> to vector<1x64xf32>
    %cst_7 = arith.constant 0.000000e+00 : f32
    %10 = vector.shape_cast %9 : vector<1x64xf32> to vector<1x64xf32>
    %11 = vector.broadcast %10 : vector<1x64xf32> to vector<17x64xf32>
    %12 = vector.broadcast %cst_7 : f32 to vector<17x64xf32>
    %13 = arith.select %6, %11, %12 : vector<17x64xi1>, vector<17x64xf32>
    %14 = arith.addf %3, %13 : vector<17x64xf32>
    %c0_8 = arith.constant 0 : index
    %c0_9 = arith.constant 0 : index
    %c0_10 = arith.constant 0 : index
    %15 = vector.load %arg4[%c0_8, %c0_9, %c0_10] : memref<1x17x64xbf16, #tpu.memory_space<vmem>>, vector<1x17x64xbf16>
    %16 = vector.shape_cast %15 : vector<1x17x64xbf16> to vector<17x64xbf16>
    %17 = arith.extf %16 : vector<17x64xbf16> to vector<17x64xf32>
    %18 = arith.addf %14, %17 : vector<17x64xf32>
    %c0_11 = arith.constant 0 : index
    %c0_12 = arith.constant 0 : index
    %c0_13 = arith.constant 0 : index
    %19 = vector.load %arg5[%c0_11, %c0_12, %c0_13] : memref<1x1x64xbf16, #tpu.memory_space<vmem>>, vector<1x1x64xbf16>
    %20 = vector.shape_cast %19 : vector<1x1x64xbf16> to vector<1x64xbf16>
    %21 = arith.extf %20 : vector<1x64xbf16> to vector<1x64xf32>
    %c0_14 = arith.constant 0 : index
    %c0_15 = arith.constant 0 : index
    %c0_16 = arith.constant 0 : index
    %22 = vector.load %arg6[%c0_14, %c0_15, %c0_16] : memref<1x1x64xbf16, #tpu.memory_space<vmem>>, vector<1x1x64xbf16>
    %23 = vector.shape_cast %22 : vector<1x1x64xbf16> to vector<1x64xbf16>
    %24 = arith.extf %23 : vector<1x64xbf16> to vector<1x64xf32>
    %cst_17 = arith.constant dense<0.000000e+00> : vector<17xf32>
    %25 = vector.multi_reduction <add>, %18, %cst_17 [1] : vector<17x64xf32> to vector<17xf32>
    %26 = vector.shape_cast %25 : vector<17xf32> to vector<17x1xf32>
    %cst_18 = arith.constant 6.400000e+01 : f32
    %27 = vector.broadcast %cst_18 : f32 to vector<17x1xf32>
    %28 = arith.divf %26, %27 : vector<17x1xf32>
    %29 = vector.broadcast %28 : vector<17x1xf32> to vector<17x64xf32>
    %30 = arith.subf %18, %29 : vector<17x64xf32>
    %31 = arith.mulf %30, %30 : vector<17x64xf32>
    %cst_19 = arith.constant dense<0.000000e+00> : vector<17xf32>
    %32 = vector.multi_reduction <add>, %31, %cst_19 [1] : vector<17x64xf32> to vector<17xf32>
    %33 = vector.shape_cast %32 : vector<17xf32> to vector<17x1xf32>
    %cst_20 = arith.constant 6.400000e+01 : f32
    %34 = vector.broadcast %cst_20 : f32 to vector<17x1xf32>
    %35 = arith.divf %33, %34 : vector<17x1xf32>
    %36 = vector.broadcast %28 : vector<17x1xf32> to vector<17x64xf32>
    %37 = arith.subf %18, %36 : vector<17x64xf32>
    %cst_21 = arith.constant 9.99999974E-6 : f32
    %38 = vector.broadcast %cst_21 : f32 to vector<17x1xf32>
    %39 = arith.addf %35, %38 : vector<17x1xf32>
    %40 = math.rsqrt %39 : vector<17x1xf32>
    %41 = vector.broadcast %40 : vector<17x1xf32> to vector<17x64xf32>
    %42 = arith.mulf %37, %41 : vector<17x64xf32>
    %43 = vector.broadcast %21 : vector<1x64xf32> to vector<17x64xf32>
    %44 = arith.mulf %42, %43 : vector<17x64xf32>
    %45 = vector.broadcast %24 : vector<1x64xf32> to vector<17x64xf32>
    %46 = arith.addf %44, %45 : vector<17x64xf32>
    %47 = arith.truncf %46 : vector<17x64xf32> to vector<17x64xbf16>
    %c0_22 = arith.constant 0 : index
    %c0_23 = arith.constant 0 : index
    %c0_24 = arith.constant 0 : index
    %48 = vector.load %arg7[%c0_22, %c0_23, %c0_24] : memref<1x17x64xbf16, #tpu.memory_space<vmem>>, vector<1x17x64xbf16>
    %49 = vector.shape_cast %48 : vector<1x17x64xbf16> to vector<17x64xbf16>
    %50 = vector.shape_cast %47 : vector<17x64xbf16> to vector<1x17x64xbf16>
    tpu.vector_store %arg7[%c0_22, %c0_23, %c0_24], %50 {strides = array<i32>} : memref<1x17x64xbf16, #tpu.memory_space<vmem>>, vector<1x17x64xbf16>,
    return
  }
  func.func @transform_0(%arg0: i32) -> (i32, i32, i32) {
    %c0_i32 = arith.constant 0 : i32
    %c0_i32_0 = arith.constant 0 : i32
    %c0_i32_1 = arith.constant 0 : i32
    return %arg0, %c0_i32, %c0_i32_0 : i32, i32, i32
  }
  func.func @transform_1(%arg0: i32) -> (i32, i32) {
    %c0_i32 = arith.constant 0 : i32
    %c0_i32_0 = arith.constant 0 : i32
    %c0_i32_1 = arith.constant 0 : i32
    return %c0_i32, %c0_i32_0 : i32, i32
  }
  func.func @transform_2(%arg0: i32) -> (i32, i32, i32) {
    %c0_i32 = arith.constant 0 : i32
    %c0_i32_0 = arith.constant 0 : i32
    %c0_i32_1 = arith.constant 0 : i32
    %c0_i32_2 = arith.constant 0 : i32
    return %c0_i32, %c0_i32_0, %c0_i32_1 : i32, i32, i32
  }
  func.func @transform_3(%arg0: i32) -> (i32, i32, i32) {
    %c0_i32 = arith.constant 0 : i32
    %c0_i32_0 = arith.constant 0 : i32
    %c0_i32_1 = arith.constant 0 : i32
    %c0_i32_2 = arith.constant 0 : i32
    return %c0_i32, %c0_i32_0, %c0_i32_1 : i32, i32, i32
  }
  func.func @transform_4(%arg0: i32) -> (i32, i32, i32) {
    %c0_i32 = arith.constant 0 : i32
    %c0_i32_0 = arith.constant 0 : i32
    %c0_i32_1 = arith.constant 0 : i32
    %c0_i32_2 = arith.constant 0 : i32
    return %c0_i32, %c0_i32_0, %c0_i32_1 : i32, i32, i32
  }
  func.func @transform_5(%arg0: i32) -> (i32, i32, i32) {
    %c0_i32 = arith.constant 0 : i32
    %c0_i32_0 = arith.constant 0 : i32
    %c0_i32_1 = arith.constant 0 : i32
    %c0_i32_2 = arith.constant 0 : i32
    return %c0_i32, %c0_i32_0, %c0_i32_1 : i32, i32, i32
  }
  func.func @transform_6(%arg0: i32) -> (i32, i32, i32) {
    %c0_i32 = arith.constant 0 : i32
    %c0_i32_0 = arith.constant 0 : i32
    %c0_i32_1 = arith.constant 0 : i32
    return %arg0, %c0_i32, %c0_i32_0 : i32, i32, i32
  }
}

module attributes {stable_mosaic.version = 11 : i64} {
  func.func @_encoder_kernel(%arg0: i32, %arg1: i32, %arg2: memref<1x17x64xbf16, #tpu.memory_space<vmem>>, %arg3: memref<1x1x64xbf16, #tpu.memory_space<vmem>>, %arg4: memref<1x1x64xbf16, #tpu.memory_space<vmem>>, %arg5: memref<1x64x192xbf16, #tpu.memory_space<vmem>>, %arg6: memref<1x1x192xbf16, #tpu.memory_space<vmem>>, %arg7: memref<1x64x64xbf16, #tpu.memory_space<vmem>>, %arg8: memref<1x1x64xbf16, #tpu.memory_space<vmem>>, %arg9: memref<1x1x64xbf16, #tpu.memory_space<vmem>>, %arg10: memref<1x1x64xbf16, #tpu.memory_space<vmem>>, %arg11: memref<1x64x256xbf16, #tpu.memory_space<vmem>>, %arg12: memref<1x1x256xbf16, #tpu.memory_space<vmem>>, %arg13: memref<1x256x64xbf16, #tpu.memory_space<vmem>>, %arg14: memref<1x1x64xbf16, #tpu.memory_space<vmem>>, %arg15: memref<1x17x64xbf16, #tpu.memory_space<vmem>>, %arg16: memref<17x64xf32, #tpu.memory_space<vmem>>) attributes {dimension_semantics = [#tpu.dimension_semantics<parallel>, #tpu.dimension_semantics<arbitrary>], iteration_bounds = array<i64: 2, 2>, scalar_prefetch = 0 : i64, scratch_operands = 1 : i64, tpu.core_type = #tpu.core_type<tc>, window_params = [{transform_indices = @transform_0, window_bounds = array<i64: 1, 17, 64>}, {transform_indices = @transform_1, window_bounds = array<i64: 1, 1, 64>}, {transform_indices = @transform_2, window_bounds = array<i64: 1, 1, 64>}, {transform_indices = @transform_3, window_bounds = array<i64: 1, 64, 192>}, {transform_indices = @transform_4, window_bounds = array<i64: 1, 1, 192>}, {transform_indices = @transform_5, window_bounds = array<i64: 1, 64, 64>}, {transform_indices = @transform_6, window_bounds = array<i64: 1, 1, 64>}, {transform_indices = @transform_7, window_bounds = array<i64: 1, 1, 64>}, {transform_indices = @transform_8, window_bounds = array<i64: 1, 1, 64>}, {transform_indices = @transform_9, window_bounds = array<i64: 1, 64, 256>}, {transform_indices = @transform_10, window_bounds = array<i64: 1, 1, 256>}, {transform_indices = @transform_11, window_bounds = array<i64: 1, 256, 64>}, {transform_indices = @transform_12, window_bounds = array<i64: 1, 1, 64>}, {transform_indices = @transform_13, window_bounds = array<i64: 1, 17, 64>}]} {
    %c0_i32 = arith.constant 0 : i32
    %0 = arith.cmpi eq, %arg1, %c0_i32 : i32
    %1 = arith.extui %0 : i1 to i32
    %c0_i32_0 = arith.constant 0 : i32
    %2 = arith.cmpi ne, %1, %c0_i32_0 : i32
    scf.if %2 {
      %c0_72 = arith.constant 0 : index
      %c0_73 = arith.constant 0 : index
      %c0_74 = arith.constant 0 : index
      %187 = vector.load %arg2[%c0_72, %c0_73, %c0_74] : memref<1x17x64xbf16, #tpu.memory_space<vmem>>, vector<1x17x64xbf16>
      %188 = vector.shape_cast %187 : vector<1x17x64xbf16> to vector<17x64xbf16>
      %189 = arith.extf %188 : vector<17x64xbf16> to vector<17x64xf32>
      %c0_75 = arith.constant 0 : index
      %c0_76 = arith.constant 0 : index
      %190 = vector.load %arg16[%c0_75, %c0_76] : memref<17x64xf32, #tpu.memory_space<vmem>>, vector<17x64xf32>
      tpu.vector_store %arg16[%c0_75, %c0_76], %189 {strides = array<i32>} : memref<17x64xf32, #tpu.memory_space<vmem>>, vector<17x64xf32>,
    } else {
    }
    %c0 = arith.constant 0 : index
    %c0_1 = arith.constant 0 : index
    %3 = vector.load %arg16[%c0, %c0_1] : memref<17x64xf32, #tpu.memory_space<vmem>>, vector<17x64xf32>
    %c0_2 = arith.constant 0 : index
    %c0_3 = arith.constant 0 : index
    %c0_4 = arith.constant 0 : index
    %4 = vector.load %arg3[%c0_2, %c0_3, %c0_4] : memref<1x1x64xbf16, #tpu.memory_space<vmem>>, vector<1x1x64xbf16>
    %5 = vector.shape_cast %4 : vector<1x1x64xbf16> to vector<1x64xbf16>
    %6 = arith.extf %5 : vector<1x64xbf16> to vector<1x64xf32>
    %c0_5 = arith.constant 0 : index
    %c0_6 = arith.constant 0 : index
    %c0_7 = arith.constant 0 : index
    %7 = vector.load %arg4[%c0_5, %c0_6, %c0_7] : memref<1x1x64xbf16, #tpu.memory_space<vmem>>, vector<1x1x64xbf16>
    %8 = vector.shape_cast %7 : vector<1x1x64xbf16> to vector<1x64xbf16>
    %9 = arith.extf %8 : vector<1x64xbf16> to vector<1x64xf32>
    %cst = arith.constant dense<0.000000e+00> : vector<17xf32>
    %10 = vector.multi_reduction <add>, %3, %cst [1] : vector<17x64xf32> to vector<17xf32>
    %11 = vector.shape_cast %10 : vector<17xf32> to vector<17x1xf32>
    %cst_8 = arith.constant 6.400000e+01 : f32
    %12 = vector.broadcast %cst_8 : f32 to vector<17x1xf32>
    %13 = arith.divf %11, %12 : vector<17x1xf32>
    %14 = vector.broadcast %13 : vector<17x1xf32> to vector<17x64xf32>
    %15 = arith.subf %3, %14 : vector<17x64xf32>
    %16 = arith.mulf %15, %15 : vector<17x64xf32>
    %cst_9 = arith.constant dense<0.000000e+00> : vector<17xf32>
    %17 = vector.multi_reduction <add>, %16, %cst_9 [1] : vector<17x64xf32> to vector<17xf32>
    %18 = vector.shape_cast %17 : vector<17xf32> to vector<17x1xf32>
    %cst_10 = arith.constant 6.400000e+01 : f32
    %19 = vector.broadcast %cst_10 : f32 to vector<17x1xf32>
    %20 = arith.divf %18, %19 : vector<17x1xf32>
    %21 = vector.broadcast %13 : vector<17x1xf32> to vector<17x64xf32>
    %22 = arith.subf %3, %21 : vector<17x64xf32>
    %cst_11 = arith.constant 9.99999974E-6 : f32
    %23 = vector.broadcast %cst_11 : f32 to vector<17x1xf32>
    %24 = arith.addf %20, %23 : vector<17x1xf32>
    %25 = math.rsqrt %24 : vector<17x1xf32>
    %26 = vector.broadcast %25 : vector<17x1xf32> to vector<17x64xf32>
    %27 = arith.mulf %22, %26 : vector<17x64xf32>
    %28 = vector.broadcast %6 : vector<1x64xf32> to vector<17x64xf32>
    %29 = arith.mulf %27, %28 : vector<17x64xf32>
    %30 = vector.broadcast %9 : vector<1x64xf32> to vector<17x64xf32>
    %31 = arith.addf %29, %30 : vector<17x64xf32>
    %32 = arith.truncf %31 : vector<17x64xf32> to vector<17x64xbf16>
    %c0_12 = arith.constant 0 : index
    %c0_13 = arith.constant 0 : index
    %c0_14 = arith.constant 0 : index
    %33 = vector.load %arg5[%c0_12, %c0_13, %c0_14] : memref<1x64x192xbf16, #tpu.memory_space<vmem>>, vector<1x64x192xbf16>
    %34 = vector.shape_cast %33 : vector<1x64x192xbf16> to vector<64x192xbf16>
    %cst_15 = arith.constant dense<0.000000e+00> : vector<17x192xf32>
    %35 = tpu.matmul %32, %34, %cst_15 {dimension_numbers = #tpu.dot_dimension_numbers<[1], [0], [0], [1], [0, 0, 1, 1], [], []>} : vector<17x64xbf16>, vector<64x192xbf16>, vector<17x192xf32> -> vector<17x192xf32>
    %c0_16 = arith.constant 0 : index
    %c0_17 = arith.constant 0 : index
    %c0_18 = arith.constant 0 : index
    %36 = vector.load %arg6[%c0_16, %c0_17, %c0_18] : memref<1x1x192xbf16, #tpu.memory_space<vmem>>, vector<1x1x192xbf16>
    %37 = vector.shape_cast %36 : vector<1x1x192xbf16> to vector<1x192xbf16>
    %38 = arith.extf %37 : vector<1x192xbf16> to vector<1x192xf32>
    %39 = vector.broadcast %38 : vector<1x192xf32> to vector<17x192xf32>
    %40 = arith.addf %35, %39 : vector<17x192xf32>
    %41 = vector.extract_strided_slice %40 {offsets = [0, 0], sizes = [17, 16], strides = [1, 1]} : vector<17x192xf32> to vector<17x16xf32>
    %42 = vector.extract_strided_slice %40 {offsets = [0, 64], sizes = [17, 16], strides = [1, 1]} : vector<17x192xf32> to vector<17x16xf32>
    %43 = vector.extract_strided_slice %40 {offsets = [0, 128], sizes = [17, 16], strides = [1, 1]} : vector<17x192xf32> to vector<17x16xf32>
    %44 = arith.truncf %41 : vector<17x16xf32> to vector<17x16xbf16>
    %45 = arith.truncf %42 : vector<17x16xf32> to vector<17x16xbf16>
    %cst_19 = arith.constant dense<0.000000e+00> : vector<17x17xf32>
    %46 = tpu.matmul %44, %45, %cst_19 {dimension_numbers = #tpu.dot_dimension_numbers<[1], [1], [0], [0], [0, 0, 1, 0], [], []>} : vector<17x16xbf16>, vector<17x16xbf16>, vector<17x17xf32> -> vector<17x17xf32>
    %cst_20 = arith.constant dense<0xFF800000> : vector<17xf32>
    %47 = vector.multi_reduction <maximumf>, %46, %cst_20 [1] : vector<17x17xf32> to vector<17xf32>
    %48 = vector.shape_cast %47 : vector<17xf32> to vector<17x1xf32>
    %49 = vector.broadcast %48 : vector<17x1xf32> to vector<17x17xf32>
    %50 = arith.subf %46, %49 : vector<17x17xf32>
    %51 = math.exp %50 : vector<17x17xf32>
    %cst_21 = arith.constant dense<0.000000e+00> : vector<17xf32>
    %52 = vector.multi_reduction <add>, %51, %cst_21 [1] : vector<17x17xf32> to vector<17xf32>
    %53 = vector.shape_cast %52 : vector<17xf32> to vector<17x1xf32>
    %54 = tpu.reciprocal %53 {approx = true} : vector<17x1xf32> -> vector<17x1xf32>
    %55 = vector.broadcast %54 : vector<17x1xf32> to vector<17x17xf32>
    %56 = arith.mulf %51, %55 : vector<17x17xf32>
    %57 = arith.truncf %56 : vector<17x17xf32> to vector<17x17xbf16>
    %58 = arith.truncf %43 : vector<17x16xf32> to vector<17x16xbf16>
    %cst_22 = arith.constant dense<0.000000e+00> : vector<17x16xf32>
    %59 = tpu.matmul %57, %58, %cst_22 {dimension_numbers = #tpu.dot_dimension_numbers<[1], [0], [0], [1], [0, 0, 1, 1], [], []>} : vector<17x17xbf16>, vector<17x16xbf16>, vector<17x16xf32> -> vector<17x16xf32>
    %60 = vector.extract_strided_slice %40 {offsets = [0, 16], sizes = [17, 16], strides = [1, 1]} : vector<17x192xf32> to vector<17x16xf32>
    %61 = vector.extract_strided_slice %40 {offsets = [0, 80], sizes = [17, 16], strides = [1, 1]} : vector<17x192xf32> to vector<17x16xf32>
    %62 = vector.extract_strided_slice %40 {offsets = [0, 144], sizes = [17, 16], strides = [1, 1]} : vector<17x192xf32> to vector<17x16xf32>
    %63 = arith.truncf %60 : vector<17x16xf32> to vector<17x16xbf16>
    %64 = arith.truncf %61 : vector<17x16xf32> to vector<17x16xbf16>
    %cst_23 = arith.constant dense<0.000000e+00> : vector<17x17xf32>
    %65 = tpu.matmul %63, %64, %cst_23 {dimension_numbers = #tpu.dot_dimension_numbers<[1], [1], [0], [0], [0, 0, 1, 0], [], []>} : vector<17x16xbf16>, vector<17x16xbf16>, vector<17x17xf32> -> vector<17x17xf32>
    %cst_24 = arith.constant dense<0xFF800000> : vector<17xf32>
    %66 = vector.multi_reduction <maximumf>, %65, %cst_24 [1] : vector<17x17xf32> to vector<17xf32>
    %67 = vector.shape_cast %66 : vector<17xf32> to vector<17x1xf32>
    %68 = vector.broadcast %67 : vector<17x1xf32> to vector<17x17xf32>
    %69 = arith.subf %65, %68 : vector<17x17xf32>
    %70 = math.exp %69 : vector<17x17xf32>
    %cst_25 = arith.constant dense<0.000000e+00> : vector<17xf32>
    %71 = vector.multi_reduction <add>, %70, %cst_25 [1] : vector<17x17xf32> to vector<17xf32>
    %72 = vector.shape_cast %71 : vector<17xf32> to vector<17x1xf32>
    %73 = tpu.reciprocal %72 {approx = true} : vector<17x1xf32> -> vector<17x1xf32>
    %74 = vector.broadcast %73 : vector<17x1xf32> to vector<17x17xf32>
    %75 = arith.mulf %70, %74 : vector<17x17xf32>
    %76 = arith.truncf %75 : vector<17x17xf32> to vector<17x17xbf16>
    %77 = arith.truncf %62 : vector<17x16xf32> to vector<17x16xbf16>
    %cst_26 = arith.constant dense<0.000000e+00> : vector<17x16xf32>
    %78 = tpu.matmul %76, %77, %cst_26 {dimension_numbers = #tpu.dot_dimension_numbers<[1], [0], [0], [1], [0, 0, 1, 1], [], []>} : vector<17x17xbf16>, vector<17x16xbf16>, vector<17x16xf32> -> vector<17x16xf32>
    %79 = vector.extract_strided_slice %40 {offsets = [0, 32], sizes = [17, 16], strides = [1, 1]} : vector<17x192xf32> to vector<17x16xf32>
    %80 = vector.extract_strided_slice %40 {offsets = [0, 96], sizes = [17, 16], strides = [1, 1]} : vector<17x192xf32> to vector<17x16xf32>
    %81 = vector.extract_strided_slice %40 {offsets = [0, 160], sizes = [17, 16], strides = [1, 1]} : vector<17x192xf32> to vector<17x16xf32>
    %82 = arith.truncf %79 : vector<17x16xf32> to vector<17x16xbf16>
    %83 = arith.truncf %80 : vector<17x16xf32> to vector<17x16xbf16>
    %cst_27 = arith.constant dense<0.000000e+00> : vector<17x17xf32>
    %84 = tpu.matmul %82, %83, %cst_27 {dimension_numbers = #tpu.dot_dimension_numbers<[1], [1], [0], [0], [0, 0, 1, 0], [], []>} : vector<17x16xbf16>, vector<17x16xbf16>, vector<17x17xf32> -> vector<17x17xf32>
    %cst_28 = arith.constant dense<0xFF800000> : vector<17xf32>
    %85 = vector.multi_reduction <maximumf>, %84, %cst_28 [1] : vector<17x17xf32> to vector<17xf32>
    %86 = vector.shape_cast %85 : vector<17xf32> to vector<17x1xf32>
    %87 = vector.broadcast %86 : vector<17x1xf32> to vector<17x17xf32>
    %88 = arith.subf %84, %87 : vector<17x17xf32>
    %89 = math.exp %88 : vector<17x17xf32>
    %cst_29 = arith.constant dense<0.000000e+00> : vector<17xf32>
    %90 = vector.multi_reduction <add>, %89, %cst_29 [1] : vector<17x17xf32> to vector<17xf32>
    %91 = vector.shape_cast %90 : vector<17xf32> to vector<17x1xf32>
    %92 = tpu.reciprocal %91 {approx = true} : vector<17x1xf32> -> vector<17x1xf32>
    %93 = vector.broadcast %92 : vector<17x1xf32> to vector<17x17xf32>
    %94 = arith.mulf %89, %93 : vector<17x17xf32>
    %95 = arith.truncf %94 : vector<17x17xf32> to vector<17x17xbf16>
    %96 = arith.truncf %81 : vector<17x16xf32> to vector<17x16xbf16>
    %cst_30 = arith.constant dense<0.000000e+00> : vector<17x16xf32>
    %97 = tpu.matmul %95, %96, %cst_30 {dimension_numbers = #tpu.dot_dimension_numbers<[1], [0], [0], [1], [0, 0, 1, 1], [], []>} : vector<17x17xbf16>, vector<17x16xbf16>, vector<17x16xf32> -> vector<17x16xf32>
    %98 = vector.extract_strided_slice %40 {offsets = [0, 48], sizes = [17, 16], strides = [1, 1]} : vector<17x192xf32> to vector<17x16xf32>
    %99 = vector.extract_strided_slice %40 {offsets = [0, 112], sizes = [17, 16], strides = [1, 1]} : vector<17x192xf32> to vector<17x16xf32>
    %100 = vector.extract_strided_slice %40 {offsets = [0, 176], sizes = [17, 16], strides = [1, 1]} : vector<17x192xf32> to vector<17x16xf32>
    %101 = arith.truncf %98 : vector<17x16xf32> to vector<17x16xbf16>
    %102 = arith.truncf %99 : vector<17x16xf32> to vector<17x16xbf16>
    %cst_31 = arith.constant dense<0.000000e+00> : vector<17x17xf32>
    %103 = tpu.matmul %101, %102, %cst_31 {dimension_numbers = #tpu.dot_dimension_numbers<[1], [1], [0], [0], [0, 0, 1, 0], [], []>} : vector<17x16xbf16>, vector<17x16xbf16>, vector<17x17xf32> -> vector<17x17xf32>
    %cst_32 = arith.constant dense<0xFF800000> : vector<17xf32>
    %104 = vector.multi_reduction <maximumf>, %103, %cst_32 [1] : vector<17x17xf32> to vector<17xf32>
    %105 = vector.shape_cast %104 : vector<17xf32> to vector<17x1xf32>
    %106 = vector.broadcast %105 : vector<17x1xf32> to vector<17x17xf32>
    %107 = arith.subf %103, %106 : vector<17x17xf32>
    %108 = math.exp %107 : vector<17x17xf32>
    %cst_33 = arith.constant dense<0.000000e+00> : vector<17xf32>
    %109 = vector.multi_reduction <add>, %108, %cst_33 [1] : vector<17x17xf32> to vector<17xf32>
    %110 = vector.shape_cast %109 : vector<17xf32> to vector<17x1xf32>
    %111 = tpu.reciprocal %110 {approx = true} : vector<17x1xf32> -> vector<17x1xf32>
    %112 = vector.broadcast %111 : vector<17x1xf32> to vector<17x17xf32>
    %113 = arith.mulf %108, %112 : vector<17x17xf32>
    %114 = arith.truncf %113 : vector<17x17xf32> to vector<17x17xbf16>
    %115 = arith.truncf %100 : vector<17x16xf32> to vector<17x16xbf16>
    %cst_34 = arith.constant dense<0.000000e+00> : vector<17x16xf32>
    %116 = tpu.matmul %114, %115, %cst_34 {dimension_numbers = #tpu.dot_dimension_numbers<[1], [0], [0], [1], [0, 0, 1, 1], [], []>} : vector<17x17xbf16>, vector<17x16xbf16>, vector<17x16xf32> -> vector<17x16xf32>
    %117 = tpu.concatenate %59, %78, %97, %116 in 1 : vector<17x16xf32>, vector<17x16xf32>, vector<17x16xf32>, vector<17x16xf32> -> vector<17x64xf32>
    %118 = arith.truncf %117 : vector<17x64xf32> to vector<17x64xbf16>
    %c0_35 = arith.constant 0 : index
    %c0_36 = arith.constant 0 : index
    %c0_37 = arith.constant 0 : index
    %119 = vector.load %arg7[%c0_35, %c0_36, %c0_37] : memref<1x64x64xbf16, #tpu.memory_space<vmem>>, vector<1x64x64xbf16>
    %120 = vector.shape_cast %119 : vector<1x64x64xbf16> to vector<64x64xbf16>
    %cst_38 = arith.constant dense<0.000000e+00> : vector<17x64xf32>
    %121 = tpu.matmul %118, %120, %cst_38 {dimension_numbers = #tpu.dot_dimension_numbers<[1], [0], [0], [1], [0, 0, 1, 1], [], []>} : vector<17x64xbf16>, vector<64x64xbf16>, vector<17x64xf32> -> vector<17x64xf32>
    %c0_39 = arith.constant 0 : index
    %c0_40 = arith.constant 0 : index
    %c0_41 = arith.constant 0 : index
    %122 = vector.load %arg8[%c0_39, %c0_40, %c0_41] : memref<1x1x64xbf16, #tpu.memory_space<vmem>>, vector<1x1x64xbf16>
    %123 = vector.shape_cast %122 : vector<1x1x64xbf16> to vector<1x64xbf16>
    %124 = arith.extf %123 : vector<1x64xbf16> to vector<1x64xf32>
    %125 = vector.broadcast %124 : vector<1x64xf32> to vector<17x64xf32>
    %126 = arith.addf %121, %125 : vector<17x64xf32>
    %127 = arith.addf %3, %126 : vector<17x64xf32>
    %c0_42 = arith.constant 0 : index
    %c0_43 = arith.constant 0 : index
    %c0_44 = arith.constant 0 : index
    %128 = vector.load %arg9[%c0_42, %c0_43, %c0_44] : memref<1x1x64xbf16, #tpu.memory_space<vmem>>, vector<1x1x64xbf16>
    %129 = vector.shape_cast %128 : vector<1x1x64xbf16> to vector<1x64xbf16>
    %130 = arith.extf %129 : vector<1x64xbf16> to vector<1x64xf32>
    %c0_45 = arith.constant 0 : index
    %c0_46 = arith.constant 0 : index
    %c0_47 = arith.constant 0 : index
    %131 = vector.load %arg10[%c0_45, %c0_46, %c0_47] : memref<1x1x64xbf16, #tpu.memory_space<vmem>>, vector<1x1x64xbf16>
    %132 = vector.shape_cast %131 : vector<1x1x64xbf16> to vector<1x64xbf16>
    %133 = arith.extf %132 : vector<1x64xbf16> to vector<1x64xf32>
    %cst_48 = arith.constant dense<0.000000e+00> : vector<17xf32>
    %134 = vector.multi_reduction <add>, %127, %cst_48 [1] : vector<17x64xf32> to vector<17xf32>
    %135 = vector.shape_cast %134 : vector<17xf32> to vector<17x1xf32>
    %cst_49 = arith.constant 6.400000e+01 : f32
    %136 = vector.broadcast %cst_49 : f32 to vector<17x1xf32>
    %137 = arith.divf %135, %136 : vector<17x1xf32>
    %138 = vector.broadcast %137 : vector<17x1xf32> to vector<17x64xf32>
    %139 = arith.subf %127, %138 : vector<17x64xf32>
    %140 = arith.mulf %139, %139 : vector<17x64xf32>
    %cst_50 = arith.constant dense<0.000000e+00> : vector<17xf32>
    %141 = vector.multi_reduction <add>, %140, %cst_50 [1] : vector<17x64xf32> to vector<17xf32>
    %142 = vector.shape_cast %141 : vector<17xf32> to vector<17x1xf32>
    %cst_51 = arith.constant 6.400000e+01 : f32
    %143 = vector.broadcast %cst_51 : f32 to vector<17x1xf32>
    %144 = arith.divf %142, %143 : vector<17x1xf32>
    %145 = vector.broadcast %137 : vector<17x1xf32> to vector<17x64xf32>
    %146 = arith.subf %127, %145 : vector<17x64xf32>
    %cst_52 = arith.constant 9.99999974E-6 : f32
    %147 = vector.broadcast %cst_52 : f32 to vector<17x1xf32>
    %148 = arith.addf %144, %147 : vector<17x1xf32>
    %149 = math.rsqrt %148 : vector<17x1xf32>
    %150 = vector.broadcast %149 : vector<17x1xf32> to vector<17x64xf32>
    %151 = arith.mulf %146, %150 : vector<17x64xf32>
    %152 = vector.broadcast %130 : vector<1x64xf32> to vector<17x64xf32>
    %153 = arith.mulf %151, %152 : vector<17x64xf32>
    %154 = vector.broadcast %133 : vector<1x64xf32> to vector<17x64xf32>
    %155 = arith.addf %153, %154 : vector<17x64xf32>
    %156 = arith.truncf %155 : vector<17x64xf32> to vector<17x64xbf16>
    %c0_53 = arith.constant 0 : index
    %c0_54 = arith.constant 0 : index
    %c0_55 = arith.constant 0 : index
    %157 = vector.load %arg11[%c0_53, %c0_54, %c0_55] : memref<1x64x256xbf16, #tpu.memory_space<vmem>>, vector<1x64x256xbf16>
    %158 = vector.shape_cast %157 : vector<1x64x256xbf16> to vector<64x256xbf16>
    %cst_56 = arith.constant dense<0.000000e+00> : vector<17x256xf32>
    %159 = tpu.matmul %156, %158, %cst_56 {dimension_numbers = #tpu.dot_dimension_numbers<[1], [0], [0], [1], [0, 0, 1, 1], [], []>} : vector<17x64xbf16>, vector<64x256xbf16>, vector<17x256xf32> -> vector<17x256xf32>
    %c0_57 = arith.constant 0 : index
    %c0_58 = arith.constant 0 : index
    %c0_59 = arith.constant 0 : index
    %160 = vector.load %arg12[%c0_57, %c0_58, %c0_59] : memref<1x1x256xbf16, #tpu.memory_space<vmem>>, vector<1x1x256xbf16>
    %161 = vector.shape_cast %160 : vector<1x1x256xbf16> to vector<1x256xbf16>
    %162 = arith.extf %161 : vector<1x256xbf16> to vector<1x256xf32>
    %163 = vector.broadcast %162 : vector<1x256xf32> to vector<17x256xf32>
    %164 = arith.addf %159, %163 : vector<17x256xf32>
    %cst_60 = arith.constant 1.702000e+00 : f32
    %165 = vector.broadcast %cst_60 : f32 to vector<17x256xf32>
    %166 = arith.mulf %165, %164 : vector<17x256xf32>
    %167 = arith.negf %166 : vector<17x256xf32>
    %168 = math.exp %167 : vector<17x256xf32>
    %cst_61 = arith.constant 1.000000e+00 : f32
    %169 = vector.broadcast %cst_61 : f32 to vector<17x256xf32>
    %170 = arith.addf %169, %168 : vector<17x256xf32>
    %171 = arith.divf %169, %170 : vector<17x256xf32>
    %172 = arith.mulf %164, %171 : vector<17x256xf32>
    %173 = arith.truncf %172 : vector<17x256xf32> to vector<17x256xbf16>
    %c0_62 = arith.constant 0 : index
    %c0_63 = arith.constant 0 : index
    %c0_64 = arith.constant 0 : index
    %174 = vector.load %arg13[%c0_62, %c0_63, %c0_64] : memref<1x256x64xbf16, #tpu.memory_space<vmem>>, vector<1x256x64xbf16>
    %175 = vector.shape_cast %174 : vector<1x256x64xbf16> to vector<256x64xbf16>
    %cst_65 = arith.constant dense<0.000000e+00> : vector<17x64xf32>
    %176 = tpu.matmul %173, %175, %cst_65 {dimension_numbers = #tpu.dot_dimension_numbers<[1], [0], [0], [1], [0, 0, 1, 1], [], []>} : vector<17x256xbf16>, vector<256x64xbf16>, vector<17x64xf32> -> vector<17x64xf32>
    %c0_66 = arith.constant 0 : index
    %c0_67 = arith.constant 0 : index
    %c0_68 = arith.constant 0 : index
    %177 = vector.load %arg14[%c0_66, %c0_67, %c0_68] : memref<1x1x64xbf16, #tpu.memory_space<vmem>>, vector<1x1x64xbf16>
    %178 = vector.shape_cast %177 : vector<1x1x64xbf16> to vector<1x64xbf16>
    %179 = arith.extf %178 : vector<1x64xbf16> to vector<1x64xf32>
    %180 = vector.broadcast %179 : vector<1x64xf32> to vector<17x64xf32>
    %181 = arith.addf %176, %180 : vector<17x64xf32>
    %182 = arith.addf %127, %181 : vector<17x64xf32>
    %c0_69 = arith.constant 0 : index
    %c0_70 = arith.constant 0 : index
    %183 = vector.load %arg16[%c0_69, %c0_70] : memref<17x64xf32, #tpu.memory_space<vmem>>, vector<17x64xf32>
    tpu.vector_store %arg16[%c0_69, %c0_70], %182 {strides = array<i32>} : memref<17x64xf32, #tpu.memory_space<vmem>>, vector<17x64xf32>,
    %c1_i32 = arith.constant 1 : i32
    %184 = arith.cmpi eq, %arg1, %c1_i32 : i32
    %185 = arith.extui %184 : i1 to i32
    %c0_i32_71 = arith.constant 0 : i32
    %186 = arith.cmpi ne, %185, %c0_i32_71 : i32
    scf.if %186 {
      %187 = arith.truncf %182 : vector<17x64xf32> to vector<17x64xbf16>
      %c0_72 = arith.constant 0 : index
      %c0_73 = arith.constant 0 : index
      %c0_74 = arith.constant 0 : index
      %188 = vector.load %arg15[%c0_72, %c0_73, %c0_74] : memref<1x17x64xbf16, #tpu.memory_space<vmem>>, vector<1x17x64xbf16>
      %189 = vector.shape_cast %188 : vector<1x17x64xbf16> to vector<17x64xbf16>
      %190 = vector.shape_cast %187 : vector<17x64xbf16> to vector<1x17x64xbf16>
      tpu.vector_store %arg15[%c0_72, %c0_73, %c0_74], %190 {strides = array<i32>} : memref<1x17x64xbf16, #tpu.memory_space<vmem>>, vector<1x17x64xbf16>,
    } else {
    }
    return
  }
  func.func @transform_0(%arg0: i32, %arg1: i32) -> (i32, i32, i32) {
    %c0_i32 = arith.constant 0 : i32
    %c0_i32_0 = arith.constant 0 : i32
    %c0_i32_1 = arith.constant 0 : i32
    return %arg0, %c0_i32, %c0_i32_0 : i32, i32, i32
  }
  func.func @transform_1(%arg0: i32, %arg1: i32) -> (i32, i32, i32) {
    %c0_i32 = arith.constant 0 : i32
    %c0_i32_0 = arith.constant 0 : i32
    %c0_i32_1 = arith.constant 0 : i32
    return %arg1, %c0_i32, %c0_i32_0 : i32, i32, i32
  }
  func.func @transform_2(%arg0: i32, %arg1: i32) -> (i32, i32, i32) {
    %c0_i32 = arith.constant 0 : i32
    %c0_i32_0 = arith.constant 0 : i32
    %c0_i32_1 = arith.constant 0 : i32
    return %arg1, %c0_i32, %c0_i32_0 : i32, i32, i32
  }
  func.func @transform_3(%arg0: i32, %arg1: i32) -> (i32, i32, i32) {
    %c0_i32 = arith.constant 0 : i32
    %c0_i32_0 = arith.constant 0 : i32
    %c0_i32_1 = arith.constant 0 : i32
    return %arg1, %c0_i32, %c0_i32_0 : i32, i32, i32
  }
  func.func @transform_4(%arg0: i32, %arg1: i32) -> (i32, i32, i32) {
    %c0_i32 = arith.constant 0 : i32
    %c0_i32_0 = arith.constant 0 : i32
    %c0_i32_1 = arith.constant 0 : i32
    return %arg1, %c0_i32, %c0_i32_0 : i32, i32, i32
  }
  func.func @transform_5(%arg0: i32, %arg1: i32) -> (i32, i32, i32) {
    %c0_i32 = arith.constant 0 : i32
    %c0_i32_0 = arith.constant 0 : i32
    %c0_i32_1 = arith.constant 0 : i32
    return %arg1, %c0_i32, %c0_i32_0 : i32, i32, i32
  }
  func.func @transform_6(%arg0: i32, %arg1: i32) -> (i32, i32, i32) {
    %c0_i32 = arith.constant 0 : i32
    %c0_i32_0 = arith.constant 0 : i32
    %c0_i32_1 = arith.constant 0 : i32
    return %arg1, %c0_i32, %c0_i32_0 : i32, i32, i32
  }
  func.func @transform_7(%arg0: i32, %arg1: i32) -> (i32, i32, i32) {
    %c0_i32 = arith.constant 0 : i32
    %c0_i32_0 = arith.constant 0 : i32
    %c0_i32_1 = arith.constant 0 : i32
    return %arg1, %c0_i32, %c0_i32_0 : i32, i32, i32
  }
  func.func @transform_8(%arg0: i32, %arg1: i32) -> (i32, i32, i32) {
    %c0_i32 = arith.constant 0 : i32
    %c0_i32_0 = arith.constant 0 : i32
    %c0_i32_1 = arith.constant 0 : i32
    return %arg1, %c0_i32, %c0_i32_0 : i32, i32, i32
  }
  func.func @transform_9(%arg0: i32, %arg1: i32) -> (i32, i32, i32) {
    %c0_i32 = arith.constant 0 : i32
    %c0_i32_0 = arith.constant 0 : i32
    %c0_i32_1 = arith.constant 0 : i32
    return %arg1, %c0_i32, %c0_i32_0 : i32, i32, i32
  }
  func.func @transform_10(%arg0: i32, %arg1: i32) -> (i32, i32, i32) {
    %c0_i32 = arith.constant 0 : i32
    %c0_i32_0 = arith.constant 0 : i32
    %c0_i32_1 = arith.constant 0 : i32
    return %arg1, %c0_i32, %c0_i32_0 : i32, i32, i32
  }
  func.func @transform_11(%arg0: i32, %arg1: i32) -> (i32, i32, i32) {
    %c0_i32 = arith.constant 0 : i32
    %c0_i32_0 = arith.constant 0 : i32
    %c0_i32_1 = arith.constant 0 : i32
    return %arg1, %c0_i32, %c0_i32_0 : i32, i32, i32
  }
  func.func @transform_12(%arg0: i32, %arg1: i32) -> (i32, i32, i32) {
    %c0_i32 = arith.constant 0 : i32
    %c0_i32_0 = arith.constant 0 : i32
    %c0_i32_1 = arith.constant 0 : i32
    return %arg1, %c0_i32, %c0_i32_0 : i32, i32, i32
  }
  func.func @transform_13(%arg0: i32, %arg1: i32) -> (i32, i32, i32) {
    %c0_i32 = arith.constant 0 : i32
    %c0_i32_0 = arith.constant 0 : i32
    %c0_i32_1 = arith.constant 0 : i32
    return %arg0, %c0_i32, %c0_i32_0 : i32, i32, i32
  }
}

module attributes {stable_mosaic.version = 11 : i64} {
  func.func @_head_kernel(%arg0: i32, %arg1: memref<2x64xbf16, #tpu.memory_space<vmem>>, %arg2: memref<1x64xbf16, #tpu.memory_space<vmem>>, %arg3: memref<1x64xbf16, #tpu.memory_space<vmem>>, %arg4: memref<64x32xbf16, #tpu.memory_space<vmem>>, %arg5: memref<2x32xf32, #tpu.memory_space<vmem>>) attributes {dimension_semantics = [#tpu.dimension_semantics<arbitrary>], iteration_bounds = array<i64: 1>, scalar_prefetch = 0 : i64, scratch_operands = 0 : i64, tpu.core_type = #tpu.core_type<tc>, window_params = [{pipeline_mode = #tpu.pipeline_mode<synchronous>, transform_indices = @transform_0, window_bounds = array<i64: 2, 64>}, {pipeline_mode = #tpu.pipeline_mode<synchronous>, transform_indices = @transform_1, window_bounds = array<i64: 1, 64>}, {pipeline_mode = #tpu.pipeline_mode<synchronous>, transform_indices = @transform_2, window_bounds = array<i64: 1, 64>}, {pipeline_mode = #tpu.pipeline_mode<synchronous>, transform_indices = @transform_3, window_bounds = array<i64: 64, 32>}, {pipeline_mode = #tpu.pipeline_mode<synchronous>, transform_indices = @transform_4, window_bounds = array<i64: 2, 32>}]} {
    %c0 = arith.constant 0 : index
    %c0_0 = arith.constant 0 : index
    %0 = vector.load %arg1[%c0, %c0_0] : memref<2x64xbf16, #tpu.memory_space<vmem>>, vector<2x64xbf16>
    %1 = arith.extf %0 : vector<2x64xbf16> to vector<2x64xf32>
    %c0_1 = arith.constant 0 : index
    %c0_2 = arith.constant 0 : index
    %2 = vector.load %arg2[%c0_1, %c0_2] : memref<1x64xbf16, #tpu.memory_space<vmem>>, vector<1x64xbf16>
    %3 = arith.extf %2 : vector<1x64xbf16> to vector<1x64xf32>
    %c0_3 = arith.constant 0 : index
    %c0_4 = arith.constant 0 : index
    %4 = vector.load %arg3[%c0_3, %c0_4] : memref<1x64xbf16, #tpu.memory_space<vmem>>, vector<1x64xbf16>
    %5 = arith.extf %4 : vector<1x64xbf16> to vector<1x64xf32>
    %cst = arith.constant dense<0.000000e+00> : vector<2xf32>
    %6 = vector.multi_reduction <add>, %1, %cst [1] : vector<2x64xf32> to vector<2xf32>
    %7 = vector.shape_cast %6 : vector<2xf32> to vector<2x1xf32>
    %cst_5 = arith.constant 6.400000e+01 : f32
    %8 = vector.broadcast %cst_5 : f32 to vector<2x1xf32>
    %9 = arith.divf %7, %8 : vector<2x1xf32>
    %10 = vector.broadcast %9 : vector<2x1xf32> to vector<2x64xf32>
    %11 = arith.subf %1, %10 : vector<2x64xf32>
    %12 = arith.mulf %11, %11 : vector<2x64xf32>
    %cst_6 = arith.constant dense<0.000000e+00> : vector<2xf32>
    %13 = vector.multi_reduction <add>, %12, %cst_6 [1] : vector<2x64xf32> to vector<2xf32>
    %14 = vector.shape_cast %13 : vector<2xf32> to vector<2x1xf32>
    %cst_7 = arith.constant 6.400000e+01 : f32
    %15 = vector.broadcast %cst_7 : f32 to vector<2x1xf32>
    %16 = arith.divf %14, %15 : vector<2x1xf32>
    %17 = vector.broadcast %9 : vector<2x1xf32> to vector<2x64xf32>
    %18 = arith.subf %1, %17 : vector<2x64xf32>
    %cst_8 = arith.constant 9.99999974E-6 : f32
    %19 = vector.broadcast %cst_8 : f32 to vector<2x1xf32>
    %20 = arith.addf %16, %19 : vector<2x1xf32>
    %21 = math.rsqrt %20 : vector<2x1xf32>
    %22 = vector.broadcast %21 : vector<2x1xf32> to vector<2x64xf32>
    %23 = arith.mulf %18, %22 : vector<2x64xf32>
    %24 = vector.broadcast %3 : vector<1x64xf32> to vector<2x64xf32>
    %25 = arith.mulf %23, %24 : vector<2x64xf32>
    %26 = vector.broadcast %5 : vector<1x64xf32> to vector<2x64xf32>
    %27 = arith.addf %25, %26 : vector<2x64xf32>
    %28 = arith.truncf %27 : vector<2x64xf32> to vector<2x64xbf16>
    %c0_9 = arith.constant 0 : index
    %c0_10 = arith.constant 0 : index
    %29 = vector.load %arg4[%c0_9, %c0_10] : memref<64x32xbf16, #tpu.memory_space<vmem>>, vector<64x32xbf16>
    %cst_11 = arith.constant dense<0.000000e+00> : vector<2x32xf32>
    %30 = tpu.matmul %28, %29, %cst_11 {dimension_numbers = #tpu.dot_dimension_numbers<[1], [0], [0], [1], [0, 0, 1, 1], [], []>} : vector<2x64xbf16>, vector<64x32xbf16>, vector<2x32xf32> -> vector<2x32xf32>
    %31 = arith.mulf %30, %30 : vector<2x32xf32>
    %cst_12 = arith.constant dense<0.000000e+00> : vector<2xf32>
    %32 = vector.multi_reduction <add>, %31, %cst_12 [1] : vector<2x32xf32> to vector<2xf32>
    %33 = vector.shape_cast %32 : vector<2xf32> to vector<2x1xf32>
    %cst_13 = arith.constant 1.000000e-24 : f32
    %34 = vector.broadcast %cst_13 : f32 to vector<2x1xf32>
    %35 = arith.maximumf %33, %34 : vector<2x1xf32>
    %36 = math.rsqrt %35 : vector<2x1xf32>
    %37 = vector.broadcast %36 : vector<2x1xf32> to vector<2x32xf32>
    %38 = arith.mulf %30, %37 : vector<2x32xf32>
    %c0_14 = arith.constant 0 : index
    %c0_15 = arith.constant 0 : index
    %39 = vector.load %arg5[%c0_14, %c0_15] : memref<2x32xf32, #tpu.memory_space<vmem>>, vector<2x32xf32>
    tpu.vector_store %arg5[%c0_14, %c0_15], %38 {strides = array<i32>} : memref<2x32xf32, #tpu.memory_space<vmem>>, vector<2x32xf32>,
    return
  }
  func.func @transform_0(%arg0: i32) -> (i32, i32) {
    %c0_i32 = arith.constant 0 : i32
    %c0_i32_0 = arith.constant 0 : i32
    %c0_i32_1 = arith.constant 0 : i32
    return %c0_i32, %c0_i32_0 : i32, i32
  }
  func.func @transform_1(%arg0: i32) -> (i32, i32) {
    %c0_i32 = arith.constant 0 : i32
    %c0_i32_0 = arith.constant 0 : i32
    %c0_i32_1 = arith.constant 0 : i32
    return %c0_i32, %c0_i32_0 : i32, i32
  }
  func.func @transform_2(%arg0: i32) -> (i32, i32) {
    %c0_i32 = arith.constant 0 : i32
    %c0_i32_0 = arith.constant 0 : i32
    %c0_i32_1 = arith.constant 0 : i32
    return %c0_i32, %c0_i32_0 : i32, i32
  }
  func.func @transform_3(%arg0: i32) -> (i32, i32) {
    %c0_i32 = arith.constant 0 : i32
    %c0_i32_0 = arith.constant 0 : i32
    %c0_i32_1 = arith.constant 0 : i32
    return %c0_i32, %c0_i32_0 : i32, i32
  }
  func.func @transform_4(%arg0: i32) -> (i32, i32) {
    %c0_i32 = arith.constant 0 : i32
    %c0_i32_0 = arith.constant 0 : i32
    %c0_i32_1 = arith.constant 0 : i32
    return %c0_i32, %c0_i32_0 : i32, i32
  }
}

module attributes {stable_mosaic.version = 11 : i64} {
  func.func @_encoder_kernel(%arg0: i32, %arg1: i32, %arg2: memref<1x8x64xbf16, #tpu.memory_space<vmem>>, %arg3: memref<1x1x64xbf16, #tpu.memory_space<vmem>>, %arg4: memref<1x1x64xbf16, #tpu.memory_space<vmem>>, %arg5: memref<1x64x192xbf16, #tpu.memory_space<vmem>>, %arg6: memref<1x1x192xbf16, #tpu.memory_space<vmem>>, %arg7: memref<1x64x64xbf16, #tpu.memory_space<vmem>>, %arg8: memref<1x1x64xbf16, #tpu.memory_space<vmem>>, %arg9: memref<1x1x64xbf16, #tpu.memory_space<vmem>>, %arg10: memref<1x1x64xbf16, #tpu.memory_space<vmem>>, %arg11: memref<1x64x256xbf16, #tpu.memory_space<vmem>>, %arg12: memref<1x1x256xbf16, #tpu.memory_space<vmem>>, %arg13: memref<1x256x64xbf16, #tpu.memory_space<vmem>>, %arg14: memref<1x1x64xbf16, #tpu.memory_space<vmem>>, %arg15: memref<1x8x64xbf16, #tpu.memory_space<vmem>>, %arg16: memref<8x64xf32, #tpu.memory_space<vmem>>) attributes {dimension_semantics = [#tpu.dimension_semantics<parallel>, #tpu.dimension_semantics<arbitrary>], iteration_bounds = array<i64: 2, 2>, scalar_prefetch = 0 : i64, scratch_operands = 1 : i64, tpu.core_type = #tpu.core_type<tc>, window_params = [{transform_indices = @transform_0, window_bounds = array<i64: 1, 8, 64>}, {transform_indices = @transform_1, window_bounds = array<i64: 1, 1, 64>}, {transform_indices = @transform_2, window_bounds = array<i64: 1, 1, 64>}, {transform_indices = @transform_3, window_bounds = array<i64: 1, 64, 192>}, {transform_indices = @transform_4, window_bounds = array<i64: 1, 1, 192>}, {transform_indices = @transform_5, window_bounds = array<i64: 1, 64, 64>}, {transform_indices = @transform_6, window_bounds = array<i64: 1, 1, 64>}, {transform_indices = @transform_7, window_bounds = array<i64: 1, 1, 64>}, {transform_indices = @transform_8, window_bounds = array<i64: 1, 1, 64>}, {transform_indices = @transform_9, window_bounds = array<i64: 1, 64, 256>}, {transform_indices = @transform_10, window_bounds = array<i64: 1, 1, 256>}, {transform_indices = @transform_11, window_bounds = array<i64: 1, 256, 64>}, {transform_indices = @transform_12, window_bounds = array<i64: 1, 1, 64>}, {transform_indices = @transform_13, window_bounds = array<i64: 1, 8, 64>}]} {
    %c0_i32 = arith.constant 0 : i32
    %0 = arith.cmpi eq, %arg1, %c0_i32 : i32
    %1 = arith.extui %0 : i1 to i32
    %c0_i32_0 = arith.constant 0 : i32
    %2 = arith.cmpi ne, %1, %c0_i32_0 : i32
    scf.if %2 {
      %c0_76 = arith.constant 0 : index
      %c0_77 = arith.constant 0 : index
      %c0_78 = arith.constant 0 : index
      %198 = vector.load %arg2[%c0_76, %c0_77, %c0_78] : memref<1x8x64xbf16, #tpu.memory_space<vmem>>, vector<1x8x64xbf16>
      %199 = vector.shape_cast %198 : vector<1x8x64xbf16> to vector<8x64xbf16>
      %200 = arith.extf %199 : vector<8x64xbf16> to vector<8x64xf32>
      %c0_79 = arith.constant 0 : index
      %c0_80 = arith.constant 0 : index
      %201 = vector.load %arg16[%c0_79, %c0_80] : memref<8x64xf32, #tpu.memory_space<vmem>>, vector<8x64xf32>
      tpu.vector_store %arg16[%c0_79, %c0_80], %200 {strides = array<i32>} : memref<8x64xf32, #tpu.memory_space<vmem>>, vector<8x64xf32>,
    } else {
    }
    %c0 = arith.constant 0 : index
    %c0_1 = arith.constant 0 : index
    %3 = vector.load %arg16[%c0, %c0_1] : memref<8x64xf32, #tpu.memory_space<vmem>>, vector<8x64xf32>
    %c0_2 = arith.constant 0 : index
    %c0_3 = arith.constant 0 : index
    %c0_4 = arith.constant 0 : index
    %4 = vector.load %arg3[%c0_2, %c0_3, %c0_4] : memref<1x1x64xbf16, #tpu.memory_space<vmem>>, vector<1x1x64xbf16>
    %5 = vector.shape_cast %4 : vector<1x1x64xbf16> to vector<1x64xbf16>
    %6 = arith.extf %5 : vector<1x64xbf16> to vector<1x64xf32>
    %c0_5 = arith.constant 0 : index
    %c0_6 = arith.constant 0 : index
    %c0_7 = arith.constant 0 : index
    %7 = vector.load %arg4[%c0_5, %c0_6, %c0_7] : memref<1x1x64xbf16, #tpu.memory_space<vmem>>, vector<1x1x64xbf16>
    %8 = vector.shape_cast %7 : vector<1x1x64xbf16> to vector<1x64xbf16>
    %9 = arith.extf %8 : vector<1x64xbf16> to vector<1x64xf32>
    %cst = arith.constant dense<0.000000e+00> : vector<8xf32>
    %10 = vector.multi_reduction <add>, %3, %cst [1] : vector<8x64xf32> to vector<8xf32>
    %11 = vector.shape_cast %10 : vector<8xf32> to vector<8x1xf32>
    %cst_8 = arith.constant 6.400000e+01 : f32
    %12 = vector.broadcast %cst_8 : f32 to vector<8x1xf32>
    %13 = arith.divf %11, %12 : vector<8x1xf32>
    %14 = vector.broadcast %13 : vector<8x1xf32> to vector<8x64xf32>
    %15 = arith.subf %3, %14 : vector<8x64xf32>
    %16 = arith.mulf %15, %15 : vector<8x64xf32>
    %cst_9 = arith.constant dense<0.000000e+00> : vector<8xf32>
    %17 = vector.multi_reduction <add>, %16, %cst_9 [1] : vector<8x64xf32> to vector<8xf32>
    %18 = vector.shape_cast %17 : vector<8xf32> to vector<8x1xf32>
    %cst_10 = arith.constant 6.400000e+01 : f32
    %19 = vector.broadcast %cst_10 : f32 to vector<8x1xf32>
    %20 = arith.divf %18, %19 : vector<8x1xf32>
    %21 = vector.broadcast %13 : vector<8x1xf32> to vector<8x64xf32>
    %22 = arith.subf %3, %21 : vector<8x64xf32>
    %cst_11 = arith.constant 9.99999974E-6 : f32
    %23 = vector.broadcast %cst_11 : f32 to vector<8x1xf32>
    %24 = arith.addf %20, %23 : vector<8x1xf32>
    %25 = math.rsqrt %24 : vector<8x1xf32>
    %26 = vector.broadcast %25 : vector<8x1xf32> to vector<8x64xf32>
    %27 = arith.mulf %22, %26 : vector<8x64xf32>
    %28 = vector.broadcast %6 : vector<1x64xf32> to vector<8x64xf32>
    %29 = arith.mulf %27, %28 : vector<8x64xf32>
    %30 = vector.broadcast %9 : vector<1x64xf32> to vector<8x64xf32>
    %31 = arith.addf %29, %30 : vector<8x64xf32>
    %32 = arith.truncf %31 : vector<8x64xf32> to vector<8x64xbf16>
    %c0_12 = arith.constant 0 : index
    %c0_13 = arith.constant 0 : index
    %c0_14 = arith.constant 0 : index
    %33 = vector.load %arg5[%c0_12, %c0_13, %c0_14] : memref<1x64x192xbf16, #tpu.memory_space<vmem>>, vector<1x64x192xbf16>
    %34 = vector.shape_cast %33 : vector<1x64x192xbf16> to vector<64x192xbf16>
    %cst_15 = arith.constant dense<0.000000e+00> : vector<8x192xf32>
    %35 = tpu.matmul %32, %34, %cst_15 {dimension_numbers = #tpu.dot_dimension_numbers<[1], [0], [0], [1], [0, 0, 1, 1], [], []>} : vector<8x64xbf16>, vector<64x192xbf16>, vector<8x192xf32> -> vector<8x192xf32>
    %c0_16 = arith.constant 0 : index
    %c0_17 = arith.constant 0 : index
    %c0_18 = arith.constant 0 : index
    %36 = vector.load %arg6[%c0_16, %c0_17, %c0_18] : memref<1x1x192xbf16, #tpu.memory_space<vmem>>, vector<1x1x192xbf16>
    %37 = vector.shape_cast %36 : vector<1x1x192xbf16> to vector<1x192xbf16>
    %38 = arith.extf %37 : vector<1x192xbf16> to vector<1x192xf32>
    %39 = vector.broadcast %38 : vector<1x192xf32> to vector<8x192xf32>
    %40 = arith.addf %35, %39 : vector<8x192xf32>
    %41 = tpu.iota {dimensions = array<i32: 0>} : vector<8x8xi32>
    %42 = tpu.iota {dimensions = array<i32: 1>} : vector<8x8xi32>
    %43 = arith.cmpi sle, %42, %41 : vector<8x8xi32>
    %44 = vector.extract_strided_slice %40 {offsets = [0, 0], sizes = [8, 16], strides = [1, 1]} : vector<8x192xf32> to vector<8x16xf32>
    %45 = vector.extract_strided_slice %40 {offsets = [0, 64], sizes = [8, 16], strides = [1, 1]} : vector<8x192xf32> to vector<8x16xf32>
    %46 = vector.extract_strided_slice %40 {offsets = [0, 128], sizes = [8, 16], strides = [1, 1]} : vector<8x192xf32> to vector<8x16xf32>
    %47 = arith.truncf %44 : vector<8x16xf32> to vector<8x16xbf16>
    %48 = arith.truncf %45 : vector<8x16xf32> to vector<8x16xbf16>
    %cst_19 = arith.constant dense<0.000000e+00> : vector<8x8xf32>
    %49 = tpu.matmul %47, %48, %cst_19 {dimension_numbers = #tpu.dot_dimension_numbers<[1], [1], [0], [0], [0, 0, 1, 0], [], []>} : vector<8x16xbf16>, vector<8x16xbf16>, vector<8x8xf32> -> vector<8x8xf32>
    %cst_20 = arith.constant -1.000000e+30 : f32
    %50 = vector.broadcast %cst_20 : f32 to vector<8x8xf32>
    %51 = arith.select %43, %49, %50 : vector<8x8xi1>, vector<8x8xf32>
    %cst_21 = arith.constant dense<0xFF800000> : vector<8xf32>
    %52 = vector.multi_reduction <maximumf>, %51, %cst_21 [1] : vector<8x8xf32> to vector<8xf32>
    %53 = vector.shape_cast %52 : vector<8xf32> to vector<8x1xf32>
    %54 = vector.broadcast %53 : vector<8x1xf32> to vector<8x8xf32>
    %55 = arith.subf %51, %54 : vector<8x8xf32>
    %56 = math.exp %55 : vector<8x8xf32>
    %cst_22 = arith.constant dense<0.000000e+00> : vector<8xf32>
    %57 = vector.multi_reduction <add>, %56, %cst_22 [1] : vector<8x8xf32> to vector<8xf32>
    %58 = vector.shape_cast %57 : vector<8xf32> to vector<8x1xf32>
    %59 = tpu.reciprocal %58 {approx = true} : vector<8x1xf32> -> vector<8x1xf32>
    %60 = vector.broadcast %59 : vector<8x1xf32> to vector<8x8xf32>
    %61 = arith.mulf %56, %60 : vector<8x8xf32>
    %62 = arith.truncf %61 : vector<8x8xf32> to vector<8x8xbf16>
    %63 = arith.truncf %46 : vector<8x16xf32> to vector<8x16xbf16>
    %cst_23 = arith.constant dense<0.000000e+00> : vector<8x16xf32>
    %64 = tpu.matmul %62, %63, %cst_23 {dimension_numbers = #tpu.dot_dimension_numbers<[1], [0], [0], [1], [0, 0, 1, 1], [], []>} : vector<8x8xbf16>, vector<8x16xbf16>, vector<8x16xf32> -> vector<8x16xf32>
    %65 = vector.extract_strided_slice %40 {offsets = [0, 16], sizes = [8, 16], strides = [1, 1]} : vector<8x192xf32> to vector<8x16xf32>
    %66 = vector.extract_strided_slice %40 {offsets = [0, 80], sizes = [8, 16], strides = [1, 1]} : vector<8x192xf32> to vector<8x16xf32>
    %67 = vector.extract_strided_slice %40 {offsets = [0, 144], sizes = [8, 16], strides = [1, 1]} : vector<8x192xf32> to vector<8x16xf32>
    %68 = arith.truncf %65 : vector<8x16xf32> to vector<8x16xbf16>
    %69 = arith.truncf %66 : vector<8x16xf32> to vector<8x16xbf16>
    %cst_24 = arith.constant dense<0.000000e+00> : vector<8x8xf32>
    %70 = tpu.matmul %68, %69, %cst_24 {dimension_numbers = #tpu.dot_dimension_numbers<[1], [1], [0], [0], [0, 0, 1, 0], [], []>} : vector<8x16xbf16>, vector<8x16xbf16>, vector<8x8xf32> -> vector<8x8xf32>
    %cst_25 = arith.constant -1.000000e+30 : f32
    %71 = vector.broadcast %cst_25 : f32 to vector<8x8xf32>
    %72 = arith.select %43, %70, %71 : vector<8x8xi1>, vector<8x8xf32>
    %cst_26 = arith.constant dense<0xFF800000> : vector<8xf32>
    %73 = vector.multi_reduction <maximumf>, %72, %cst_26 [1] : vector<8x8xf32> to vector<8xf32>
    %74 = vector.shape_cast %73 : vector<8xf32> to vector<8x1xf32>
    %75 = vector.broadcast %74 : vector<8x1xf32> to vector<8x8xf32>
    %76 = arith.subf %72, %75 : vector<8x8xf32>
    %77 = math.exp %76 : vector<8x8xf32>
    %cst_27 = arith.constant dense<0.000000e+00> : vector<8xf32>
    %78 = vector.multi_reduction <add>, %77, %cst_27 [1] : vector<8x8xf32> to vector<8xf32>
    %79 = vector.shape_cast %78 : vector<8xf32> to vector<8x1xf32>
    %80 = tpu.reciprocal %79 {approx = true} : vector<8x1xf32> -> vector<8x1xf32>
    %81 = vector.broadcast %80 : vector<8x1xf32> to vector<8x8xf32>
    %82 = arith.mulf %77, %81 : vector<8x8xf32>
    %83 = arith.truncf %82 : vector<8x8xf32> to vector<8x8xbf16>
    %84 = arith.truncf %67 : vector<8x16xf32> to vector<8x16xbf16>
    %cst_28 = arith.constant dense<0.000000e+00> : vector<8x16xf32>
    %85 = tpu.matmul %83, %84, %cst_28 {dimension_numbers = #tpu.dot_dimension_numbers<[1], [0], [0], [1], [0, 0, 1, 1], [], []>} : vector<8x8xbf16>, vector<8x16xbf16>, vector<8x16xf32> -> vector<8x16xf32>
    %86 = vector.extract_strided_slice %40 {offsets = [0, 32], sizes = [8, 16], strides = [1, 1]} : vector<8x192xf32> to vector<8x16xf32>
    %87 = vector.extract_strided_slice %40 {offsets = [0, 96], sizes = [8, 16], strides = [1, 1]} : vector<8x192xf32> to vector<8x16xf32>
    %88 = vector.extract_strided_slice %40 {offsets = [0, 160], sizes = [8, 16], strides = [1, 1]} : vector<8x192xf32> to vector<8x16xf32>
    %89 = arith.truncf %86 : vector<8x16xf32> to vector<8x16xbf16>
    %90 = arith.truncf %87 : vector<8x16xf32> to vector<8x16xbf16>
    %cst_29 = arith.constant dense<0.000000e+00> : vector<8x8xf32>
    %91 = tpu.matmul %89, %90, %cst_29 {dimension_numbers = #tpu.dot_dimension_numbers<[1], [1], [0], [0], [0, 0, 1, 0], [], []>} : vector<8x16xbf16>, vector<8x16xbf16>, vector<8x8xf32> -> vector<8x8xf32>
    %cst_30 = arith.constant -1.000000e+30 : f32
    %92 = vector.broadcast %cst_30 : f32 to vector<8x8xf32>
    %93 = arith.select %43, %91, %92 : vector<8x8xi1>, vector<8x8xf32>
    %cst_31 = arith.constant dense<0xFF800000> : vector<8xf32>
    %94 = vector.multi_reduction <maximumf>, %93, %cst_31 [1] : vector<8x8xf32> to vector<8xf32>
    %95 = vector.shape_cast %94 : vector<8xf32> to vector<8x1xf32>
    %96 = vector.broadcast %95 : vector<8x1xf32> to vector<8x8xf32>
    %97 = arith.subf %93, %96 : vector<8x8xf32>
    %98 = math.exp %97 : vector<8x8xf32>
    %cst_32 = arith.constant dense<0.000000e+00> : vector<8xf32>
    %99 = vector.multi_reduction <add>, %98, %cst_32 [1] : vector<8x8xf32> to vector<8xf32>
    %100 = vector.shape_cast %99 : vector<8xf32> to vector<8x1xf32>
    %101 = tpu.reciprocal %100 {approx = true} : vector<8x1xf32> -> vector<8x1xf32>
    %102 = vector.broadcast %101 : vector<8x1xf32> to vector<8x8xf32>
    %103 = arith.mulf %98, %102 : vector<8x8xf32>
    %104 = arith.truncf %103 : vector<8x8xf32> to vector<8x8xbf16>
    %105 = arith.truncf %88 : vector<8x16xf32> to vector<8x16xbf16>
    %cst_33 = arith.constant dense<0.000000e+00> : vector<8x16xf32>
    %106 = tpu.matmul %104, %105, %cst_33 {dimension_numbers = #tpu.dot_dimension_numbers<[1], [0], [0], [1], [0, 0, 1, 1], [], []>} : vector<8x8xbf16>, vector<8x16xbf16>, vector<8x16xf32> -> vector<8x16xf32>
    %107 = vector.extract_strided_slice %40 {offsets = [0, 48], sizes = [8, 16], strides = [1, 1]} : vector<8x192xf32> to vector<8x16xf32>
    %108 = vector.extract_strided_slice %40 {offsets = [0, 112], sizes = [8, 16], strides = [1, 1]} : vector<8x192xf32> to vector<8x16xf32>
    %109 = vector.extract_strided_slice %40 {offsets = [0, 176], sizes = [8, 16], strides = [1, 1]} : vector<8x192xf32> to vector<8x16xf32>
    %110 = arith.truncf %107 : vector<8x16xf32> to vector<8x16xbf16>
    %111 = arith.truncf %108 : vector<8x16xf32> to vector<8x16xbf16>
    %cst_34 = arith.constant dense<0.000000e+00> : vector<8x8xf32>
    %112 = tpu.matmul %110, %111, %cst_34 {dimension_numbers = #tpu.dot_dimension_numbers<[1], [1], [0], [0], [0, 0, 1, 0], [], []>} : vector<8x16xbf16>, vector<8x16xbf16>, vector<8x8xf32> -> vector<8x8xf32>
    %cst_35 = arith.constant -1.000000e+30 : f32
    %113 = vector.broadcast %cst_35 : f32 to vector<8x8xf32>
    %114 = arith.select %43, %112, %113 : vector<8x8xi1>, vector<8x8xf32>
    %cst_36 = arith.constant dense<0xFF800000> : vector<8xf32>
    %115 = vector.multi_reduction <maximumf>, %114, %cst_36 [1] : vector<8x8xf32> to vector<8xf32>
    %116 = vector.shape_cast %115 : vector<8xf32> to vector<8x1xf32>
    %117 = vector.broadcast %116 : vector<8x1xf32> to vector<8x8xf32>
    %118 = arith.subf %114, %117 : vector<8x8xf32>
    %119 = math.exp %118 : vector<8x8xf32>
    %cst_37 = arith.constant dense<0.000000e+00> : vector<8xf32>
    %120 = vector.multi_reduction <add>, %119, %cst_37 [1] : vector<8x8xf32> to vector<8xf32>
    %121 = vector.shape_cast %120 : vector<8xf32> to vector<8x1xf32>
    %122 = tpu.reciprocal %121 {approx = true} : vector<8x1xf32> -> vector<8x1xf32>
    %123 = vector.broadcast %122 : vector<8x1xf32> to vector<8x8xf32>
    %124 = arith.mulf %119, %123 : vector<8x8xf32>
    %125 = arith.truncf %124 : vector<8x8xf32> to vector<8x8xbf16>
    %126 = arith.truncf %109 : vector<8x16xf32> to vector<8x16xbf16>
    %cst_38 = arith.constant dense<0.000000e+00> : vector<8x16xf32>
    %127 = tpu.matmul %125, %126, %cst_38 {dimension_numbers = #tpu.dot_dimension_numbers<[1], [0], [0], [1], [0, 0, 1, 1], [], []>} : vector<8x8xbf16>, vector<8x16xbf16>, vector<8x16xf32> -> vector<8x16xf32>
    %128 = tpu.concatenate %64, %85, %106, %127 in 1 : vector<8x16xf32>, vector<8x16xf32>, vector<8x16xf32>, vector<8x16xf32> -> vector<8x64xf32>
    %129 = arith.truncf %128 : vector<8x64xf32> to vector<8x64xbf16>
    %c0_39 = arith.constant 0 : index
    %c0_40 = arith.constant 0 : index
    %c0_41 = arith.constant 0 : index
    %130 = vector.load %arg7[%c0_39, %c0_40, %c0_41] : memref<1x64x64xbf16, #tpu.memory_space<vmem>>, vector<1x64x64xbf16>
    %131 = vector.shape_cast %130 : vector<1x64x64xbf16> to vector<64x64xbf16>
    %cst_42 = arith.constant dense<0.000000e+00> : vector<8x64xf32>
    %132 = tpu.matmul %129, %131, %cst_42 {dimension_numbers = #tpu.dot_dimension_numbers<[1], [0], [0], [1], [0, 0, 1, 1], [], []>} : vector<8x64xbf16>, vector<64x64xbf16>, vector<8x64xf32> -> vector<8x64xf32>
    %c0_43 = arith.constant 0 : index
    %c0_44 = arith.constant 0 : index
    %c0_45 = arith.constant 0 : index
    %133 = vector.load %arg8[%c0_43, %c0_44, %c0_45] : memref<1x1x64xbf16, #tpu.memory_space<vmem>>, vector<1x1x64xbf16>
    %134 = vector.shape_cast %133 : vector<1x1x64xbf16> to vector<1x64xbf16>
    %135 = arith.extf %134 : vector<1x64xbf16> to vector<1x64xf32>
    %136 = vector.broadcast %135 : vector<1x64xf32> to vector<8x64xf32>
    %137 = arith.addf %132, %136 : vector<8x64xf32>
    %138 = arith.addf %3, %137 : vector<8x64xf32>
    %c0_46 = arith.constant 0 : index
    %c0_47 = arith.constant 0 : index
    %c0_48 = arith.constant 0 : index
    %139 = vector.load %arg9[%c0_46, %c0_47, %c0_48] : memref<1x1x64xbf16, #tpu.memory_space<vmem>>, vector<1x1x64xbf16>
    %140 = vector.shape_cast %139 : vector<1x1x64xbf16> to vector<1x64xbf16>
    %141 = arith.extf %140 : vector<1x64xbf16> to vector<1x64xf32>
    %c0_49 = arith.constant 0 : index
    %c0_50 = arith.constant 0 : index
    %c0_51 = arith.constant 0 : index
    %142 = vector.load %arg10[%c0_49, %c0_50, %c0_51] : memref<1x1x64xbf16, #tpu.memory_space<vmem>>, vector<1x1x64xbf16>
    %143 = vector.shape_cast %142 : vector<1x1x64xbf16> to vector<1x64xbf16>
    %144 = arith.extf %143 : vector<1x64xbf16> to vector<1x64xf32>
    %cst_52 = arith.constant dense<0.000000e+00> : vector<8xf32>
    %145 = vector.multi_reduction <add>, %138, %cst_52 [1] : vector<8x64xf32> to vector<8xf32>
    %146 = vector.shape_cast %145 : vector<8xf32> to vector<8x1xf32>
    %cst_53 = arith.constant 6.400000e+01 : f32
    %147 = vector.broadcast %cst_53 : f32 to vector<8x1xf32>
    %148 = arith.divf %146, %147 : vector<8x1xf32>
    %149 = vector.broadcast %148 : vector<8x1xf32> to vector<8x64xf32>
    %150 = arith.subf %138, %149 : vector<8x64xf32>
    %151 = arith.mulf %150, %150 : vector<8x64xf32>
    %cst_54 = arith.constant dense<0.000000e+00> : vector<8xf32>
    %152 = vector.multi_reduction <add>, %151, %cst_54 [1] : vector<8x64xf32> to vector<8xf32>
    %153 = vector.shape_cast %152 : vector<8xf32> to vector<8x1xf32>
    %cst_55 = arith.constant 6.400000e+01 : f32
    %154 = vector.broadcast %cst_55 : f32 to vector<8x1xf32>
    %155 = arith.divf %153, %154 : vector<8x1xf32>
    %156 = vector.broadcast %148 : vector<8x1xf32> to vector<8x64xf32>
    %157 = arith.subf %138, %156 : vector<8x64xf32>
    %cst_56 = arith.constant 9.99999974E-6 : f32
    %158 = vector.broadcast %cst_56 : f32 to vector<8x1xf32>
    %159 = arith.addf %155, %158 : vector<8x1xf32>
    %160 = math.rsqrt %159 : vector<8x1xf32>
    %161 = vector.broadcast %160 : vector<8x1xf32> to vector<8x64xf32>
    %162 = arith.mulf %157, %161 : vector<8x64xf32>
    %163 = vector.broadcast %141 : vector<1x64xf32> to vector<8x64xf32>
    %164 = arith.mulf %162, %163 : vector<8x64xf32>
    %165 = vector.broadcast %144 : vector<1x64xf32> to vector<8x64xf32>
    %166 = arith.addf %164, %165 : vector<8x64xf32>
    %167 = arith.truncf %166 : vector<8x64xf32> to vector<8x64xbf16>
    %c0_57 = arith.constant 0 : index
    %c0_58 = arith.constant 0 : index
    %c0_59 = arith.constant 0 : index
    %168 = vector.load %arg11[%c0_57, %c0_58, %c0_59] : memref<1x64x256xbf16, #tpu.memory_space<vmem>>, vector<1x64x256xbf16>
    %169 = vector.shape_cast %168 : vector<1x64x256xbf16> to vector<64x256xbf16>
    %cst_60 = arith.constant dense<0.000000e+00> : vector<8x256xf32>
    %170 = tpu.matmul %167, %169, %cst_60 {dimension_numbers = #tpu.dot_dimension_numbers<[1], [0], [0], [1], [0, 0, 1, 1], [], []>} : vector<8x64xbf16>, vector<64x256xbf16>, vector<8x256xf32> -> vector<8x256xf32>
    %c0_61 = arith.constant 0 : index
    %c0_62 = arith.constant 0 : index
    %c0_63 = arith.constant 0 : index
    %171 = vector.load %arg12[%c0_61, %c0_62, %c0_63] : memref<1x1x256xbf16, #tpu.memory_space<vmem>>, vector<1x1x256xbf16>
    %172 = vector.shape_cast %171 : vector<1x1x256xbf16> to vector<1x256xbf16>
    %173 = arith.extf %172 : vector<1x256xbf16> to vector<1x256xf32>
    %174 = vector.broadcast %173 : vector<1x256xf32> to vector<8x256xf32>
    %175 = arith.addf %170, %174 : vector<8x256xf32>
    %cst_64 = arith.constant 1.702000e+00 : f32
    %176 = vector.broadcast %cst_64 : f32 to vector<8x256xf32>
    %177 = arith.mulf %176, %175 : vector<8x256xf32>
    %178 = arith.negf %177 : vector<8x256xf32>
    %179 = math.exp %178 : vector<8x256xf32>
    %cst_65 = arith.constant 1.000000e+00 : f32
    %180 = vector.broadcast %cst_65 : f32 to vector<8x256xf32>
    %181 = arith.addf %180, %179 : vector<8x256xf32>
    %182 = arith.divf %180, %181 : vector<8x256xf32>
    %183 = arith.mulf %175, %182 : vector<8x256xf32>
    %184 = arith.truncf %183 : vector<8x256xf32> to vector<8x256xbf16>
    %c0_66 = arith.constant 0 : index
    %c0_67 = arith.constant 0 : index
    %c0_68 = arith.constant 0 : index
    %185 = vector.load %arg13[%c0_66, %c0_67, %c0_68] : memref<1x256x64xbf16, #tpu.memory_space<vmem>>, vector<1x256x64xbf16>
    %186 = vector.shape_cast %185 : vector<1x256x64xbf16> to vector<256x64xbf16>
    %cst_69 = arith.constant dense<0.000000e+00> : vector<8x64xf32>
    %187 = tpu.matmul %184, %186, %cst_69 {dimension_numbers = #tpu.dot_dimension_numbers<[1], [0], [0], [1], [0, 0, 1, 1], [], []>} : vector<8x256xbf16>, vector<256x64xbf16>, vector<8x64xf32> -> vector<8x64xf32>
    %c0_70 = arith.constant 0 : index
    %c0_71 = arith.constant 0 : index
    %c0_72 = arith.constant 0 : index
    %188 = vector.load %arg14[%c0_70, %c0_71, %c0_72] : memref<1x1x64xbf16, #tpu.memory_space<vmem>>, vector<1x1x64xbf16>
    %189 = vector.shape_cast %188 : vector<1x1x64xbf16> to vector<1x64xbf16>
    %190 = arith.extf %189 : vector<1x64xbf16> to vector<1x64xf32>
    %191 = vector.broadcast %190 : vector<1x64xf32> to vector<8x64xf32>
    %192 = arith.addf %187, %191 : vector<8x64xf32>
    %193 = arith.addf %138, %192 : vector<8x64xf32>
    %c0_73 = arith.constant 0 : index
    %c0_74 = arith.constant 0 : index
    %194 = vector.load %arg16[%c0_73, %c0_74] : memref<8x64xf32, #tpu.memory_space<vmem>>, vector<8x64xf32>
    tpu.vector_store %arg16[%c0_73, %c0_74], %193 {strides = array<i32>} : memref<8x64xf32, #tpu.memory_space<vmem>>, vector<8x64xf32>,
    %c1_i32 = arith.constant 1 : i32
    %195 = arith.cmpi eq, %arg1, %c1_i32 : i32
    %196 = arith.extui %195 : i1 to i32
    %c0_i32_75 = arith.constant 0 : i32
    %197 = arith.cmpi ne, %196, %c0_i32_75 : i32
    scf.if %197 {
      %198 = arith.truncf %193 : vector<8x64xf32> to vector<8x64xbf16>
      %c0_76 = arith.constant 0 : index
      %c0_77 = arith.constant 0 : index
      %c0_78 = arith.constant 0 : index
      %199 = vector.load %arg15[%c0_76, %c0_77, %c0_78] : memref<1x8x64xbf16, #tpu.memory_space<vmem>>, vector<1x8x64xbf16>
      %200 = vector.shape_cast %199 : vector<1x8x64xbf16> to vector<8x64xbf16>
      %201 = vector.shape_cast %198 : vector<8x64xbf16> to vector<1x8x64xbf16>
      tpu.vector_store %arg15[%c0_76, %c0_77, %c0_78], %201 {strides = array<i32>} : memref<1x8x64xbf16, #tpu.memory_space<vmem>>, vector<1x8x64xbf16>,
    } else {
    }
    return
  }
  func.func @transform_0(%arg0: i32, %arg1: i32) -> (i32, i32, i32) {
    %c0_i32 = arith.constant 0 : i32
    %c0_i32_0 = arith.constant 0 : i32
    %c0_i32_1 = arith.constant 0 : i32
    return %arg0, %c0_i32, %c0_i32_0 : i32, i32, i32
  }
  func.func @transform_1(%arg0: i32, %arg1: i32) -> (i32, i32, i32) {
    %c0_i32 = arith.constant 0 : i32
    %c0_i32_0 = arith.constant 0 : i32
    %c0_i32_1 = arith.constant 0 : i32
    return %arg1, %c0_i32, %c0_i32_0 : i32, i32, i32
  }
  func.func @transform_2(%arg0: i32, %arg1: i32) -> (i32, i32, i32) {
    %c0_i32 = arith.constant 0 : i32
    %c0_i32_0 = arith.constant 0 : i32
    %c0_i32_1 = arith.constant 0 : i32
    return %arg1, %c0_i32, %c0_i32_0 : i32, i32, i32
  }
  func.func @transform_3(%arg0: i32, %arg1: i32) -> (i32, i32, i32) {
    %c0_i32 = arith.constant 0 : i32
    %c0_i32_0 = arith.constant 0 : i32
    %c0_i32_1 = arith.constant 0 : i32
    return %arg1, %c0_i32, %c0_i32_0 : i32, i32, i32
  }
  func.func @transform_4(%arg0: i32, %arg1: i32) -> (i32, i32, i32) {
    %c0_i32 = arith.constant 0 : i32
    %c0_i32_0 = arith.constant 0 : i32
    %c0_i32_1 = arith.constant 0 : i32
    return %arg1, %c0_i32, %c0_i32_0 : i32, i32, i32
  }
  func.func @transform_5(%arg0: i32, %arg1: i32) -> (i32, i32, i32) {
    %c0_i32 = arith.constant 0 : i32
    %c0_i32_0 = arith.constant 0 : i32
    %c0_i32_1 = arith.constant 0 : i32
    return %arg1, %c0_i32, %c0_i32_0 : i32, i32, i32
  }
  func.func @transform_6(%arg0: i32, %arg1: i32) -> (i32, i32, i32) {
    %c0_i32 = arith.constant 0 : i32
    %c0_i32_0 = arith.constant 0 : i32
    %c0_i32_1 = arith.constant 0 : i32
    return %arg1, %c0_i32, %c0_i32_0 : i32, i32, i32
  }
  func.func @transform_7(%arg0: i32, %arg1: i32) -> (i32, i32, i32) {
    %c0_i32 = arith.constant 0 : i32
    %c0_i32_0 = arith.constant 0 : i32
    %c0_i32_1 = arith.constant 0 : i32
    return %arg1, %c0_i32, %c0_i32_0 : i32, i32, i32
  }
  func.func @transform_8(%arg0: i32, %arg1: i32) -> (i32, i32, i32) {
    %c0_i32 = arith.constant 0 : i32
    %c0_i32_0 = arith.constant 0 : i32
    %c0_i32_1 = arith.constant 0 : i32
    return %arg1, %c0_i32, %c0_i32_0 : i32, i32, i32
  }
  func.func @transform_9(%arg0: i32, %arg1: i32) -> (i32, i32, i32) {
    %c0_i32 = arith.constant 0 : i32
    %c0_i32_0 = arith.constant 0 : i32
    %c0_i32_1 = arith.constant 0 : i32
    return %arg1, %c0_i32, %c0_i32_0 : i32, i32, i32
  }
  func.func @transform_10(%arg0: i32, %arg1: i32) -> (i32, i32, i32) {
    %c0_i32 = arith.constant 0 : i32
    %c0_i32_0 = arith.constant 0 : i32
    %c0_i32_1 = arith.constant 0 : i32
    return %arg1, %c0_i32, %c0_i32_0 : i32, i32, i32
  }
  func.func @transform_11(%arg0: i32, %arg1: i32) -> (i32, i32, i32) {
    %c0_i32 = arith.constant 0 : i32
    %c0_i32_0 = arith.constant 0 : i32
    %c0_i32_1 = arith.constant 0 : i32
    return %arg1, %c0_i32, %c0_i32_0 : i32, i32, i32
  }
  func.func @transform_12(%arg0: i32, %arg1: i32) -> (i32, i32, i32) {
    %c0_i32 = arith.constant 0 : i32
    %c0_i32_0 = arith.constant 0 : i32
    %c0_i32_1 = arith.constant 0 : i32
    return %arg1, %c0_i32, %c0_i32_0 : i32, i32, i32
  }
  func.func @transform_13(%arg0: i32, %arg1: i32) -> (i32, i32, i32) {
    %c0_i32 = arith.constant 0 : i32
    %c0_i32_0 = arith.constant 0 : i32
    %c0_i32_1 = arith.constant 0 : i32
    return %arg0, %c0_i32, %c0_i32_0 : i32, i32, i32
  }
}

</mosaic_0001>

<llo_original>
// kernel: clip_feature_extract.5
$region0: #{clip_feature_extract.5}
  #allocation0 [shape = 'u32[]', space=smem, size = 0x4, offset = 0x4, fixed_abs, tag = 'smem constant byte address 0x4 - core index']
  #allocation1 [shape = 'u32[72,128]{1,0:T(1,128)}', space=vmem, size = 0x9000, scoped, tag = 'internal scratch']
  %s0 = inlined_call_operand.vmem [shape: bf16[2,17,192], index: 0, kind: input, shape index: {}]
  %s1 = inlined_call_operand.vmem [shape: bf16[192,64], index: 1, kind: input, shape index: {}]
  %s2 = inlined_call_operand.vmem [shape: bf16[1,1,64], index: 2, kind: input, shape index: {}]
  %s3 = inlined_call_operand.vmem [shape: bf16[1,17,64], index: 3, kind: input, shape index: {}]
  %s4 = inlined_call_operand.vmem [shape: bf16[1,1,64], index: 4, kind: input, shape index: {}]
  %s5 = inlined_call_operand.vmem [shape: bf16[1,1,64], index: 5, kind: input, shape index: {}]
  %s6 = inlined_call_operand.vmem [shape: bf16[2,17,64], index: 6, kind: output, shape index: {}]
  %s7 = sld [smem:[#allocation0]]
  $region57: #{clip_feature_extract.5} parent=0
    _
  %s9 = ssub.s32 1, %s7
  %s10 = scalar_select 0, %s9, %s7
  loop: start=0, step=1, limit=4
  $region2: #{clip_feature_extract.5} parent=0 // loop_pre_header
    _
  $region3: #{clip_feature_extract.5} parent=0 // loop_header
    %s12 = sphi 0, %s16
    %p13 = scmp.ge.s32.totalorder %s12, 4
    %s22 = sphi 0, %s24
    %s25 = sphi 0, %s22
    %s26 = sphi 0, %s25
    %s42 = sphi 0, %s26
    %s46 = sphi 0, %s46
    %s48 = sphi 0, %s46
    %s49 = sphi 0, %s48
    %s63 = sphi 0, %s49
    %s67 = sphi 0, %s67
    %s69 = sphi 0, %s67
    %s70 = sphi 0, %s69
    %s84 = sphi 0, %s70
    %s88 = sphi 0, %s88
    %s90 = sphi 0, %s88
    %s91 = sphi 0, %s90
    %s105 = sphi 0, %s91
    %s109 = sphi 0, %s109
    %s111 = sphi 0, %s109
    %s112 = sphi 0, %s111
    %s126 = sphi 0, %s112
    %s130 = sphi 0, %s130
    %s132 = sphi 0, %s130
    %s133 = sphi 0, %s132
    %s147 = sphi 0, %s133
    %s153 = sphi 0, %s155
    %s156 = sphi 0, %s153
    %s157 = sphi 0, %s156
    %s173 = sphi 0, %s157
  $region4: #{clip_feature_extract.5} parent=0 // loop_header_branch
    %15 = sbr.rel (%p13) target = $region8
  $region5: #{clip_feature_extract.5} parent=0 // loop_body
    %s17 = ssub.s32 %s12, 1
    %s18 = ssub.s32 %s12, 2
    %s19 = sadd.s32 %s12, 1
    %s20 = ssub.s32 %s12, %s19
    %p21 = scmp.eq.s32.totalorder %s20, 0
    %s23 = sadd.s32 %s22, 1
    %s24 = scalar_select %p21, %s22, %s23
    %p27 = pneg %p21
    %p28 = scmp.eq.s32.totalorder %s12, 1
    %p29 = por %p27, %p28
    %p30 = scmp.ne.s32.totalorder %s22, %s25
    %p31 = scmp.eq.s32.totalorder %s12, 0
    %p32 = por %p30, %p31
    %p33 = scmp.ne.s32.totalorder %s22, %s25
    %p34 = scmp.eq.s32.totalorder %s17, 1
    %p35 = por %p33, %p34
    %p36 = scmp.ne.s32.totalorder %s25, %s26
    %p37 = scmp.eq.s32.totalorder %s17, 0
    %p38 = por %p36, %p37
    %p39 = scmp.ne.s32.totalorder %s25, %s26
    %p40 = scmp.eq.s32.totalorder %s18, 1
    %p41 = por %p39, %p40
    %p43 = scmp.ne.s32.totalorder %s26, %s42
    %p44 = scmp.eq.s32.totalorder %s18, 0
    %p45 = por %p43, %p44
    %s47 = sadd.s32 %s46, 1
    %p50 = scmp.eq.s32.totalorder %s12, 1
    %p51 = scmp.ne.s32.totalorder %s46, %s48
    %p52 = scmp.eq.s32.totalorder %s12, 0
    %p53 = por %p51, %p52
    %p54 = scmp.ne.s32.totalorder %s46, %s48
    %p55 = scmp.eq.s32.totalorder %s17, 1
    %p56 = por %p54, %p55
    %p57 = scmp.ne.s32.totalorder %s48, %s49
    %p58 = scmp.eq.s32.totalorder %s17, 0
    %p59 = por %p57, %p58
    %p60 = scmp.ne.s32.totalorder %s48, %s49
    %p61 = scmp.eq.s32.totalorder %s18, 1
    %p62 = por %p60, %p61
    %p64 = scmp.ne.s32.totalorder %s49, %s63
    %p65 = scmp.eq.s32.totalorder %s18, 0
    %p66 = por %p64, %p65
    %s68 = sadd.s32 %s67, 1
    %p71 = scmp.eq.s32.totalorder %s12, 1
    %p72 = scmp.ne.s32.totalorder %s67, %s69
    %p73 = scmp.eq.s32.totalorder %s12, 0
    %p74 = por %p72, %p73
    %p75 = scmp.ne.s32.totalorder %s67, %s69
    %p76 = scmp.eq.s32.totalorder %s17, 1
    %p77 = por %p75, %p76
    %p78 = scmp.ne.s32.totalorder %s69, %s70
    %p79 = scmp.eq.s32.totalorder %s17, 0
    %p80 = por %p78, %p79
    %p81 = scmp.ne.s32.totalorder %s69, %s70
    %p82 = scmp.eq.s32.totalorder %s18, 1
    %p83 = por %p81, %p82
    %p85 = scmp.ne.s32.totalorder %s70, %s84
    %p86 = scmp.eq.s32.totalorder %s18, 0
    %p87 = por %p85, %p86
    %s89 = sadd.s32 %s88, 1
    %p92 = scmp.eq.s32.totalorder %s12, 1
    %p93 = scmp.ne.s32.totalorder %s88, %s90
    %p94 = scmp.eq.s32.totalorder %s12, 0
    %p95 = por %p93, %p94
    %p96 = scmp.ne.s32.totalorder %s88, %s90
    %p97 = scmp.eq.s32.totalorder %s17, 1
    %p98 = por %p96, %p97
    %p99 = scmp.ne.s32.totalorder %s90, %s91
    %p100 = scmp.eq.s32.totalorder %s17, 0
    %p101 = por %p99, %p100
    %p102 = scmp.ne.s32.totalorder %s90, %s91
    %p103 = scmp.eq.s32.totalorder %s18, 1
    %p104 = por %p102, %p103
    %p106 = scmp.ne.s32.totalorder %s91, %s105
    %p107 = scmp.eq.s32.totalorder %s18, 0
    %p108 = por %p106, %p107
    %s110 = sadd.s32 %s109, 1
    %p113 = scmp.eq.s32.totalorder %s12, 1
    %p114 = scmp.ne.s32.totalorder %s109, %s111
    %p115 = scmp.eq.s32.totalorder %s12, 0
    %p116 = por %p114, %p115
    %p117 = scmp.ne.s32.totalorder %s109, %s111
    %p118 = scmp.eq.s32.totalorder %s17, 1
    %p119 = por %p117, %p118
    %p120 = scmp.ne.s32.totalorder %s111, %s112
    %p121 = scmp.eq.s32.totalorder %s17, 0
    %p122 = por %p120, %p121
    %p123 = scmp.ne.s32.totalorder %s111, %s112
    %p124 = scmp.eq.s32.totalorder %s18, 1
    %p125 = por %p123, %p124
    %p127 = scmp.ne.s32.totalorder %s112, %s126
    %p128 = scmp.eq.s32.totalorder %s18, 0
    %p129 = por %p127, %p128
    %s131 = sadd.s32 %s130, 1
    %p134 = scmp.eq.s32.totalorder %s12, 1
    %p135 = scmp.ne.s32.totalorder %s130, %s132
    %p136 = scmp.eq.s32.totalorder %s12, 0
    %p137 = por %p135, %p136
    %p138 = scmp.ne.s32.totalorder %s130, %s132
    %p139 = scmp.eq.s32.totalorder %s17, 1
    %p140 = por %p138, %p139
    %p141 = scmp.ne.s32.totalorder %s132, %s133
    %p142 = scmp.eq.s32.totalorder %s17, 0
    %p143 = por %p141, %p142
    %p144 = scmp.ne.s32.totalorder %s132, %s133
    %p145 = scmp.eq.s32.totalorder %s18, 1
    %p146 = por %p144, %p145
    %p148 = scmp.ne.s32.totalorder %s133, %s147
    %p149 = scmp.eq.s32.totalorder %s18, 0
    %p150 = por %p148, %p149
    %s151 = ssub.s32 %s12, %s19
    %p152 = scmp.eq.s32.totalorder %s151, 0
    %s154 = sadd.s32 %s153, 1
    %s155 = scalar_select %p152, %s153, %s154
    %p158 = pneg %p152
    %p159 = scmp.eq.s32.totalorder %s12, 1
    %p160 = por %p158, %p159
    %p161 = scmp.ne.s32.totalorder %s153, %s156
    %p162 = scmp.eq.s32.totalorder %s12, 0
    %p163 = por %p161, %p162
    %p164 = scmp.ne.s32.totalorder %s153, %s156
    %p165 = scmp.eq.s32.totalorder %s17, 1
    %p166 = por %p164, %p165
    %p167 = scmp.ne.s32.totalorder %s156, %s157
    %p168 = scmp.eq.s32.totalorder %s17, 0
    %p169 = por %p167, %p168
    %p170 = scmp.ne.s32.totalorder %s156, %s157
    %p171 = scmp.eq.s32.totalorder %s18, 1
    %p172 = por %p170, %p171
    %p174 = scmp.ne.s32.totalorder %s157, %s173
    %p175 = scmp.eq.s32.totalorder %s18, 0
    %p176 = por %p174, %p175
    %p177 = scmp.le.s32.totalorder 1, %s12
    %p178 = scmp.lt.s32.totalorder %s12, 3
    %p179 = pnand %p177, %p178
    %p180 = pneg %p179
    // Predicated region
    $region9: #{clip_feature_extract.5} parent=5 // pred_check
      _
    $region10: #{clip_feature_extract.5} parent=5 // pred_check_branch
      %182 = sbr.rel (%p179) target = $region12
    $region11: #{clip_feature_extract.5} parent=5 // pred_region
      %s183 = ssub.s32 %s12, 1
      // Predicated region
      $region13: #{clip_feature_extract.5} parent=11 // pred_check
        %p184 = pneg %p59
      $region14: #{clip_feature_extract.5} parent=11 // pred_check_branch
        %186 = sbr.rel (%p184) target = $region16
      $region15: #{clip_feature_extract.5} parent=11 // pred_region
        _
      $region16: #{clip_feature_extract.5} parent=11 // pred_fallthru
        _
      // Predicated region
      $region17: #{clip_feature_extract.5} parent=11 // pred_check
        %p187 = pneg %p80
      $region18: #{clip_feature_extract.5} parent=11 // pred_check_branch
        %189 = sbr.rel (%p187) target = $region20
      $region19: #{clip_feature_extract.5} parent=11 // pred_region
        _
      $region20: #{clip_feature_extract.5} parent=11 // pred_fallthru
        _
      // Predicated region
      $region21: #{clip_feature_extract.5} parent=11 // pred_check
        %p190 = pneg %p101
      $region22: #{clip_feature_extract.5} parent=11 // pred_check_branch
        %192 = sbr.rel (%p190) target = $region24
      $region23: #{clip_feature_extract.5} parent=11 // pred_region
        _
      $region24: #{clip_feature_extract.5} parent=11 // pred_fallthru
        _
      // Predicated region
      $region25: #{clip_feature_extract.5} parent=11 // pred_check
        %p193 = pneg %p122
      $region26: #{clip_feature_extract.5} parent=11 // pred_check_branch
        %195 = sbr.rel (%p193) target = $region28
      $region27: #{clip_feature_extract.5} parent=11 // pred_region
        _
      $region28: #{clip_feature_extract.5} parent=11 // pred_fallthru
        _
      // Predicated region
      $region29: #{clip_feature_extract.5} parent=11 // pred_check
        %p196 = pneg %p143
      $region30: #{clip_feature_extract.5} parent=11 // pred_check_branch
        %198 = sbr.rel (%p196) target = $region32
      $region31: #{clip_feature_extract.5} parent=11 // pred_region
        _
      $region32: #{clip_feature_extract.5} parent=11 // pred_fallthru
        _
    $region12: #{clip_feature_extract.5} parent=5 // pred_fallthru
      _
    %p199 = scmp.lt.s32.totalorder %s12, 2
    // Predicated region
    $region33: #{clip_feature_extract.5} parent=5 // pred_check
      %p200 = pneg %p199
    $region34: #{clip_feature_extract.5} parent=5 // pred_check_branch
      %202 = sbr.rel (%p200) target = $region36
    $region35: #{clip_feature_extract.5} parent=5 // pred_region
      // Predicated region
      $region37: #{clip_feature_extract.5} parent=35 // pred_check
        %p203 = pneg %p32
      $region38: #{clip_feature_extract.5} parent=35 // pred_check_branch
        %205 = sbr.rel (%p203) target = $region40
      $region39: #{clip_feature_extract.5} parent=35 // pred_region
        %p206 = scmp.lt.s32.totalorder %s12, 1
        %s207 = scalar_select %p206, %s12, 1
        %s208 = smul.addr %s207, 6
        %s209 = smul.addr %s208, 4
        %s210 = scalar_lea.vmem %s0, %s209
      $region40: #{clip_feature_extract.5} parent=35 // pred_fallthru
        _
    $region36: #{clip_feature_extract.5} parent=5 // pred_fallthru
      _
    %p211 = scmp.le.s32.totalorder 1, %s12
    %p212 = scmp.lt.s32.totalorder %s12, 3
    %p213 = pnand %p211, %p212
    %p214 = pneg %p213
    // Predicated region
    $region41: #{clip_feature_extract.5} parent=5 // pred_check
      _
    $region42: #{clip_feature_extract.5} parent=5 // pred_check_branch
      %216 = sbr.rel (%p213) target = $region44
    $region43: #{clip_feature_extract.5} parent=5 // pred_region
      %s217 = ssub.s32 %s12, 1
      %p218 = scmp.lt.s32.totalorder %s17, 1
      %s219 = scalar_select %p218, %s17, 1
      %s220 = smul.addr %s219, 6
      %s221 = smul.addr %s220, 4
      %s222 = scalar_lea.vmem %s0, %s221
      %p223 = pneg %p38
      %p224 = pneg %p35
      %p225 = pneg %p59
      %p226 = pneg %p56
      %p227 = pneg %p80
      %p228 = pneg %p77
      %p229 = pneg %p101
      %p230 = pneg %p98
      %p231 = pneg %p122
      %p232 = pneg %p119
      %p233 = pneg %p143
      %p234 = pneg %p140
      %p235 = pneg %p169
      %p236 = pneg %p166
      %p237 = scmp.lt.s32.totalorder %s17, 1
      %s238 = scalar_select %p237, %s17, 1
      %s239 = smul.addr %s238, 3
      %s240 = smul.addr %s239, 4
      %s241 = scalar_lea.vmem %s6, %s240
      %p242 = scmp.lt.s32.totalorder %s17, 1
      %s243 = scalar_select %p242, %s17, 1
      %s244 = smul.addr %s243, 6
      %s245 = smul.addr %s244, 4
      %s246 = scalar_lea.vmem %s0, %s245
      %p247 = scmp.lt.s32.totalorder %s17, 1
      %s248 = scalar_select %p247, %s17, 1
      %s249 = smul.addr %s248, 3
      %s250 = smul.addr %s249, 4
      %s251 = scalar_lea.vmem %s6, %s250
      %v253 = vld [vmem:[%s246] sm:$0xff]
      %v254 = vld [vmem:[%s246 + $0x8] sm:$0xff]
      %v255 = vld [vmem:[%s246 + $0x10] sm:$0x11]
      %v256 = vld [vmem:[%s1] sm:$0xf]
      %v257 = vld [vmem:[%s1 + $0x4] sm:$0xf]
      %v258 = vld [vmem:[%s1 + $0x8] sm:$0xf]
      %v259 = vld [vmem:[%s1 + $0xc] sm:$0xf]
      %v260 = vld [vmem:[%s1 + $0x10] sm:$0xf]
      %v261 = vld [vmem:[%s1 + $0x14] sm:$0xf]
      %v262 = vld [vmem:[%s1 + $0x18] sm:$0xf]
      %v263 = vld [vmem:[%s1 + $0x1c] sm:$0xf]
      %v264 = vld [vmem:[%s1 + $0x20] sm:$0xf]
      %v265 = vld [vmem:[%s1 + $0x24] sm:$0xf]
      %v266 = vld [vmem:[%s1 + $0x28] sm:$0xf]
      %v267 = vld [vmem:[%s1 + $0x2c] sm:$0xf]
      %v268 = vld [vmem:[%s1 + $0x30] sm:$0xf]
      %v269 = vld [vmem:[%s1 + $0x34] sm:$0xf]
      %v270 = vld [vmem:[%s1 + $0x38] sm:$0xf]
      %v271 = vld [vmem:[%s1 + $0x3c] sm:$0xf]
      %v272 = vld [vmem:[%s1 + $0x40] sm:$0xf]
      %v273 = vld [vmem:[%s1 + $0x44] sm:$0xf]
      %v274 = vld [vmem:[%s1 + $0x48] sm:$0xf]
      %v275 = vld [vmem:[%s1 + $0x4c] sm:$0xf]
      %v276 = vld [vmem:[%s1 + $0x50] sm:$0xf]
      %v277 = vld [vmem:[%s1 + $0x54] sm:$0xf]
      %v278 = vld [vmem:[%s1 + $0x58] sm:$0xf]
      %v279 = vld [vmem:[%s1 + $0x5c] sm:$0xf]
      %v280 = vlaneseq
      %v281 = vshrl.u32 %v280, 7
      %v282 = vadd.s32 %v281, 8
      %v283 = vadd.s32 %v281, 16
      %vm284 = vcmp.eq.s32.totalorder %v281, 0
      %vm285 = vcmp.eq.s32.totalorder %v282, 0
      %vm286 = vcmp.eq.s32.totalorder %v283, 0
      %v287 = vld [vmem:[%s2] sm:$0x1]
      %v288 = vunpack.c.l.bf16 %v287
      %v289 = vperm.slane %v288, 0
      %v290 = vsel %vm284, %v289, 0.0
      %v291 = vsel %vm285, %v289, 0.0
      %v292 = vsel %vm286, %v289, 0.0
      %v296 = vunpack.c.l.b16 %v253
      %v297 = vunpack.c.h.b16 %v253
      %v298 = vunpack.c.l.b16 %v254
      %v299 = vunpack.c.h.b16 %v254
      %v300 = vunpack.c.l.b16 %v255
      %v301 = vunpack.c.h.b16 %v255
      %v302 = vpack.c.b16 %v298, %v296
      %v303 = vpack.c.b16 %v299, %v297
      %v304 = vpack.c.b16 %v300, %v300
      %v305 = vpack.c.b16 %v301, %v301
      %v332 = vunpack.c.l.b16 %v256
      %v333 = vunpack.c.l.b16 %v257
      %v334 = vunpack.c.l.b16 %v258
      %v335 = vunpack.c.l.b16 %v259
      %v336 = vunpack.c.l.b16 %v260
      %v337 = vunpack.c.l.b16 %v261
      %v338 = vunpack.c.l.b16 %v262
      %v339 = vunpack.c.l.b16 %v263
      %v340 = vunpack.c.l.b16 %v264
      %v341 = vunpack.c.l.b16 %v265
      %v342 = vunpack.c.l.b16 %v266
      %v343 = vunpack.c.l.b16 %v267
      %v344 = vunpack.c.l.b16 %v268
      %v345 = vunpack.c.l.b16 %v269
      %v346 = vunpack.c.l.b16 %v270
      %v347 = vunpack.c.l.b16 %v271
      %v348 = vunpack.c.l.b16 %v272
      %v349 = vunpack.c.l.b16 %v273
      %v350 = vunpack.c.l.b16 %v274
      %v351 = vunpack.c.l.b16 %v275
      %v352 = vunpack.c.l.b16 %v276
      %v353 = vunpack.c.l.b16 %v277
      %v354 = vunpack.c.l.b16 %v278
      %v355 = vunpack.c.l.b16 %v279
      %v356 = vpack.c.b16 %v333, %v332
      %v357 = vpack.c.b16 %v335, %v334
      %v358 = vpack.c.b16 %v337, %v336
      %v359 = vpack.c.b16 %v339, %v338
      %v360 = vpack.c.b16 %v341, %v340
      %v361 = vpack.c.b16 %v343, %v342
      %v362 = vpack.c.b16 %v345, %v344
      %v363 = vpack.c.b16 %v347, %v346
      %v364 = vpack.c.b16 %v349, %v348
      %v365 = vpack.c.b16 %v351, %v350
      %v366 = vpack.c.b16 %v353, %v352
      %v367 = vpack.c.b16 %v355, %v354
      %vm380 = vcmask 523264
      %v382 = vsel %vm380, %v303, 0
      %v385 = vsel %vm380, %v305, 0
      %387 = vmatpush.bf16.msra.mxu0 %v363
      %388 = vmatpush.bf16.msra.mxu0 %v362
      %389 = vmatpush.bf16.msra.mxu0 %v361
      %390 = vmatpush.bf16.msra.mxu0 %v360
      %391 = vmatpush.bf16.msra.mxu0 %v359
      %392 = vmatpush.bf16.msra.mxu0 %v358
      %393 = vmatpush.bf16.msra.mxu0 %v357
      %394 = vmatpush.bf16.msra.mxu0 %v356
      %395 = vmatmul.bf16.gmra.mxu0 %v302
      %v396 = vpop.f32.mrf.mxu0
      %v397 = vadd.f32 %v290, %v396
      %v398 = vpop.f32.mrf.mxu0
      %v399 = vadd.f32 %v291, %v398
      %400 = vmatmul.bf16.gmra.mxu0 %v304
      %v401 = vpop.f32.mrf.mxu0
      %v402 = vadd.f32 %v292, %v401
      %v403 = vpop.f32.mrf.mxu0
      %404 = vdwg.mxu0
      %405 = vmatpush.bf16.msra.mxu0 0
      %406 = vmatpush.bf16.msra.mxu0 0
      %407 = vmatpush.bf16.msra.mxu0 0
      %408 = vmatpush.bf16.msra.mxu0 0
      %409 = vmatpush.bf16.msra.mxu0 %v367
      %410 = vmatpush.bf16.msra.mxu0 %v366
      %411 = vmatpush.bf16.msra.mxu0 %v365
      %412 = vmatpush.bf16.msra.mxu0 %v364
      %413 = vmatmul.bf16.gmra.mxu0 %v382
      %v414 = vpop.f32.mrf.mxu0
      %v415 = vadd.f32 %v397, %v414
      %v416 = vpop.f32.mrf.mxu0
      %v417 = vadd.f32 %v399, %v416
      %418 = vmatmul.bf16.gmra.mxu0 %v385
      %v419 = vpop.f32.mrf.mxu0
      %v420 = vadd.f32 %v402, %v419
      %v421 = vpop.f32.mrf.mxu0
      %422 = vdwg.mxu0
      %v423 = vld [vmem:[%s3] sm:$0xf]
      %v424 = vld [vmem:[%s3 + $0x4] sm:$0xf]
      %v425 = vld [vmem:[%s3 + $0x8] sm:$0x1]
      %v426 = vunpack.c.l.bf16 %v423
      %v427 = vunpack.c.l.bf16 %v424
      %v428 = vunpack.c.l.bf16 %v425
      %v429 = vadd.f32 %v415, %v426
      %v430 = vadd.f32 %v417, %v427
      %v431 = vadd.f32 %v420, %v428
      %v432 = vld [vmem:[%s4] sm:$0x1]
      %v433 = vunpack.c.l.bf16 %v432
      %v434 = vld [vmem:[%s5] sm:$0x1]
      %v435 = vunpack.c.l.bf16 %v434
      %v436 = vsel %vm380, %v429, 0.0
      %437 = vadd.xlane.f32.xlu0 %v436
      %v438 = vpop.xlane.xlu0 %437
      %v439 = vsel %vm380, %v430, 0.0
      %440 = vadd.xlane.f32.xlu0 %v439
      %v441 = vpop.xlane.xlu0 %440
      %vm442 = vcmask 516096
      %v443 = vsel %vm442, %v431, 0.0
      %444 = vadd.xlane.f32.xlu0 %v443
      %v445 = vpop.xlane.xlu0 %444
      %v446 = vrcp.pop 64.0
      %v447 = vmul.f32 64.0, %v446
      %v448 = vsub.f32 1.0, %v447
      %v449 = vmul.f32 %v446, %v448
      %v450 = vadd.f32 %v446, %v449
      %vm451 = vweird.f32 %v446
      %v452 = vsel %vm451, %v446, %v450
      %v453 = vmul.f32 %v438, %v452
      %v454 = vmul.f32 %v441, %v452
      %v455 = vmul.f32 %v445, %v452
      %v456 = vsub.f32 %v429, %v453
      %v457 = vsub.f32 %v430, %v454
      %v458 = vsub.f32 %v431, %v455
      %v459 = vmul.f32 %v456, %v456
      %v460 = vmul.f32 %v457, %v457
      %v461 = vmul.f32 %v458, %v458
      %v462 = vsel %vm380, %v459, 0.0
      %463 = vadd.xlane.f32.xlu0 %v462
      %v464 = vpop.xlane.xlu0 %463
      %v465 = vsel %vm380, %v460, 0.0
      %466 = vadd.xlane.f32.xlu0 %v465
      %v467 = vpop.xlane.xlu0 %466
      %v468 = vsel %vm442, %v461, 0.0
      %469 = vadd.xlane.f32.xlu0 %v468
      %v470 = vpop.xlane.xlu0 %469
      %v471 = vmul.f32 %v464, %v452
      %v472 = vmul.f32 %v467, %v452
      %v473 = vmul.f32 %v470, %v452
      %v474 = vadd.f32 %v471, 1e-05
      %v475 = vadd.f32 %v472, 1e-05
      %v476 = vadd.f32 %v473, 1e-05
      %v477 = vrsqrt.pop %v474
      %v478 = vmul.f32 %v477, %v474
      %v479 = vmul.f32 %v478, %v477
      %v480 = vmul.f32 0.5, %v479
      %v481 = vsub.f32 1.5, %v480
      %v482 = vmul.f32 %v477, %v481
      %vm483 = vweird.f32 %v474
      %vm484 = vweird.f32 %v477
      %vm485 = vmor %vm483, %vm484
      %v486 = vsel %vm485, %v477, %v482
      %v487 = vrsqrt.pop %v475
      %v488 = vmul.f32 %v487, %v475
      %v489 = vmul.f32 %v488, %v487
      %v490 = vmul.f32 0.5, %v489
      %v491 = vsub.f32 1.5, %v490
      %v492 = vmul.f32 %v487, %v491
      %vm493 = vweird.f32 %v475
      %vm494 = vweird.f32 %v487
      %vm495 = vmor %vm493, %vm494
      %v496 = vsel %vm495, %v487, %v492
      %v497 = vrsqrt.pop %v476
      %v498 = vmul.f32 %v497, %v476
      %v499 = vmul.f32 %v498, %v497
      %v500 = vmul.f32 0.5, %v499
      %v501 = vsub.f32 1.5, %v500
      %v502 = vmul.f32 %v497, %v501
      %vm503 = vweird.f32 %v476
      %vm504 = vweird.f32 %v497
      %vm505 = vmor %vm503, %vm504
      %v506 = vsel %vm505, %v497, %v502
      %v507 = vmul.f32 %v456, %v486
      %v508 = vmul.f32 %v457, %v496
      %v509 = vmul.f32 %v458, %v506
      %v510 = vperm.slane %v433, 0
      %v511 = vmul.f32 %v507, %v510
      %v512 = vmul.f32 %v508, %v510
      %v513 = vmul.f32 %v509, %v510
      %v514 = vperm.slane %v435, 0
      %v515 = vadd.f32 %v511, %v514
      %v516 = vadd.f32 %v512, %v514
      %v517 = vadd.f32 %v513, %v514
      %v518 = vpack.c.bf16 %v515, %v515
      %v519 = vpack.c.bf16 %v516, %v516
      %v520 = vpack.c.bf16 %v517, %v517
      %vm521 = vcmask 519168
      %522 = vst.msk [vmem:[%s251] sm:$0xf] %vm521, %v518
      %523 = vst.msk [vmem:[%s251 + $0x4] sm:$0xf] %vm521, %v519
      %vm524 = vcmask 516096
      %vm525 = vsmask.f32 256
      %vm526 = vmand %vm524, %vm525
      %v527 = vld [vmem:[%s251 + $0x8] sm:$0x1]
      %v528 = vsel %vm526, %v520, %v527
      %529 = vst [vmem:[%s251 + $0x8] sm:$0x1] %v528
      %p530 = scmp.lt.s32.totalorder %s17, 1
      %s531 = scalar_select %p530, %s17, 1
      %s532 = smul.addr %s531, 3
      %s533 = smul.addr %s532, 4
      %s534 = scalar_lea.vmem %s6, %s533
      // Predicated region
      $region45: #{clip_feature_extract.5} parent=43 // pred_check
        %p535 = pneg %p166
      $region46: #{clip_feature_extract.5} parent=43 // pred_check_branch
        %537 = sbr.rel (%p535) target = $region48
      $region47: #{clip_feature_extract.5} parent=43 // pred_region
        _
      $region48: #{clip_feature_extract.5} parent=43 // pred_fallthru
        _
    $region44: #{clip_feature_extract.5} parent=5 // pred_fallthru
      _
    %p538 = scmp.le.s32.totalorder 2, %s12
    // Predicated region
    $region49: #{clip_feature_extract.5} parent=5 // pred_check
      %p539 = pneg %p538
    $region50: #{clip_feature_extract.5} parent=5 // pred_check_branch
      %541 = sbr.rel (%p539) target = $region52
    $region51: #{clip_feature_extract.5} parent=5 // pred_region
      %s542 = ssub.s32 %s12, 2
      // Predicated region
      $region53: #{clip_feature_extract.5} parent=51 // pred_check
        %p543 = pneg %p172
      $region54: #{clip_feature_extract.5} parent=51 // pred_check_branch
        %545 = sbr.rel (%p543) target = $region56
      $region55: #{clip_feature_extract.5} parent=51 // pred_region
        %p546 = scmp.lt.s32.totalorder %s18, 1
        %s547 = scalar_select %p546, %s18, 1
        %s548 = smul.addr %s547, 3
        %s549 = smul.addr %s548, 4
        %s550 = scalar_lea.vmem %s6, %s549
      $region56: #{clip_feature_extract.5} parent=51 // pred_fallthru
        _
    $region52: #{clip_feature_extract.5} parent=5 // pred_fallthru
      _
  $region6: #{clip_feature_extract.5} parent=0 // loop_footer
    %s16 = sadd.s32 1, %s12
  $region7: #{clip_feature_extract.5} parent=0 // loop_footer_branch
    %11 = sbr.rel target = $region3
  $region8: #{clip_feature_extract.5} parent=0 // loop_exit
    _

// kernel: clip_feature_extract.7
$region0: #{clip_feature_extract.7}
  #allocation0 [shape = 'u32[]', space=smem, size = 0x4, offset = 0x4, fixed_abs, tag = 'smem constant byte address 0x4 - core index']
  #allocation1 [shape = 'u32[72,128]{1,0:T(1,128)}', space=vmem, size = 0x9000, scoped, tag = 'internal scratch']
  %s0 = inlined_call_operand.vmem [shape: bf16[2,64], index: 0, kind: input, shape index: {}]
  %s1 = inlined_call_operand.vmem [shape: bf16[1,64], index: 1, kind: input, shape index: {}]
  %s2 = inlined_call_operand.vmem [shape: bf16[1,64], index: 2, kind: input, shape index: {}]
  %s3 = inlined_call_operand.vmem [shape: bf16[64,32], index: 3, kind: input, shape index: {}]
  %s4 = inlined_call_operand.hbm [shape: f32[2,32], index: 4, kind: output, shape index: {}]
  %s5 = sld [smem:[#allocation0]]
  $region26: #{clip_feature_extract.7} parent=0
    _
  %s7 = ssub.s32 1, %s5
  %s8 = scalar_select 0, %s7, %s5
  $region1: #{clip_feature_extract.7} parent=0
    #allocation2 [shape = 'u8[1024]{0}', space=vmem, size = 0x400, scoped, tag = 'output window, operand 0, single buffered']
    #allocation3 [shape = 's32[1]{0}', space=sflag, size = 0x4, scoped, tag = 'scoped memory for clip_feature_extract.7']
    %9 = vsyncpa [#allocation3], 0
    // Predicated region
    $region2: #{clip_feature_extract.7} parent=1 // pred_check
      _
    $region3: #{clip_feature_extract.7} parent=1 // pred_check_branch
      %11 = sbr.rel (0) target = $region5
    $region4: #{clip_feature_extract.7} parent=1 // pred_region
      _
    $region5: #{clip_feature_extract.7} parent=1 // pred_fallthru
      _
    // Predicated region
    $region6: #{clip_feature_extract.7} parent=1 // pred_check
      _
    $region7: #{clip_feature_extract.7} parent=1 // pred_check_branch
      %13 = sbr.rel (0) target = $region9
    $region8: #{clip_feature_extract.7} parent=1 // pred_region
      _
    $region9: #{clip_feature_extract.7} parent=1 // pred_fallthru
      _
    // Predicated region
    $region10: #{clip_feature_extract.7} parent=1 // pred_check
      _
    $region11: #{clip_feature_extract.7} parent=1 // pred_check_branch
      %15 = sbr.rel (0) target = $region13
    $region12: #{clip_feature_extract.7} parent=1 // pred_region
      _
    $region13: #{clip_feature_extract.7} parent=1 // pred_fallthru
      _
    // Predicated region
    $region14: #{clip_feature_extract.7} parent=1 // pred_check
      _
    $region15: #{clip_feature_extract.7} parent=1 // pred_check_branch
      %17 = sbr.rel (0) target = $region17
    $region16: #{clip_feature_extract.7} parent=1 // pred_region
      _
    $region17: #{clip_feature_extract.7} parent=1 // pred_fallthru
      _
    %v19 = vld [vmem:[%s0] sm:$0x1]
    %v20 = vunpack.c.l.bf16 %v19
    %v21 = vld [vmem:[%s1] sm:$0x1]
    %v22 = vunpack.c.l.bf16 %v21
    %v23 = vld [vmem:[%s2] sm:$0x1]
    %v24 = vunpack.c.l.bf16 %v23
    %vm25 = vcmask 517120
    %v26 = vsel %vm25, %v20, 0.0
    %27 = vadd.xlane.f32.xlu0 %v26
    %v28 = vpop.xlane.xlu0 %27
    %v29 = vrcp.pop 64.0
    %v30 = vmul.f32 64.0, %v29
    %v31 = vsub.f32 1.0, %v30
    %v32 = vmul.f32 %v29, %v31
    %v33 = vadd.f32 %v29, %v32
    %vm34 = vweird.f32 %v29
    %v35 = vsel %vm34, %v29, %v33
    %v36 = vmul.f32 %v28, %v35
    %v37 = vsub.f32 %v20, %v36
    %v38 = vmul.f32 %v37, %v37
    %v39 = vsel %vm25, %v38, 0.0
    %40 = vadd.xlane.f32.xlu0 %v39
    %v41 = vpop.xlane.xlu0 %40
    %v42 = vmul.f32 %v41, %v35
    %v43 = vadd.f32 %v42, 1e-05
    %v44 = vrsqrt.pop %v43
    %v45 = vmul.f32 %v44, %v43
    %v46 = vmul.f32 %v45, %v44
    %v47 = vmul.f32 0.5, %v46
    %v48 = vsub.f32 1.5, %v47
    %v49 = vmul.f32 %v44, %v48
    %vm50 = vweird.f32 %v43
    %vm51 = vweird.f32 %v44
    %vm52 = vmor %vm50, %vm51
    %v53 = vsel %vm52, %v44, %v49
    %v54 = vmul.f32 %v37, %v53
    %v55 = vperm.slane %v22, 0
    %v56 = vmul.f32 %v54, %v55
    %v57 = vperm.slane %v24, 0
    %v58 = vadd.f32 %v56, %v57
    %v59 = vpack.c.bf16 %v58, %v58
    %v60 = vld [vmem:[%s3] sm:$0xf]
    %v61 = vld [vmem:[%s3 + $0x4] sm:$0xf]
    %v62 = vld [vmem:[%s3 + $0x8] sm:$0xf]
    %v63 = vld [vmem:[%s3 + $0xc] sm:$0xf]
    %v64 = vld [vmem:[%s3 + $0x10] sm:$0xf]
    %v65 = vld [vmem:[%s3 + $0x14] sm:$0xf]
    %v66 = vld [vmem:[%s3 + $0x18] sm:$0xf]
    %v67 = vld [vmem:[%s3 + $0x1c] sm:$0xf]
    %v76 = vunpack.c.l.b16 %v60
    %v77 = vunpack.c.l.b16 %v61
    %v78 = vunpack.c.l.b16 %v62
    %v79 = vunpack.c.l.b16 %v63
    %v80 = vunpack.c.l.b16 %v64
    %v81 = vunpack.c.l.b16 %v65
    %v82 = vunpack.c.l.b16 %v66
    %v83 = vunpack.c.l.b16 %v67
    %v84 = vpack.c.b16 %v77, %v76
    %v85 = vpack.c.b16 %v79, %v78
    %v86 = vpack.c.b16 %v81, %v80
    %v87 = vpack.c.b16 %v83, %v82
    %vm92 = vcmask 523264
    %v94 = vsel %vm92, %v59, 0
    %96 = vmatpush.bf16.msra.mxu0 0
    %97 = vmatpush.bf16.msra.mxu0 0
    %98 = vmatpush.bf16.msra.mxu0 0
    %99 = vmatpush.bf16.msra.mxu0 0
    %100 = vmatpush.bf16.msra.mxu0 %v87
    %101 = vmatpush.bf16.msra.mxu0 %v86
    %102 = vmatpush.bf16.msra.mxu0 %v85
    %103 = vmatpush.bf16.msra.mxu0 %v84
    %104 = vmatmul.bf16.gmra.mxu0 %v94
    %v105 = vpop.f32.mrf.mxu0
    %v106 = vadd.f32 0.0, %v105
    %v107 = vpop.f32.mrf.mxu0
    %108 = vdwg.mxu0
    %v109 = vmul.f32 %v106, %v106
    %vm110 = vcmask 254976
    %v111 = vsel %vm110, %v109, 0.0
    %112 = vadd.xlane.f32.xlu0 %v111
    %v113 = vpop.xlane.xlu0 %112
    %v114 = vmax.f32 %v113, 1e-24
    %v115 = vrsqrt.pop %v114
    %v116 = vmul.f32 %v115, %v114
    %v117 = vmul.f32 %v116, %v115
    %v118 = vmul.f32 0.5, %v117
    %v119 = vsub.f32 1.5, %v118
    %v120 = vmul.f32 %v115, %v119
    %vm121 = vweird.f32 %v114
    %vm122 = vweird.f32 %v115
    %vm123 = vmor %vm121, %vm122
    %v124 = vsel %vm123, %v115, %v120
    %v125 = vmul.f32 %v106, %v124
    %126 = vst.msk [vmem:[#allocation2] sm:$0x3] %vm110, %v125
    // Predicated region
    $region18: #{clip_feature_extract.7} parent=1 // pred_check
      _
    $region19: #{clip_feature_extract.7} parent=1 // pred_check_branch
      %128 = sbr.rel (0) target = $region21
    $region20: #{clip_feature_extract.7} parent=1 // pred_region
      %130 = vsyncadd [#allocation3], 0
      %s132 = sshll.u32 [#allocation2], 4
      %s133 = int_to_ptr.vmem [resolvable:$true] %s132
      %s134 = sshll.u32 %s4, 4
      %s135 = int_to_ptr.hbm [resolvable:$true] %s134
      %137 = dma.vmem_to_hbm [thread:$0]  %s133, 32, %s135, [#allocation3]
    $region21: #{clip_feature_extract.7} parent=1 // pred_fallthru
      _
    // Predicated region
    $region22: #{clip_feature_extract.7} parent=1 // pred_check
      _
    $region23: #{clip_feature_extract.7} parent=1 // pred_check_branch
      %139 = sbr.rel (0) target = $region25
    $region24: #{clip_feature_extract.7} parent=1 // pred_region
      %141 = dma.done [#allocation3], 32
    $region25: #{clip_feature_extract.7} parent=1 // pred_fallthru
      _
    %142 = vsyncpa [#allocation3], 1

// kernel: clip_feature_extract.6
$region0: #{clip_feature_extract.6}
  #allocation0 [shape = 'u32[]', space=smem, size = 0x4, offset = 0x4, fixed_abs, tag = 'smem constant byte address 0x4 - core index']
  #allocation1 [shape = 'u32[72,128]{1,0:T(1,128)}', space=vmem, size = 0x9000, scoped, tag = 'internal scratch']
  #allocation2 [shape = 'f32[17,64]{1,0:T(8,128)}', space=vmem, size = 0x3000, scoped, tag = 'scratch operand']
  %s0 = inlined_call_operand.vmem [shape: bf16[2,17,64], index: 0, kind: input, shape index: {}]
  %s1 = inlined_call_operand.vmem [shape: bf16[2,1,64], index: 1, kind: input, shape index: {}]
  %s2 = inlined_call_operand.vmem [shape: bf16[2,1,64], index: 2, kind: input, shape index: {}]
  %s3 = inlined_call_operand.vmem [shape: bf16[2,64,192], index: 3, kind: input, shape index: {}]
  %s4 = inlined_call_operand.vmem [shape: bf16[2,1,192], index: 4, kind: input, shape index: {}]
  %s5 = inlined_call_operand.vmem [shape: bf16[2,64,64], index: 5, kind: input, shape index: {}]
  %s6 = inlined_call_operand.vmem [shape: bf16[2,1,64], index: 6, kind: input, shape index: {}]
  %s7 = inlined_call_operand.vmem [shape: bf16[2,1,64], index: 7, kind: input, shape index: {}]
  %s8 = inlined_call_operand.vmem [shape: bf16[2,1,64], index: 8, kind: input, shape index: {}]
  %s9 = inlined_call_operand.vmem [shape: bf16[2,64,256], index: 9, kind: input, shape index: {}]
  %s10 = inlined_call_operand.vmem [shape: bf16[2,1,256], index: 10, kind: input, shape index: {}]
  %s11 = inlined_call_operand.vmem [shape: bf16[2,256,64], index: 11, kind: input, shape index: {}]
  %s12 = inlined_call_operand.vmem [shape: bf16[2,1,64], index: 12, kind: input, shape index: {}]
  %s13 = inlined_call_operand.vmem [shape: bf16[2,17,64], index: 13, kind: output, shape index: {}]
  %s14 = sld [smem:[#allocation0]]
  $region93: #{clip_feature_extract.6} parent=0
    _
  %s16 = ssub.s32 1, %s14
  %s17 = scalar_select 0, %s16, %s14
  loop: start=0, step=1, limit=6
  $region2: #{clip_feature_extract.6} parent=0 // loop_pre_header
    _
  $region3: #{clip_feature_extract.6} parent=0 // loop_header
    %s19 = sphi 0, %s23
    %p20 = scmp.ge.s32.totalorder %s19, 6
    %s26 = sphi 0, %s38
    %s27 = sphi 0, %s34
    %s28 = sphi 0, %s26
    %s29 = sphi 0, %s27
    %s30 = sphi 0, %s28
    %s31 = sphi 0, %s29
    %s41 = sphi 0, %s43
    %s44 = sphi 0, %s41
    %s45 = sphi 0, %s44
    %s61 = sphi 0, %s45
    %s67 = sphi 0, %s69
    %s70 = sphi 0, %s67
    %s71 = sphi 0, %s70
    %s87 = sphi 0, %s71
    %s93 = sphi 0, %s95
    %s96 = sphi 0, %s93
    %s97 = sphi 0, %s96
    %s113 = sphi 0, %s97
    %s119 = sphi 0, %s121
    %s122 = sphi 0, %s119
    %s123 = sphi 0, %s122
    %s139 = sphi 0, %s123
    %s145 = sphi 0, %s147
    %s148 = sphi 0, %s145
    %s149 = sphi 0, %s148
    %s165 = sphi 0, %s149
    %s171 = sphi 0, %s173
    %s174 = sphi 0, %s171
    %s175 = sphi 0, %s174
    %s191 = sphi 0, %s175
    %s197 = sphi 0, %s199
    %s200 = sphi 0, %s197
    %s201 = sphi 0, %s200
    %s217 = sphi 0, %s201
    %s223 = sphi 0, %s225
    %s226 = sphi 0, %s223
    %s227 = sphi 0, %s226
    %s243 = sphi 0, %s227
    %s249 = sphi 0, %s251
    %s252 = sphi 0, %s249
    %s253 = sphi 0, %s252
    %s269 = sphi 0, %s253
    %s275 = sphi 0, %s277
    %s278 = sphi 0, %s275
    %s279 = sphi 0, %s278
    %s295 = sphi 0, %s279
    %s301 = sphi 0, %s303
    %s304 = sphi 0, %s301
    %s305 = sphi 0, %s304
    %s321 = sphi 0, %s305
    %s327 = sphi 0, %s329
    %s330 = sphi 0, %s327
    %s331 = sphi 0, %s330
    %s347 = sphi 0, %s331
    %s353 = sphi 0, %s355
    %s356 = sphi 0, %s353
    %s357 = sphi 0, %s356
    %s373 = sphi 0, %s357
    %s379 = sphi 0, %s381
    %s382 = sphi 0, %s379
    %s383 = sphi 0, %s382
    %s399 = sphi 0, %s383
  $region4: #{clip_feature_extract.6} parent=0 // loop_header_branch
    %22 = sbr.rel (%p20) target = $region8
  $region5: #{clip_feature_extract.6} parent=0 // loop_body
    %s24 = ssub.s32 %s19, 1
    %s25 = ssub.s32 %s19, 2
    %s32 = sadd.s32 1, %s27
    %p33 = scmp.ge.s32.totalorder %s32, 2
    %s34 = scalar_select %p33, 0, %s32
    %s35 = sadd.s32 1, %s26
    %s36 = scalar_select %p33, %s35, %s26
    %p37 = scmp.ge.s32.totalorder %s36, 2
    %s38 = scalar_select %p37, 0, %s36
    %s39 = ssub.s32 %s26, %s38
    %p40 = scmp.eq.s32.totalorder %s39, 0
    %s42 = sadd.s32 %s41, 1
    %s43 = scalar_select %p40, %s41, %s42
    %p46 = pneg %p40
    %p47 = scmp.eq.s32.totalorder %s19, 3
    %p48 = por %p46, %p47
    %p49 = scmp.ne.s32.totalorder %s41, %s44
    %p50 = scmp.eq.s32.totalorder %s19, 0
    %p51 = por %p49, %p50
    %p52 = scmp.ne.s32.totalorder %s41, %s44
    %p53 = scmp.eq.s32.totalorder %s24, 3
    %p54 = por %p52, %p53
    %p55 = scmp.ne.s32.totalorder %s44, %s45
    %p56 = scmp.eq.s32.totalorder %s24, 0
    %p57 = por %p55, %p56
    %p58 = scmp.ne.s32.totalorder %s44, %s45
    %p59 = scmp.eq.s32.totalorder %s25, 3
    %p60 = por %p58, %p59
    %p62 = scmp.ne.s32.totalorder %s45, %s61
    %p63 = scmp.eq.s32.totalorder %s25, 0
    %p64 = por %p62, %p63
    %s65 = ssub.s32 %s27, %s34
    %p66 = scmp.eq.s32.totalorder %s65, 0
    %s68 = sadd.s32 %s67, 1
    %s69 = scalar_select %p66, %s67, %s68
    %p72 = pneg %p66
    %p73 = scmp.eq.s32.totalorder %s19, 3
    %p74 = por %p72, %p73
    %p75 = scmp.ne.s32.totalorder %s67, %s70
    %p76 = scmp.eq.s32.totalorder %s19, 0
    %p77 = por %p75, %p76
    %p78 = scmp.ne.s32.totalorder %s67, %s70
    %p79 = scmp.eq.s32.totalorder %s24, 3
    %p80 = por %p78, %p79
    %p81 = scmp.ne.s32.totalorder %s70, %s71
    %p82 = scmp.eq.s32.totalorder %s24, 0
    %p83 = por %p81, %p82
    %p84 = scmp.ne.s32.totalorder %s70, %s71
    %p85 = scmp.eq.s32.totalorder %s25, 3
    %p86 = por %p84, %p85
    %p88 = scmp.ne.s32.totalorder %s71, %s87
    %p89 = scmp.eq.s32.totalorder %s25, 0
    %p90 = por %p88, %p89
    %s91 = ssub.s32 %s27, %s34
    %p92 = scmp.eq.s32.totalorder %s91, 0
    %s94 = sadd.s32 %s93, 1
    %s95 = scalar_select %p92, %s93, %s94
    %p98 = pneg %p92
    %p99 = scmp.eq.s32.totalorder %s19, 3
    %p100 = por %p98, %p99
    %p101 = scmp.ne.s32.totalorder %s93, %s96
    %p102 = scmp.eq.s32.totalorder %s19, 0
    %p103 = por %p101, %p102
    %p104 = scmp.ne.s32.totalorder %s93, %s96
    %p105 = scmp.eq.s32.totalorder %s24, 3
    %p106 = por %p104, %p105
    %p107 = scmp.ne.s32.totalorder %s96, %s97
    %p108 = scmp.eq.s32.totalorder %s24, 0
    %p109 = por %p107, %p108
    %p110 = scmp.ne.s32.totalorder %s96, %s97
    %p111 = scmp.eq.s32.totalorder %s25, 3
    %p112 = por %p110, %p111
    %p114 = scmp.ne.s32.totalorder %s97, %s113
    %p115 = scmp.eq.s32.totalorder %s25, 0
    %p116 = por %p114, %p115
    %s117 = ssub.s32 %s27, %s34
    %p118 = scmp.eq.s32.totalorder %s117, 0
    %s120 = sadd.s32 %s119, 1
    %s121 = scalar_select %p118, %s119, %s120
    %p124 = pneg %p118
    %p125 = scmp.eq.s32.totalorder %s19, 3
    %p126 = por %p124, %p125
    %p127 = scmp.ne.s32.totalorder %s119, %s122
    %p128 = scmp.eq.s32.totalorder %s19, 0
    %p129 = por %p127, %p128
    %p130 = scmp.ne.s32.totalorder %s119, %s122
    %p131 = scmp.eq.s32.totalorder %s24, 3
    %p132 = por %p130, %p131
    %p133 = scmp.ne.s32.totalorder %s122, %s123
    %p134 = scmp.eq.s32.totalorder %s24, 0
    %p135 = por %p133, %p134
    %p136 = scmp.ne.s32.totalorder %s122, %s123
    %p137 = scmp.eq.s32.totalorder %s25, 3
    %p138 = por %p136, %p137
    %p140 = scmp.ne.s32.totalorder %s123, %s139
    %p141 = scmp.eq.s32.totalorder %s25, 0
    %p142 = por %p140, %p141
    %s143 = ssub.s32 %s27, %s34
    %p144 = scmp.eq.s32.totalorder %s143, 0
    %s146 = sadd.s32 %s145, 1
    %s147 = scalar_select %p144, %s145, %s146
    %p150 = pneg %p144
    %p151 = scmp.eq.s32.totalorder %s19, 3
    %p152 = por %p150, %p151
    %p153 = scmp.ne.s32.totalorder %s145, %s148
    %p154 = scmp.eq.s32.totalorder %s19, 0
    %p155 = por %p153, %p154
    %p156 = scmp.ne.s32.totalorder %s145, %s148
    %p157 = scmp.eq.s32.totalorder %s24, 3
    %p158 = por %p156, %p157
    %p159 = scmp.ne.s32.totalorder %s148, %s149
    %p160 = scmp.eq.s32.totalorder %s24, 0
    %p161 = por %p159, %p160
    %p162 = scmp.ne.s32.totalorder %s148, %s149
    %p163 = scmp.eq.s32.totalorder %s25, 3
    %p164 = por %p162, %p163
    %p166 = scmp.ne.s32.totalorder %s149, %s165
    %p167 = scmp.eq.s32.totalorder %s25, 0
    %p168 = por %p166, %p167
    %s169 = ssub.s32 %s27, %s34
    %p170 = scmp.eq.s32.totalorder %s169, 0
    %s172 = sadd.s32 %s171, 1
    %s173 = scalar_select %p170, %s171, %s172
    %p176 = pneg %p170
    %p177 = scmp.eq.s32.totalorder %s19, 3
    %p178 = por %p176, %p177
    %p179 = scmp.ne.s32.totalorder %s171, %s174
    %p180 = scmp.eq.s32.totalorder %s19, 0
    %p181 = por %p179, %p180
    %p182 = scmp.ne.s32.totalorder %s171, %s174
    %p183 = scmp.eq.s32.totalorder %s24, 3
    %p184 = por %p182, %p183
    %p185 = scmp.ne.s32.totalorder %s174, %s175
    %p186 = scmp.eq.s32.totalorder %s24, 0
    %p187 = por %p185, %p186
    %p188 = scmp.ne.s32.totalorder %s174, %s175
    %p189 = scmp.eq.s32.totalorder %s25, 3
    %p190 = por %p188, %p189
    %p192 = scmp.ne.s32.totalorder %s175, %s191
    %p193 = scmp.eq.s32.totalorder %s25, 0
    %p194 = por %p192, %p193
    %s195 = ssub.s32 %s27, %s34
    %p196 = scmp.eq.s32.totalorder %s195, 0
    %s198 = sadd.s32 %s197, 1
    %s199 = scalar_select %p196, %s197, %s198
    %p202 = pneg %p196
    %p203 = scmp.eq.s32.totalorder %s19, 3
    %p204 = por %p202, %p203
    %p205 = scmp.ne.s32.totalorder %s197, %s200
    %p206 = scmp.eq.s32.totalorder %s19, 0
    %p207 = por %p205, %p206
    %p208 = scmp.ne.s32.totalorder %s197, %s200
    %p209 = scmp.eq.s32.totalorder %s24, 3
    %p210 = por %p208, %p209
    %p211 = scmp.ne.s32.totalorder %s200, %s201
    %p212 = scmp.eq.s32.totalorder %s24, 0
    %p213 = por %p211, %p212
    %p214 = scmp.ne.s32.totalorder %s200, %s201
    %p215 = scmp.eq.s32.totalorder %s25, 3
    %p216 = por %p214, %p215
    %p218 = scmp.ne.s32.totalorder %s201, %s217
    %p219 = scmp.eq.s32.totalorder %s25, 0
    %p220 = por %p218, %p219
    %s221 = ssub.s32 %s27, %s34
    %p222 = scmp.eq.s32.totalorder %s221, 0
    %s224 = sadd.s32 %s223, 1
    %s225 = scalar_select %p222, %s223, %s224
    %p228 = pneg %p222
    %p229 = scmp.eq.s32.totalorder %s19, 3
    %p230 = por %p228, %p229
    %p231 = scmp.ne.s32.totalorder %s223, %s226
    %p232 = scmp.eq.s32.totalorder %s19, 0
    %p233 = por %p231, %p232
    %p234 = scmp.ne.s32.totalorder %s223, %s226
    %p235 = scmp.eq.s32.totalorder %s24, 3
    %p236 = por %p234, %p235
    %p237 = scmp.ne.s32.totalorder %s226, %s227
    %p238 = scmp.eq.s32.totalorder %s24, 0
    %p239 = por %p237, %p238
    %p240 = scmp.ne.s32.totalorder %s226, %s227
    %p241 = scmp.eq.s32.totalorder %s25, 3
    %p242 = por %p240, %p241
    %p244 = scmp.ne.s32.totalorder %s227, %s243
    %p245 = scmp.eq.s32.totalorder %s25, 0
    %p246 = por %p244, %p245
    %s247 = ssub.s32 %s27, %s34
    %p248 = scmp.eq.s32.totalorder %s247, 0
    %s250 = sadd.s32 %s249, 1
    %s251 = scalar_select %p248, %s249, %s250
    %p254 = pneg %p248
    %p255 = scmp.eq.s32.totalorder %s19, 3
    %p256 = por %p254, %p255
    %p257 = scmp.ne.s32.totalorder %s249, %s252
    %p258 = scmp.eq.s32.totalorder %s19, 0
    %p259 = por %p257, %p258
    %p260 = scmp.ne.s32.totalorder %s249, %s252
    %p261 = scmp.eq.s32.totalorder %s24, 3
    %p262 = por %p260, %p261
    %p263 = scmp.ne.s32.totalorder %s252, %s253
    %p264 = scmp.eq.s32.totalorder %s24, 0
    %p265 = por %p263, %p264
    %p266 = scmp.ne.s32.totalorder %s252, %s253
    %p267 = scmp.eq.s32.totalorder %s25, 3
    %p268 = por %p266, %p267
    %p270 = scmp.ne.s32.totalorder %s253, %s269
    %p271 = scmp.eq.s32.totalorder %s25, 0
    %p272 = por %p270, %p271
    %s273 = ssub.s32 %s27, %s34
    %p274 = scmp.eq.s32.totalorder %s273, 0
    %s276 = sadd.s32 %s275, 1
    %s277 = scalar_select %p274, %s275, %s276
    %p280 = pneg %p274
    %p281 = scmp.eq.s32.totalorder %s19, 3
    %p282 = por %p280, %p281
    %p283 = scmp.ne.s32.totalorder %s275, %s278
    %p284 = scmp.eq.s32.totalorder %s19, 0
    %p285 = por %p283, %p284
    %p286 = scmp.ne.s32.totalorder %s275, %s278
    %p287 = scmp.eq.s32.totalorder %s24, 3
    %p288 = por %p286, %p287
    %p289 = scmp.ne.s32.totalorder %s278, %s279
    %p290 = scmp.eq.s32.totalorder %s24, 0
    %p291 = por %p289, %p290
    %p292 = scmp.ne.s32.totalorder %s278, %s279
    %p293 = scmp.eq.s32.totalorder %s25, 3
    %p294 = por %p292, %p293
    %p296 = scmp.ne.s32.totalorder %s279, %s295
    %p297 = scmp.eq.s32.totalorder %s25, 0
    %p298 = por %p296, %p297
    %s299 = ssub.s32 %s27, %s34
    %p300 = scmp.eq.s32.totalorder %s299, 0
    %s302 = sadd.s32 %s301, 1
    %s303 = scalar_select %p300, %s301, %s302
    %p306 = pneg %p300
    %p307 = scmp.eq.s32.totalorder %s19, 3
    %p308 = por %p306, %p307
    %p309 = scmp.ne.s32.totalorder %s301, %s304
    %p310 = scmp.eq.s32.totalorder %s19, 0
    %p311 = por %p309, %p310
    %p312 = scmp.ne.s32.totalorder %s301, %s304
    %p313 = scmp.eq.s32.totalorder %s24, 3
    %p314 = por %p312, %p313
    %p315 = scmp.ne.s32.totalorder %s304, %s305
    %p316 = scmp.eq.s32.totalorder %s24, 0
    %p317 = por %p315, %p316
    %p318 = scmp.ne.s32.totalorder %s304, %s305
    %p319 = scmp.eq.s32.totalorder %s25, 3
    %p320 = por %p318, %p319
    %p322 = scmp.ne.s32.totalorder %s305, %s321
    %p323 = scmp.eq.s32.totalorder %s25, 0
    %p324 = por %p322, %p323
    %s325 = ssub.s32 %s27, %s34
    %p326 = scmp.eq.s32.totalorder %s325, 0
    %s328 = sadd.s32 %s327, 1
    %s329 = scalar_select %p326, %s327, %s328
    %p332 = pneg %p326
    %p333 = scmp.eq.s32.totalorder %s19, 3
    %p334 = por %p332, %p333
    %p335 = scmp.ne.s32.totalorder %s327, %s330
    %p336 = scmp.eq.s32.totalorder %s19, 0
    %p337 = por %p335, %p336
    %p338 = scmp.ne.s32.totalorder %s327, %s330
    %p339 = scmp.eq.s32.totalorder %s24, 3
    %p340 = por %p338, %p339
    %p341 = scmp.ne.s32.totalorder %s330, %s331
    %p342 = scmp.eq.s32.totalorder %s24, 0
    %p343 = por %p341, %p342
    %p344 = scmp.ne.s32.totalorder %s330, %s331
    %p345 = scmp.eq.s32.totalorder %s25, 3
    %p346 = por %p344, %p345
    %p348 = scmp.ne.s32.totalorder %s331, %s347
    %p349 = scmp.eq.s32.totalorder %s25, 0
    %p350 = por %p348, %p349
    %s351 = ssub.s32 %s27, %s34
    %p352 = scmp.eq.s32.totalorder %s351, 0
    %s354 = sadd.s32 %s353, 1
    %s355 = scalar_select %p352, %s353, %s354
    %p358 = pneg %p352
    %p359 = scmp.eq.s32.totalorder %s19, 3
    %p360 = por %p358, %p359
    %p361 = scmp.ne.s32.totalorder %s353, %s356
    %p362 = scmp.eq.s32.totalorder %s19, 0
    %p363 = por %p361, %p362
    %p364 = scmp.ne.s32.totalorder %s353, %s356
    %p365 = scmp.eq.s32.totalorder %s24, 3
    %p366 = por %p364, %p365
    %p367 = scmp.ne.s32.totalorder %s356, %s357
    %p368 = scmp.eq.s32.totalorder %s24, 0
    %p369 = por %p367, %p368
    %p370 = scmp.ne.s32.totalorder %s356, %s357
    %p371 = scmp.eq.s32.totalorder %s25, 3
    %p372 = por %p370, %p371
    %p374 = scmp.ne.s32.totalorder %s357, %s373
    %p375 = scmp.eq.s32.totalorder %s25, 0
    %p376 = por %p374, %p375
    %s377 = ssub.s32 %s26, %s38
    %p378 = scmp.eq.s32.totalorder %s377, 0
    %s380 = sadd.s32 %s379, 1
    %s381 = scalar_select %p378, %s379, %s380
    %p384 = pneg %p378
    %p385 = scmp.eq.s32.totalorder %s19, 3
    %p386 = por %p384, %p385
    %p387 = scmp.ne.s32.totalorder %s379, %s382
    %p388 = scmp.eq.s32.totalorder %s19, 0
    %p389 = por %p387, %p388
    %p390 = scmp.ne.s32.totalorder %s379, %s382
    %p391 = scmp.eq.s32.totalorder %s24, 3
    %p392 = por %p390, %p391
    %p393 = scmp.ne.s32.totalorder %s382, %s383
    %p394 = scmp.eq.s32.totalorder %s24, 0
    %p395 = por %p393, %p394
    %p396 = scmp.ne.s32.totalorder %s382, %s383
    %p397 = scmp.eq.s32.totalorder %s25, 3
    %p398 = por %p396, %p397
    %p400 = scmp.ne.s32.totalorder %s383, %s399
    %p401 = scmp.eq.s32.totalorder %s25, 0
    %p402 = por %p400, %p401
    %p403 = scmp.le.s32.totalorder 1, %s19
    %p404 = scmp.lt.s32.totalorder %s19, 5
    %p405 = pnand %p403, %p404
    %p406 = pneg %p405
    // Predicated region
    $region9: #{clip_feature_extract.6} parent=5 // pred_check
      _
    $region10: #{clip_feature_extract.6} parent=5 // pred_check_branch
      %408 = sbr.rel (%p405) target = $region12
    $region11: #{clip_feature_extract.6} parent=5 // pred_region
      %s409 = ssub.s32 %s19, 1
    $region12: #{clip_feature_extract.6} parent=5 // pred_fallthru
      _
    %p410 = scmp.lt.s32.totalorder %s19, 4
    // Predicated region
    $region13: #{clip_feature_extract.6} parent=5 // pred_check
      %p411 = pneg %p410
    $region14: #{clip_feature_extract.6} parent=5 // pred_check_branch
      %413 = sbr.rel (%p411) target = $region16
    $region15: #{clip_feature_extract.6} parent=5 // pred_region
      // Predicated region
      $region17: #{clip_feature_extract.6} parent=15 // pred_check
        %p414 = pneg %p51
      $region18: #{clip_feature_extract.6} parent=15 // pred_check_branch
        %416 = sbr.rel (%p414) target = $region20
      $region19: #{clip_feature_extract.6} parent=15 // pred_region
        %p417 = scmp.lt.s32.totalorder %s26, 1
        %s418 = scalar_select %p417, %s26, 1
        %s419 = smul.addr %s418, 3
        %s420 = smul.addr %s419, 4
        %s421 = scalar_lea.vmem %s0, %s420
      $region20: #{clip_feature_extract.6} parent=15 // pred_fallthru
        _
      // Predicated region
      $region21: #{clip_feature_extract.6} parent=15 // pred_check
        %p422 = pneg %p77
      $region22: #{clip_feature_extract.6} parent=15 // pred_check_branch
        %424 = sbr.rel (%p422) target = $region24
      $region23: #{clip_feature_extract.6} parent=15 // pred_region
        %p425 = scmp.lt.s32.totalorder %s27, 1
        %s426 = scalar_select %p425, %s27, 1
        %s427 = scalar_lea.vmem %s1, %s426
      $region24: #{clip_feature_extract.6} parent=15 // pred_fallthru
        _
      // Predicated region
      $region25: #{clip_feature_extract.6} parent=15 // pred_check
        %p428 = pneg %p103
      $region26: #{clip_feature_extract.6} parent=15 // pred_check_branch
        %430 = sbr.rel (%p428) target = $region28
      $region27: #{clip_feature_extract.6} parent=15 // pred_region
        %p431 = scmp.lt.s32.totalorder %s27, 1
        %s432 = scalar_select %p431, %s27, 1
        %s433 = scalar_lea.vmem %s2, %s432
      $region28: #{clip_feature_extract.6} parent=15 // pred_fallthru
        _
      // Predicated region
      $region29: #{clip_feature_extract.6} parent=15 // pred_check
        %p434 = pneg %p129
      $region30: #{clip_feature_extract.6} parent=15 // pred_check_branch
        %436 = sbr.rel (%p434) target = $region32
      $region31: #{clip_feature_extract.6} parent=15 // pred_region
        %p437 = scmp.lt.s32.totalorder %s27, 1
        %s438 = scalar_select %p437, %s27, 1
        %s439 = smul.addr %s438, 16
        %s440 = smul.addr %s439, 4
        %s441 = scalar_lea.vmem %s3, %s440
      $region32: #{clip_feature_extract.6} parent=15 // pred_fallthru
        _
      // Predicated region
      $region33: #{clip_feature_extract.6} parent=15 // pred_check
        %p442 = pneg %p155
      $region34: #{clip_feature_extract.6} parent=15 // pred_check_branch
        %444 = sbr.rel (%p442) target = $region36
      $region35: #{clip_feature_extract.6} parent=15 // pred_region
        %p445 = scmp.lt.s32.totalorder %s27, 1
        %s446 = scalar_select %p445, %s27, 1
        %s447 = smul.addr %s446, 2
        %s448 = scalar_lea.vmem %s4, %s447
      $region36: #{clip_feature_extract.6} parent=15 // pred_fallthru
        _
      // Predicated region
      $region37: #{clip_feature_extract.6} parent=15 // pred_check
        %p449 = pneg %p181
      $region38: #{clip_feature_extract.6} parent=15 // pred_check_branch
        %451 = sbr.rel (%p449) target = $region40
      $region39: #{clip_feature_extract.6} parent=15 // pred_region
        %p452 = scmp.lt.s32.totalorder %s27, 1
        %s453 = scalar_select %p452, %s27, 1
        %s454 = smul.addr %s453, 8
        %s455 = smul.addr %s454, 4
        %s456 = scalar_lea.vmem %s5, %s455
      $region40: #{clip_feature_extract.6} parent=15 // pred_fallthru
        _
      // Predicated region
      $region41: #{clip_feature_extract.6} parent=15 // pred_check
        %p457 = pneg %p207
      $region42: #{clip_feature_extract.6} parent=15 // pred_check_branch
        %459 = sbr.rel (%p457) target = $region44
      $region43: #{clip_feature_extract.6} parent=15 // pred_region
        %p460 = scmp.lt.s32.totalorder %s27, 1
        %s461 = scalar_select %p460, %s27, 1
        %s462 = scalar_lea.vmem %s6, %s461
      $region44: #{clip_feature_extract.6} parent=15 // pred_fallthru
        _
      // Predicated region
      $region45: #{clip_feature_extract.6} parent=15 // pred_check
        %p463 = pneg %p233
      $region46: #{clip_feature_extract.6} parent=15 // pred_check_branch
        %465 = sbr.rel (%p463) target = $region48
      $region47: #{clip_feature_extract.6} parent=15 // pred_region
        %p466 = scmp.lt.s32.totalorder %s27, 1
        %s467 = scalar_select %p466, %s27, 1
        %s468 = scalar_lea.vmem %s7, %s467
      $region48: #{clip_feature_extract.6} parent=15 // pred_fallthru
        _
      // Predicated region
      $region49: #{clip_feature_extract.6} parent=15 // pred_check
        %p469 = pneg %p259
      $region50: #{clip_feature_extract.6} parent=15 // pred_check_branch
        %471 = sbr.rel (%p469) target = $region52
      $region51: #{clip_feature_extract.6} parent=15 // pred_region
        %p472 = scmp.lt.s32.totalorder %s27, 1
        %s473 = scalar_select %p472, %s27, 1
        %s474 = scalar_lea.vmem %s8, %s473
      $region52: #{clip_feature_extract.6} parent=15 // pred_fallthru
        _
      // Predicated region
      $region53: #{clip_feature_extract.6} parent=15 // pred_check
        %p475 = pneg %p285
      $region54: #{clip_feature_extract.6} parent=15 // pred_check_branch
        %477 = sbr.rel (%p475) target = $region56
      $region55: #{clip_feature_extract.6} parent=15 // pred_region
        %p478 = scmp.lt.s32.totalorder %s27, 1
        %s479 = scalar_select %p478, %s27, 1
        %s480 = smul.addr %s479, 16
        %s481 = smul.addr %s480, 4
        %s482 = scalar_lea.vmem %s9, %s481
      $region56: #{clip_feature_extract.6} parent=15 // pred_fallthru
        _
      // Predicated region
      $region57: #{clip_feature_extract.6} parent=15 // pred_check
        %p483 = pneg %p311
      $region58: #{clip_feature_extract.6} parent=15 // pred_check_branch
        %485 = sbr.rel (%p483) target = $region60
      $region59: #{clip_feature_extract.6} parent=15 // pred_region
        %p486 = scmp.lt.s32.totalorder %s27, 1
        %s487 = scalar_select %p486, %s27, 1
        %s488 = smul.addr %s487, 2
        %s489 = scalar_lea.vmem %s10, %s488
      $region60: #{clip_feature_extract.6} parent=15 // pred_fallthru
        _
      // Predicated region
      $region61: #{clip_feature_extract.6} parent=15 // pred_check
        %p490 = pneg %p337
      $region62: #{clip_feature_extract.6} parent=15 // pred_check_branch
        %492 = sbr.rel (%p490) target = $region64
      $region63: #{clip_feature_extract.6} parent=15 // pred_region
        %p493 = scmp.lt.s32.totalorder %s27, 1
        %s494 = scalar_select %p493, %s27, 1
        %s495 = smul.addr %s494, 32
        %s496 = smul.addr %s495, 4
        %s497 = scalar_lea.vmem %s11, %s496
      $region64: #{clip_feature_extract.6} parent=15 // pred_fallthru
        _
      // Predicated region
      $region65: #{clip_feature_extract.6} parent=15 // pred_check
        %p498 = pneg %p363
      $region66: #{clip_feature_extract.6} parent=15 // pred_check_branch
        %500 = sbr.rel (%p498) target = $region68
      $region67: #{clip_feature_extract.6} parent=15 // pred_region
        %p501 = scmp.lt.s32.totalorder %s27, 1
        %s502 = scalar_select %p501, %s27, 1
        %s503 = scalar_lea.vmem %s12, %s502
      $region68: #{clip_feature_extract.6} parent=15 // pred_fallthru
        _
    $region16: #{clip_feature_extract.6} parent=5 // pred_fallthru
      _
    %p504 = scmp.le.s32.totalorder 1, %s19
    %p505 = scmp.lt.s32.totalorder %s19, 5
    %p506 = pnand %p504, %p505
    %p507 = pneg %p506
    // Predicated region
    $region69: #{clip_feature_extract.6} parent=5 // pred_check
      _
    $region70: #{clip_feature_extract.6} parent=5 // pred_check_branch
      %509 = sbr.rel (%p506) target = $region72
    $region71: #{clip_feature_extract.6} parent=5 // pred_region
      %s510 = ssub.s32 %s19, 1
      %p511 = scmp.lt.s32.totalorder %s28, 1
      %s512 = scalar_select %p511, %s28, 1
      %s513 = smul.addr %s512, 3
      %s514 = smul.addr %s513, 4
      %s515 = scalar_lea.vmem %s0, %s514
      %p516 = pneg %p57
      %p517 = pneg %p54
      %p518 = scmp.lt.s32.totalorder %s29, 1
      %s519 = scalar_select %p518, %s29, 1
      %s520 = scalar_lea.vmem %s1, %s519
      %p521 = pneg %p83
      %p522 = pneg %p80
      %p523 = scmp.lt.s32.totalorder %s29, 1
      %s524 = scalar_select %p523, %s29, 1
      %s525 = scalar_lea.vmem %s2, %s524
      %p526 = pneg %p109
      %p527 = pneg %p106
      %p528 = scmp.lt.s32.totalorder %s29, 1
      %s529 = scalar_select %p528, %s29, 1
      %s530 = smul.addr %s529, 16
      %s531 = smul.addr %s530, 4
      %s532 = scalar_lea.vmem %s3, %s531
      %p533 = pneg %p135
      %p534 = pneg %p132
      %p535 = scmp.lt.s32.totalorder %s29, 1
      %s536 = scalar_select %p535, %s29, 1
      %s537 = smul.addr %s536, 2
      %s538 = scalar_lea.vmem %s4, %s537
      %p539 = pneg %p161
      %p540 = pneg %p158
      %p541 = scmp.lt.s32.totalorder %s29, 1
      %s542 = scalar_select %p541, %s29, 1
      %s543 = smul.addr %s542, 8
      %s544 = smul.addr %s543, 4
      %s545 = scalar_lea.vmem %s5, %s544
      %p546 = pneg %p187
      %p547 = pneg %p184
      %p548 = scmp.lt.s32.totalorder %s29, 1
      %s549 = scalar_select %p548, %s29, 1
      %s550 = scalar_lea.vmem %s6, %s549
      %p551 = pneg %p213
      %p552 = pneg %p210
      %p553 = scmp.lt.s32.totalorder %s29, 1
      %s554 = scalar_select %p553, %s29, 1
      %s555 = scalar_lea.vmem %s7, %s554
      %p556 = pneg %p239
      %p557 = pneg %p236
      %p558 = scmp.lt.s32.totalorder %s29, 1
      %s559 = scalar_select %p558, %s29, 1
      %s560 = scalar_lea.vmem %s8, %s559
      %p561 = pneg %p265
      %p562 = pneg %p262
      %p563 = scmp.lt.s32.totalorder %s29, 1
      %s564 = scalar_select %p563, %s29, 1
      %s565 = smul.addr %s564, 16
      %s566 = smul.addr %s565, 4
      %s567 = scalar_lea.vmem %s9, %s566
      %p568 = pneg %p291
      %p569 = pneg %p288
      %p570 = scmp.lt.s32.totalorder %s29, 1
      %s571 = scalar_select %p570, %s29, 1
      %s572 = smul.addr %s571, 2
      %s573 = scalar_lea.vmem %s10, %s572
      %p574 = pneg %p317
      %p575 = pneg %p314
      %p576 = scmp.lt.s32.totalorder %s29, 1
      %s577 = scalar_select %p576, %s29, 1
      %s578 = smul.addr %s577, 32
      %s579 = smul.addr %s578, 4
      %s580 = scalar_lea.vmem %s11, %s579
      %p581 = pneg %p343
      %p582 = pneg %p340
      %p583 = scmp.lt.s32.totalorder %s29, 1
      %s584 = scalar_select %p583, %s29, 1
      %s585 = scalar_lea.vmem %s12, %s584
      %p586 = pneg %p369
      %p587 = pneg %p366
      %p588 = pneg %p395
      %p589 = pneg %p392
      %p590 = scmp.lt.s32.totalorder %s28, 1
      %s591 = scalar_select %p590, %s28, 1
      %s592 = smul.addr %s591, 3
      %s593 = smul.addr %s592, 4
      %s594 = scalar_lea.vmem %s13, %s593
      %p595 = scmp.lt.s32.totalorder %s28, 1
      %s596 = scalar_select %p595, %s28, 1
      %s597 = smul.addr %s596, 3
      %s598 = smul.addr %s597, 4
      %s599 = scalar_lea.vmem %s0, %s598
      %p600 = scmp.lt.s32.totalorder %s29, 1
      %s601 = scalar_select %p600, %s29, 1
      %s602 = scalar_lea.vmem %s1, %s601
      %p603 = scmp.lt.s32.totalorder %s29, 1
      %s604 = scalar_select %p603, %s29, 1
      %s605 = scalar_lea.vmem %s2, %s604
      %p606 = scmp.lt.s32.totalorder %s29, 1
      %s607 = scalar_select %p606, %s29, 1
      %s608 = smul.addr %s607, 16
      %s609 = smul.addr %s608, 4
      %s610 = scalar_lea.vmem %s3, %s609
      %p611 = scmp.lt.s32.totalorder %s29, 1
      %s612 = scalar_select %p611, %s29, 1
      %s613 = smul.addr %s612, 2
      %s614 = scalar_lea.vmem %s4, %s613
      %p615 = scmp.lt.s32.totalorder %s29, 1
      %s616 = scalar_select %p615, %s29, 1
      %s617 = smul.addr %s616, 8
      %s618 = smul.addr %s617, 4
      %s619 = scalar_lea.vmem %s5, %s618
      %p620 = scmp.lt.s32.totalorder %s29, 1
      %s621 = scalar_select %p620, %s29, 1
      %s622 = scalar_lea.vmem %s6, %s621
      %p623 = scmp.lt.s32.totalorder %s29, 1
      %s624 = scalar_select %p623, %s29, 1
      %s625 = scalar_lea.vmem %s7, %s624
      %p626 = scmp.lt.s32.totalorder %s29, 1
      %s627 = scalar_select %p626, %s29, 1
      %s628 = scalar_lea.vmem %s8, %s627
      %p629 = scmp.lt.s32.totalorder %s29, 1
      %s630 = scalar_select %p629, %s29, 1
      %s631 = smul.addr %s630, 16
      %s632 = smul.addr %s631, 4
      %s633 = scalar_lea.vmem %s9, %s632
      %p634 = scmp.lt.s32.totalorder %s29, 1
      %s635 = scalar_select %p634, %s29, 1
      %s636 = smul.addr %s635, 2
      %s637 = scalar_lea.vmem %s10, %s636
      %p638 = scmp.lt.s32.totalorder %s29, 1
      %s639 = scalar_select %p638, %s29, 1
      %s640 = smul.addr %s639, 32
      %s641 = smul.addr %s640, 4
      %s642 = scalar_lea.vmem %s11, %s641
      %p643 = scmp.lt.s32.totalorder %s29, 1
      %s644 = scalar_select %p643, %s29, 1
      %s645 = scalar_lea.vmem %s12, %s644
      %p646 = scmp.lt.s32.totalorder %s28, 1
      %s647 = scalar_select %p646, %s28, 1
      %s648 = smul.addr %s647, 3
      %s649 = smul.addr %s648, 4
      %s650 = scalar_lea.vmem %s13, %s649
      %p652 = scmp.eq.s32.totalorder %s29, 0
      // Predicated region
      $region73: #{clip_feature_extract.6} parent=71 // pred_check
        %p653 = pneg %p652
      $region74: #{clip_feature_extract.6} parent=71 // pred_check_branch
        %655 = sbr.rel (%p653) target = $region76
      $region75: #{clip_feature_extract.6} parent=71 // pred_region
        %v656 = vld [vmem:[%s599] sm:$0xf]
        %v657 = vld [vmem:[%s599 + $0x4] sm:$0xf]
        %v658 = vld [vmem:[%s599 + $0x8] sm:$0x1]
        %v659 = vunpack.c.l.bf16 %v656
        %v660 = vunpack.c.l.bf16 %v657
        %v661 = vunpack.c.l.bf16 %v658
        %vm662 = vcmask 523264
        %663 = vst.msk [vmem:[#allocation2] sm:$0xff] %vm662, %v659
        %664 = vst.msk [vmem:[#allocation2 + $0x8] sm:$0xff] %vm662, %v660
        %vm665 = vcmask 516096
        %666 = vst.msk [vmem:[#allocation2 + $0x10] sm:$0x1] %vm665, %v661
      $region76: #{clip_feature_extract.6} parent=71 // pred_fallthru
        _
      %v667 = vld [vmem:[#allocation2] sm:$0xff]
      %v668 = vld [vmem:[#allocation2 + $0x8] sm:$0xff]
      %v669 = vld [vmem:[#allocation2 + $0x10] sm:$0x1]
      %v670 = vld [vmem:[%s602] sm:$0x1]
      %v671 = vunpack.c.l.bf16 %v670
      %v672 = vld [vmem:[%s605] sm:$0x1]
      %v673 = vunpack.c.l.bf16 %v672
      %vm674 = vcmask 523264
      %v675 = vsel %vm674, %v667, 0.0
      %676 = vadd.xlane.f32.xlu0 %v675
      %v677 = vpop.xlane.xlu0 %676
      %v678 = vsel %vm674, %v668, 0.0
      %679 = vadd.xlane.f32.xlu0 %v678
      %v680 = vpop.xlane.xlu0 %679
      %vm681 = vcmask 516096
      %v682 = vsel %vm681, %v669, 0.0
      %683 = vadd.xlane.f32.xlu0 %v682
      %v684 = vpop.xlane.xlu0 %683
      %v685 = vrcp.pop 64.0
      %v686 = vmul.f32 64.0, %v685
      %v687 = vsub.f32 1.0, %v686
      %v688 = vmul.f32 %v685, %v687
      %v689 = vadd.f32 %v685, %v688
      %vm690 = vweird.f32 %v685
      %v691 = vsel %vm690, %v685, %v689
      %v692 = vmul.f32 %v677, %v691
      %v693 = vmul.f32 %v680, %v691
      %v694 = vmul.f32 %v684, %v691
      %v695 = vsub.f32 %v667, %v692
      %v696 = vsub.f32 %v668, %v693
      %v697 = vsub.f32 %v669, %v694
      %v698 = vmul.f32 %v695, %v695
      %v699 = vmul.f32 %v696, %v696
      %v700 = vmul.f32 %v697, %v697
      %v701 = vsel %vm674, %v698, 0.0
      %702 = vadd.xlane.f32.xlu0 %v701
      %v703 = vpop.xlane.xlu0 %702
      %v704 = vsel %vm674, %v699, 0.0
      %705 = vadd.xlane.f32.xlu0 %v704
      %v706 = vpop.xlane.xlu0 %705
      %v707 = vsel %vm681, %v700, 0.0
      %708 = vadd.xlane.f32.xlu0 %v707
      %v709 = vpop.xlane.xlu0 %708
      %v710 = vmul.f32 %v703, %v691
      %v711 = vmul.f32 %v706, %v691
      %v712 = vmul.f32 %v709, %v691
      %v713 = vadd.f32 %v710, 1e-05
      %v714 = vadd.f32 %v711, 1e-05
      %v715 = vadd.f32 %v712, 1e-05
      %v716 = vrsqrt.pop %v713
      %v717 = vmul.f32 %v716, %v713
      %v718 = vmul.f32 %v717, %v716
      %v719 = vmul.f32 0.5, %v718
      %v720 = vsub.f32 1.5, %v719
      %v721 = vmul.f32 %v716, %v720
      %vm722 = vweird.f32 %v713
      %vm723 = vweird.f32 %v716
      %vm724 = vmor %vm722, %vm723
      %v725 = vsel %vm724, %v716, %v721
      %v726 = vrsqrt.pop %v714
      %v727 = vmul.f32 %v726, %v714
      %v728 = vmul.f32 %v727, %v726
      %v729 = vmul.f32 0.5, %v728
      %v730 = vsub.f32 1.5, %v729
      %v731 = vmul.f32 %v726, %v730
      %vm732 = vweird.f32 %v714
      %vm733 = vweird.f32 %v726
      %vm734 = vmor %vm732, %vm733
      %v735 = vsel %vm734, %v726, %v731
      %v736 = vrsqrt.pop %v715
      %v737 = vmul.f32 %v736, %v715
      %v738 = vmul.f32 %v737, %v736
      %v739 = vmul.f32 0.5, %v738
      %v740 = vsub.f32 1.5, %v739
      %v741 = vmul.f32 %v736, %v740
      %vm742 = vweird.f32 %v715
      %vm743 = vweird.f32 %v736
      %vm744 = vmor %vm742, %vm743
      %v745 = vsel %vm744, %v736, %v741
      %v746 = vmul.f32 %v695, %v725
      %v747 = vmul.f32 %v696, %v735
      %v748 = vmul.f32 %v697, %v745
      %v749 = vperm.slane %v671, 0
      %v750 = vmul.f32 %v746, %v749
      %v751 = vmul.f32 %v747, %v749
      %v752 = vmul.f32 %v748, %v749
      %v753 = vperm.slane %v673, 0
      %v754 = vadd.f32 %v750, %v753
      %v755 = vadd.f32 %v751, %v753
      %v756 = vadd.f32 %v752, %v753
      %v757 = vpack.c.bf16 %v755, %v754
      %v758 = vpack.c.bf16 %v756, %v756
      %v759 = vld [vmem:[%s610] sm:$0xff]
      %v760 = vld [vmem:[%s610 + $0x8] sm:$0xff]
      %v761 = vld [vmem:[%s610 + $0x10] sm:$0xff]
      %v762 = vld [vmem:[%s610 + $0x18] sm:$0xff]
      %v763 = vld [vmem:[%s610 + $0x20] sm:$0xff]
      %v764 = vld [vmem:[%s610 + $0x28] sm:$0xff]
      %v765 = vld [vmem:[%s610 + $0x30] sm:$0xff]
      %v766 = vld [vmem:[%s610 + $0x38] sm:$0xff]
      %v767 = vld [vmem:[%s614] sm:$0x3]
      %v768 = vunpack.c.l.bf16 %v767
      %v770 = vperm.slane %v768, 0
      %v771 = vperm.slane %v768, 2
      %v774 = vperm.slane %v770, 0
      %v775 = vperm.slane %v771, 0
      %v784 = vunpack.c.l.b16 %v759
      %v785 = vunpack.c.h.b16 %v759
      %v786 = vunpack.c.l.b16 %v760
      %v787 = vunpack.c.h.b16 %v760
      %v788 = vunpack.c.l.b16 %v761
      %v789 = vunpack.c.h.b16 %v761
      %v790 = vunpack.c.l.b16 %v762
      %v791 = vunpack.c.h.b16 %v762
      %v792 = vunpack.c.l.b16 %v763
      %v793 = vunpack.c.h.b16 %v763
      %v794 = vunpack.c.l.b16 %v764
      %v795 = vunpack.c.h.b16 %v764
      %v796 = vunpack.c.l.b16 %v765
      %v797 = vunpack.c.h.b16 %v765
      %v798 = vunpack.c.l.b16 %v766
      %v799 = vunpack.c.h.b16 %v766
      %v800 = vpack.c.b16 %v786, %v784
      %v801 = vpack.c.b16 %v787, %v785
      %v802 = vpack.c.b16 %v790, %v788
      %v803 = vpack.c.b16 %v791, %v789
      %v804 = vpack.c.b16 %v794, %v792
      %v805 = vpack.c.b16 %v795, %v793
      %v806 = vpack.c.b16 %v798, %v796
      %v807 = vpack.c.b16 %v799, %v797
      %v817 = vsel %vm674, %v757, 0
      %v820 = vsel %vm674, %v758, 0
      %822 = vmatpush.bf16.msra.mxu0 0
      %823 = vmatpush.bf16.msra.mxu0 0
      %824 = vmatpush.bf16.msra.mxu0 0
      %825 = vmatpush.bf16.msra.mxu0 0
      %826 = vmatpush.bf16.msra.mxu0 %v806
      %827 = vmatpush.bf16.msra.mxu0 %v804
      %828 = vmatpush.bf16.msra.mxu0 %v802
      %829 = vmatpush.bf16.msra.mxu0 %v800
      %830 = vmatmul.bf16.gmra.mxu0 %v817
      %v831 = vpop.f32.mrf.mxu0
      %v832 = vadd.f32 %v774, %v831
      %v833 = vpop.f32.mrf.mxu0
      %v834 = vadd.f32 %v774, %v833
      %835 = vmatmul.bf16.gmra.mxu0 %v820
      %v836 = vpop.f32.mrf.mxu0
      %v837 = vadd.f32 %v774, %v836
      %v838 = vpop.f32.mrf.mxu0
      %839 = vdwg.mxu0
      %840 = vmatpush.bf16.msra.mxu0 0
      %841 = vmatpush.bf16.msra.mxu0 0
      %842 = vmatpush.bf16.msra.mxu0 0
      %843 = vmatpush.bf16.msra.mxu0 0
      %844 = vmatpush.bf16.msra.mxu0 %v807
      %845 = vmatpush.bf16.msra.mxu0 %v805
      %846 = vmatpush.bf16.msra.mxu0 %v803
      %847 = vmatpush.bf16.msra.mxu0 %v801
      %848 = vmatmul.bf16.gmra.mxu0 %v817
      %v849 = vpop.f32.mrf.mxu0
      %v850 = vadd.f32 %v775, %v849
      %v851 = vpop.f32.mrf.mxu0
      %v852 = vadd.f32 %v775, %v851
      %853 = vmatmul.bf16.gmra.mxu0 %v820
      %v854 = vpop.f32.mrf.mxu0
      %v855 = vadd.f32 %v775, %v854
      %v856 = vpop.f32.mrf.mxu0
      %857 = vdwg.mxu0
      %v858 = vpack.c.bf16 %v834, %v832
      %v859 = vpack.c.bf16 %v837, %v837
      %862 = vrot.lane.b32.xlu0 %v858, 64
      %v863 = vpop.permute.xlu0 %862
      %864 = vrot.lane.b32.xlu0 %v859, 64
      %v865 = vpop.permute.xlu0 %864
      %vm866 = vcmask 130048
      %v868 = vsel %vm866, %v858, 0
      %v871 = vsel %vm866, %v859, 0
      %v874 = vsel %vm866, %v863, 0
      %v877 = vsel %vm866, %v865, 0
      %879 = vmatpush.bf16.xpose.msra.mxu0 0
      %880 = vmatpush.bf16.xpose.msra.mxu0 0
      %881 = vmatpush.bf16.xpose.msra.mxu0 0
      %882 = vmatpush.bf16.xpose.msra.mxu0 0
      %883 = vmatpush.bf16.xpose.msra.mxu0 0
      %884 = vmatpush.bf16.xpose.msra.mxu0 0
      %885 = vmatpush.bf16.xpose.msra.mxu0 %v877
      %886 = vmatpush.bf16.xpose.msra.mxu0 %v874
      %887 = vmatmul.bf16.gmra.mxu0 %v868
      %v888 = vpop.f32.mrf.mxu0
      %v889 = vadd.f32 0.0, %v888
      %v890 = vpop.f32.mrf.mxu0
      %v891 = vadd.f32 0.0, %v890
      %892 = vmatmul.bf16.gmra.mxu0 %v871
      %v893 = vpop.f32.mrf.mxu0
      %v894 = vadd.f32 0.0, %v893
      %v895 = vpop.f32.mrf.mxu0
      %896 = vdwg.mxu0
      %vm897 = vcmask 138240
      %v898 = vsel %vm897, %v889, -inf
      %899 = vmax.xlane.f32.xlu0 %v898
      %v900 = vpop.xlane.xlu0 %899
      %v901 = vsel %vm897, %v891, -inf
      %902 = vmax.xlane.f32.xlu0 %v901
      %v903 = vpop.xlane.xlu0 %902
      %vm904 = vcmask 131072
      %v905 = vsel %vm904, %v894, -inf
      %906 = vmax.xlane.f32.xlu0 %v905
      %v907 = vpop.xlane.xlu0 %906
      %v908 = vsub.f32 %v889, %v900
      %v909 = vsub.f32 %v891, %v903
      %v910 = vsub.f32 %v894, %v907
      %v911 = vmul.f32 %v908, 1.442695
      %v912 = vpow.pop %v911
      %v913 = vmul.f32 %v909, 1.442695
      %v914 = vpow.pop %v913
      %v915 = vmul.f32 %v910, 1.442695
      %v916 = vpow.pop %v915
      %v917 = vsel %vm897, %v912, 0.0
      %918 = vadd.xlane.f32.xlu0 %v917
      %v919 = vpop.xlane.xlu0 %918
      %v920 = vsel %vm897, %v914, 0.0
      %921 = vadd.xlane.f32.xlu0 %v920
      %v922 = vpop.xlane.xlu0 %921
      %v923 = vsel %vm904, %v916, 0.0
      %924 = vadd.xlane.f32.xlu0 %v923
      %v925 = vpop.xlane.xlu0 %924
      %v926 = vrcp.pop %v919
      %v927 = vrcp.pop %v922
      %v928 = vrcp.pop %v925
      %v929 = vmul.f32 %v912, %v926
      %v930 = vmul.f32 %v914, %v927
      %v931 = vmul.f32 %v916, %v928
      %v932 = vpack.c.bf16 %v930, %v929
      %v933 = vpack.c.bf16 %v931, %v931
      %v934 = vpack.c.bf16 %v852, %v850
      %v935 = vpack.c.bf16 %v855, %v855
      %v937 = vsel %vm897, %v932, 0
      %v940 = vsel %vm897, %v933, 0
      %vm942 = vcmask 1040384
      %v943 = vsel 0, 4294967295, 65535
      %v944 = vsel %vm942, %v943, 0
      %v946 = vand.u32 %v935, %v944
      %948 = vmatpush.bf16.msra.mxu0 0
      %949 = vmatpush.bf16.msra.mxu0 0
      %950 = vmatpush.bf16.msra.mxu0 0
      %951 = vmatpush.bf16.msra.mxu0 0
      %952 = vmatpush.bf16.msra.mxu0 0
      %953 = vmatpush.bf16.msra.mxu0 0
      %954 = vmatpush.bf16.msra.mxu0 %v946
      %955 = vmatpush.bf16.msra.mxu0 %v934
      %956 = vmatmul.bf16.gmra.mxu0 %v937
      %v957 = vpop.f32.mrf.mxu0
      %v958 = vadd.f32 0.0, %v957
      %v959 = vpop.f32.mrf.mxu0
      %v960 = vadd.f32 0.0, %v959
      %961 = vmatmul.bf16.gmra.mxu0 %v940
      %v962 = vpop.f32.mrf.mxu0
      %v963 = vadd.f32 0.0, %v962
      %v964 = vpop.f32.mrf.mxu0
      %965 = vdwg.mxu0
      %966 = vrot.lane.b32.xlu0 %v858, 112
      %v967 = vpop.permute.xlu0 %966
      %968 = vrot.lane.b32.xlu0 %v859, 112
      %v969 = vpop.permute.xlu0 %968
      %970 = vrot.lane.b32.xlu0 %v858, 48
      %v971 = vpop.permute.xlu0 %970
      %972 = vrot.lane.b32.xlu0 %v859, 48
      %v973 = vpop.permute.xlu0 %972
      %v975 = vsel %vm866, %v967, 0
      %v978 = vsel %vm866, %v969, 0
      %v981 = vsel %vm866, %v971, 0
      %v984 = vsel %vm866, %v973, 0
      %986 = vmatpush.bf16.xpose.msra.mxu0 0
      %987 = vmatpush.bf16.xpose.msra.mxu0 0
      %988 = vmatpush.bf16.xpose.msra.mxu0 0
      %989 = vmatpush.bf16.xpose.msra.mxu0 0
      %990 = vmatpush.bf16.xpose.msra.mxu0 0
      %991 = vmatpush.bf16.xpose.msra.mxu0 0
      %992 = vmatpush.bf16.xpose.msra.mxu0 %v984
      %993 = vmatpush.bf16.xpose.msra.mxu0 %v981
      %994 = vmatmul.bf16.gmra.mxu0 %v975
      %v995 = vpop.f32.mrf.mxu0
      %v996 = vadd.f32 0.0, %v995
      %v997 = vpop.f32.mrf.mxu0
      %v998 = vadd.f32 0.0, %v997
      %999 = vmatmul.bf16.gmra.mxu0 %v978
      %v1000 = vpop.f32.mrf.mxu0
      %v1001 = vadd.f32 0.0, %v1000
      %v1002 = vpop.f32.mrf.mxu0
      %1003 = vdwg.mxu0
      %v1004 = vsel %vm897, %v996, -inf
      %1005 = vmax.xlane.f32.xlu0 %v1004
      %v1006 = vpop.xlane.xlu0 %1005
      %v1007 = vsel %vm897, %v998, -inf
      %1008 = vmax.xlane.f32.xlu0 %v1007
      %v1009 = vpop.xlane.xlu0 %1008
      %v1010 = vsel %vm904, %v1001, -inf
      %1011 = vmax.xlane.f32.xlu0 %v1010
      %v1012 = vpop.xlane.xlu0 %1011
      %v1013 = vsub.f32 %v996, %v1006
      %v1014 = vsub.f32 %v998, %v1009
      %v1015 = vsub.f32 %v1001, %v1012
      %v1016 = vmul.f32 %v1013, 1.442695
      %v1017 = vpow.pop %v1016
      %v1018 = vmul.f32 %v1014, 1.442695
      %v1019 = vpow.pop %v1018
      %v1020 = vmul.f32 %v1015, 1.442695
      %v1021 = vpow.pop %v1020
      %v1022 = vsel %vm897, %v1017, 0.0
      %1023 = vadd.xlane.f32.xlu0 %v1022
      %v1024 = vpop.xlane.xlu0 %1023
      %v1025 = vsel %vm897, %v1019, 0.0
      %1026 = vadd.xlane.f32.xlu0 %v1025
      %v1027 = vpop.xlane.xlu0 %1026
      %v1028 = vsel %vm904, %v1021, 0.0
      %1029 = vadd.xlane.f32.xlu0 %v1028
      %v1030 = vpop.xlane.xlu0 %1029
      %v1031 = vrcp.pop %v1024
      %v1032 = vrcp.pop %v1027
      %v1033 = vrcp.pop %v1030
      %v1034 = vmul.f32 %v1017, %v1031
      %v1035 = vmul.f32 %v1019, %v1032
      %v1036 = vmul.f32 %v1021, %v1033
      %v1037 = vpack.c.bf16 %v1035, %v1034
      %v1038 = vpack.c.bf16 %v1036, %v1036
      %1041 = vrot.lane.b32.xlu0 %v934, 112
      %v1042 = vpop.permute.xlu0 %1041
      %1043 = vrot.lane.b32.xlu0 %v935, 112
      %v1044 = vpop.permute.xlu0 %1043
      %v1047 = vsel %vm897, %v1037, 0
      %v1050 = vsel %vm897, %v1038, 0
      %v1053 = vand.u32 %v1044, %v944
      %1055 = vmatpush.bf16.msra.mxu0 0
      %1056 = vmatpush.bf16.msra.mxu0 0
      %1057 = vmatpush.bf16.msra.mxu0 0
      %1058 = vmatpush.bf16.msra.mxu0 0
      %1059 = vmatpush.bf16.msra.mxu0 0
      %1060 = vmatpush.bf16.msra.mxu0 0
      %1061 = vmatpush.bf16.msra.mxu0 %v1053
      %1062 = vmatpush.bf16.msra.mxu0 %v1042
      %1063 = vmatmul.bf16.gmra.mxu0 %v1047
      %v1064 = vpop.f32.mrf.mxu0
      %v1065 = vadd.f32 0.0, %v1064
      %v1066 = vpop.f32.mrf.mxu0
      %v1067 = vadd.f32 0.0, %v1066
      %1068 = vmatmul.bf16.gmra.mxu0 %v1050
      %v1069 = vpop.f32.mrf.mxu0
      %v1070 = vadd.f32 0.0, %v1069
      %v1071 = vpop.f32.mrf.mxu0
      %1072 = vdwg.mxu0
      %1073 = vrot.lane.b32.xlu0 %v858, 96
      %v1074 = vpop.permute.xlu0 %1073
      %1075 = vrot.lane.b32.xlu0 %v859, 96
      %v1076 = vpop.permute.xlu0 %1075
      %1077 = vrot.lane.b32.xlu0 %v858, 32
      %v1078 = vpop.permute.xlu0 %1077
      %1079 = vrot.lane.b32.xlu0 %v859, 32
      %v1080 = vpop.permute.xlu0 %1079
      %v1082 = vsel %vm866, %v1074, 0
      %v1085 = vsel %vm866, %v1076, 0
      %v1088 = vsel %vm866, %v1078, 0
      %v1091 = vsel %vm866, %v1080, 0
      %1093 = vmatpush.bf16.xpose.msra.mxu0 0
      %1094 = vmatpush.bf16.xpose.msra.mxu0 0
      %1095 = vmatpush.bf16.xpose.msra.mxu0 0
      %1096 = vmatpush.bf16.xpose.msra.mxu0 0
      %1097 = vmatpush.bf16.xpose.msra.mxu0 0
      %1098 = vmatpush.bf16.xpose.msra.mxu0 0
      %1099 = vmatpush.bf16.xpose.msra.mxu0 %v1091
      %1100 = vmatpush.bf16.xpose.msra.mxu0 %v1088
      %1101 = vmatmul.bf16.gmra.mxu0 %v1082
      %v1102 = vpop.f32.mrf.mxu0
      %v1103 = vadd.f32 0.0, %v1102
      %v1104 = vpop.f32.mrf.mxu0
      %v1105 = vadd.f32 0.0, %v1104
      %1106 = vmatmul.bf16.gmra.mxu0 %v1085
      %v1107 = vpop.f32.mrf.mxu0
      %v1108 = vadd.f32 0.0, %v1107
      %v1109 = vpop.f32.mrf.mxu0
      %1110 = vdwg.mxu0
      %v1111 = vsel %vm897, %v1103, -inf
      %1112 = vmax.xlane.f32.xlu0 %v1111
      %v1113 = vpop.xlane.xlu0 %1112
      %v1114 = vsel %vm897, %v1105, -inf
      %1115 = vmax.xlane.f32.xlu0 %v1114
      %v1116 = vpop.xlane.xlu0 %1115
      %v1117 = vsel %vm904, %v1108, -inf
      %1118 = vmax.xlane.f32.xlu0 %v1117
      %v1119 = vpop.xlane.xlu0 %1118
      %v1120 = vsub.f32 %v1103, %v1113
      %v1121 = vsub.f32 %v1105, %v1116
      %v1122 = vsub.f32 %v1108, %v1119
      %v1123 = vmul.f32 %v1120, 1.442695
      %v1124 = vpow.pop %v1123
      %v1125 = vmul.f32 %v1121, 1.442695
      %v1126 = vpow.pop %v1125
      %v1127 = vmul.f32 %v1122, 1.442695
      %v1128 = vpow.pop %v1127
      %v1129 = vsel %vm897, %v1124, 0.0
      %1130 = vadd.xlane.f32.xlu0 %v1129
      %v1131 = vpop.xlane.xlu0 %1130
      %v1132 = vsel %vm897, %v1126, 0.0
      %1133 = vadd.xlane.f32.xlu0 %v1132
      %v1134 = vpop.xlane.xlu0 %1133
      %v1135 = vsel %vm904, %v1128, 0.0
      %1136 = vadd.xlane.f32.xlu0 %v1135
      %v1137 = vpop.xlane.xlu0 %1136
      %v1138 = vrcp.pop %v1131
      %v1139 = vrcp.pop %v1134
      %v1140 = vrcp.pop %v1137
      %v1141 = vmul.f32 %v1124, %v1138
      %v1142 = vmul.f32 %v1126, %v1139
      %v1143 = vmul.f32 %v1128, %v1140
      %v1144 = vpack.c.bf16 %v1142, %v1141
      %v1145 = vpack.c.bf16 %v1143, %v1143
      %1146 = vrot.lane.b32.xlu0 %v934, 96
      %v1147 = vpop.permute.xlu0 %1146
      %1148 = vrot.lane.b32.xlu0 %v935, 96
      %v1149 = vpop.permute.xlu0 %1148
      %v1152 = vsel %vm897, %v1144, 0
      %v1155 = vsel %vm897, %v1145, 0
      %v1158 = vand.u32 %v1149, %v944
      %1160 = vmatpush.bf16.msra.mxu0 0
      %1161 = vmatpush.bf16.msra.mxu0 0
      %1162 = vmatpush.bf16.msra.mxu0 0
      %1163 = vmatpush.bf16.msra.mxu0 0
      %1164 = vmatpush.bf16.msra.mxu0 0
      %1165 = vmatpush.bf16.msra.mxu0 0
      %1166 = vmatpush.bf16.msra.mxu0 %v1158
      %1167 = vmatpush.bf16.msra.mxu0 %v1147
      %1168 = vmatmul.bf16.gmra.mxu0 %v1152
      %v1169 = vpop.f32.mrf.mxu0
      %v1170 = vadd.f32 0.0, %v1169
      %v1171 = vpop.f32.mrf.mxu0
      %v1172 = vadd.f32 0.0, %v1171
      %1173 = vmatmul.bf16.gmra.mxu0 %v1155
      %v1174 = vpop.f32.mrf.mxu0
      %v1175 = vadd.f32 0.0, %v1174
      %v1176 = vpop.f32.mrf.mxu0
      %1177 = vdwg.mxu0
      %1178 = vrot.lane.b32.xlu0 %v858, 80
      %v1179 = vpop.permute.xlu0 %1178
      %1180 = vrot.lane.b32.xlu0 %v859, 80
      %v1181 = vpop.permute.xlu0 %1180
      %1182 = vrot.lane.b32.xlu0 %v858, 16
      %v1183 = vpop.permute.xlu0 %1182
      %1184 = vrot.lane.b32.xlu0 %v859, 16
      %v1185 = vpop.permute.xlu0 %1184
      %v1187 = vsel %vm866, %v1179, 0
      %v1190 = vsel %vm866, %v1181, 0
      %v1193 = vsel %vm866, %v1183, 0
      %v1196 = vsel %vm866, %v1185, 0
      %1198 = vmatpush.bf16.xpose.msra.mxu0 0
      %1199 = vmatpush.bf16.xpose.msra.mxu0 0
      %1200 = vmatpush.bf16.xpose.msra.mxu0 0
      %1201 = vmatpush.bf16.xpose.msra.mxu0 0
      %1202 = vmatpush.bf16.xpose.msra.mxu0 0
      %1203 = vmatpush.bf16.xpose.msra.mxu0 0
      %1204 = vmatpush.bf16.xpose.msra.mxu0 %v1196
      %1205 = vmatpush.bf16.xpose.msra.mxu0 %v1193
      %1206 = vmatmul.bf16.gmra.mxu0 %v1187
      %v1207 = vpop.f32.mrf.mxu0
      %v1208 = vadd.f32 0.0, %v1207
      %v1209 = vpop.f32.mrf.mxu0
      %v1210 = vadd.f32 0.0, %v1209
      %1211 = vmatmul.bf16.gmra.mxu0 %v1190
      %v1212 = vpop.f32.mrf.mxu0
      %v1213 = vadd.f32 0.0, %v1212
      %v1214 = vpop.f32.mrf.mxu0
      %1215 = vdwg.mxu0
      %v1216 = vsel %vm897, %v1208, -inf
      %1217 = vmax.xlane.f32.xlu0 %v1216
      %v1218 = vpop.xlane.xlu0 %1217
      %v1219 = vsel %vm897, %v1210, -inf
      %1220 = vmax.xlane.f32.xlu0 %v1219
      %v1221 = vpop.xlane.xlu0 %1220
      %v1222 = vsel %vm904, %v1213, -inf
      %1223 = vmax.xlane.f32.xlu0 %v1222
      %v1224 = vpop.xlane.xlu0 %1223
      %v1225 = vsub.f32 %v1208, %v1218
      %v1226 = vsub.f32 %v1210, %v1221
      %v1227 = vsub.f32 %v1213, %v1224
      %v1228 = vmul.f32 %v1225, 1.442695
      %v1229 = vpow.pop %v1228
      %v1230 = vmul.f32 %v1226, 1.442695
      %v1231 = vpow.pop %v1230
      %v1232 = vmul.f32 %v1227, 1.442695
      %v1233 = vpow.pop %v1232
      %v1234 = vsel %vm897, %v1229, 0.0
      %1235 = vadd.xlane.f32.xlu0 %v1234
      %v1236 = vpop.xlane.xlu0 %1235
      %v1237 = vsel %vm897, %v1231, 0.0
      %1238 = vadd.xlane.f32.xlu0 %v1237
      %v1239 = vpop.xlane.xlu0 %1238
      %v1240 = vsel %vm904, %v1233, 0.0
      %1241 = vadd.xlane.f32.xlu0 %v1240
      %v1242 = vpop.xlane.xlu0 %1241
      %v1243 = vrcp.pop %v1236
      %v1244 = vrcp.pop %v1239
      %v1245 = vrcp.pop %v1242
      %v1246 = vmul.f32 %v1229, %v1243
      %v1247 = vmul.f32 %v1231, %v1244
      %v1248 = vmul.f32 %v1233, %v1245
      %v1249 = vpack.c.bf16 %v1247, %v1246
      %v1250 = vpack.c.bf16 %v1248, %v1248
      %1251 = vrot.lane.b32.xlu0 %v934, 80
      %v1252 = vpop.permute.xlu0 %1251
      %1253 = vrot.lane.b32.xlu0 %v935, 80
      %v1254 = vpop.permute.xlu0 %1253
      %v1257 = vsel %vm897, %v1249, 0
      %v1260 = vsel %vm897, %v1250, 0
      %v1263 = vand.u32 %v1254, %v944
      %1265 = vmatpush.bf16.msra.mxu0 0
      %1266 = vmatpush.bf16.msra.mxu0 0
      %1267 = vmatpush.bf16.msra.mxu0 0
      %1268 = vmatpush.bf16.msra.mxu0 0
      %1269 = vmatpush.bf16.msra.mxu0 0
      %1270 = vmatpush.bf16.msra.mxu0 0
      %1271 = vmatpush.bf16.msra.mxu0 %v1263
      %1272 = vmatpush.bf16.msra.mxu0 %v1252
      %1273 = vmatmul.bf16.gmra.mxu0 %v1257
      %v1274 = vpop.f32.mrf.mxu0
      %v1275 = vadd.f32 0.0, %v1274
      %v1276 = vpop.f32.mrf.mxu0
      %v1277 = vadd.f32 0.0, %v1276
      %1278 = vmatmul.bf16.gmra.mxu0 %v1260
      %v1279 = vpop.f32.mrf.mxu0
      %v1280 = vadd.f32 0.0, %v1279
      %v1281 = vpop.f32.mrf.mxu0
      %1282 = vdwg.mxu0
      %1286 = vrot.lane.b32.xlu0 %v1065, 16
      %v1287 = vpop.permute.xlu0 %1286
      %1288 = vrot.lane.b32.xlu0 %v1067, 16
      %v1289 = vpop.permute.xlu0 %1288
      %1290 = vrot.lane.b32.xlu0 %v1070, 16
      %v1291 = vpop.permute.xlu0 %1290
      %1298 = vrot.lane.b32.xlu0 %v1170, 32
      %v1299 = vpop.permute.xlu0 %1298
      %1300 = vrot.lane.b32.xlu0 %v1172, 32
      %v1301 = vpop.permute.xlu0 %1300
      %1302 = vrot.lane.b32.xlu0 %v1175, 32
      %v1303 = vpop.permute.xlu0 %1302
      %1310 = vrot.lane.b32.xlu0 %v1275, 48
      %v1311 = vpop.permute.xlu0 %1310
      %1312 = vrot.lane.b32.xlu0 %v1277, 48
      %v1313 = vpop.permute.xlu0 %1312
      %1314 = vrot.lane.b32.xlu0 %v1280, 48
      %v1315 = vpop.permute.xlu0 %1314
      %v1319 = vsel %vm866, %v958, %v1287
      %v1320 = vsel %vm866, %v960, %v1289
      %v1321 = vsel %vm866, %v963, %v1291
      %vm1322 = vcmask 261120
      %v1323 = vsel %vm1322, %v1319, %v1299
      %v1324 = vsel %vm1322, %v1320, %v1301
      %v1325 = vsel %vm1322, %v1321, %v1303
      %vm1326 = vcmask 392192
      %v1327 = vsel %vm1326, %v1323, %v1311
      %v1328 = vsel %vm1326, %v1324, %v1313
      %v1329 = vsel %vm1326, %v1325, %v1315
      %v1330 = vpack.c.bf16 %v1328, %v1327
      %v1331 = vpack.c.bf16 %v1329, %v1329
      %v1332 = vld [vmem:[%s619] sm:$0xf]
      %v1333 = vld [vmem:[%s619 + $0x4] sm:$0xf]
      %v1334 = vld [vmem:[%s619 + $0x8] sm:$0xf]
      %v1335 = vld [vmem:[%s619 + $0xc] sm:$0xf]
      %v1336 = vld [vmem:[%s619 + $0x10] sm:$0xf]
      %v1337 = vld [vmem:[%s619 + $0x14] sm:$0xf]
      %v1338 = vld [vmem:[%s619 + $0x18] sm:$0xf]
      %v1339 = vld [vmem:[%s619 + $0x1c] sm:$0xf]
      %v1340 = vld [vmem:[%s622] sm:$0x1]
      %v1341 = vunpack.c.l.bf16 %v1340
      %v1342 = vperm.slane %v1341, 0
      %v1351 = vunpack.c.l.b16 %v1332
      %v1352 = vunpack.c.l.b16 %v1333
      %v1353 = vunpack.c.l.b16 %v1334
      %v1354 = vunpack.c.l.b16 %v1335
      %v1355 = vunpack.c.l.b16 %v1336
      %v1356 = vunpack.c.l.b16 %v1337
      %v1357 = vunpack.c.l.b16 %v1338
      %v1358 = vunpack.c.l.b16 %v1339
      %v1359 = vpack.c.b16 %v1352, %v1351
      %v1360 = vpack.c.b16 %v1354, %v1353
      %v1361 = vpack.c.b16 %v1356, %v1355
      %v1362 = vpack.c.b16 %v1358, %v1357
      %v1368 = vsel %vm674, %v1330, 0
      %v1371 = vsel %vm674, %v1331, 0
      %1373 = vmatpush.bf16.msra.mxu0 0
      %1374 = vmatpush.bf16.msra.mxu0 0
      %1375 = vmatpush.bf16.msra.mxu0 0
      %1376 = vmatpush.bf16.msra.mxu0 0
      %1377 = vmatpush.bf16.msra.mxu0 %v1362
      %1378 = vmatpush.bf16.msra.mxu0 %v1361
      %1379 = vmatpush.bf16.msra.mxu0 %v1360
      %1380 = vmatpush.bf16.msra.mxu0 %v1359
      %1381 = vmatmul.bf16.gmra.mxu0 %v1368
      %v1382 = vpop.f32.mrf.mxu0
      %v1383 = vadd.f32 %v1342, %v1382
      %v1384 = vpop.f32.mrf.mxu0
      %v1385 = vadd.f32 %v1342, %v1384
      %1386 = vmatmul.bf16.gmra.mxu0 %v1371
      %v1387 = vpop.f32.mrf.mxu0
      %v1388 = vadd.f32 %v1342, %v1387
      %v1389 = vpop.f32.mrf.mxu0
      %1390 = vdwg.mxu0
      %v1391 = vadd.f32 %v667, %v1383
      %v1392 = vadd.f32 %v668, %v1385
      %v1393 = vadd.f32 %v669, %v1388
      %v1394 = vld [vmem:[%s625] sm:$0x1]
      %v1395 = vunpack.c.l.bf16 %v1394
      %v1396 = vld [vmem:[%s628] sm:$0x1]
      %v1397 = vunpack.c.l.bf16 %v1396
      %v1398 = vsel %vm674, %v1391, 0.0
      %1399 = vadd.xlane.f32.xlu0 %v1398
      %v1400 = vpop.xlane.xlu0 %1399
      %v1401 = vsel %vm674, %v1392, 0.0
      %1402 = vadd.xlane.f32.xlu0 %v1401
      %v1403 = vpop.xlane.xlu0 %1402
      %v1404 = vsel %vm681, %v1393, 0.0
      %1405 = vadd.xlane.f32.xlu0 %v1404
      %v1406 = vpop.xlane.xlu0 %1405
      %v1407 = vmul.f32 %v1400, %v691
      %v1408 = vmul.f32 %v1403, %v691
      %v1409 = vmul.f32 %v1406, %v691
      %v1410 = vsub.f32 %v1391, %v1407
      %v1411 = vsub.f32 %v1392, %v1408
      %v1412 = vsub.f32 %v1393, %v1409
      %v1413 = vmul.f32 %v1410, %v1410
      %v1414 = vmul.f32 %v1411, %v1411
      %v1415 = vmul.f32 %v1412, %v1412
      %v1416 = vsel %vm674, %v1413, 0.0
      %1417 = vadd.xlane.f32.xlu0 %v1416
      %v1418 = vpop.xlane.xlu0 %1417
      %v1419 = vsel %vm674, %v1414, 0.0
      %1420 = vadd.xlane.f32.xlu0 %v1419
      %v1421 = vpop.xlane.xlu0 %1420
      %v1422 = vsel %vm681, %v1415, 0.0
      %1423 = vadd.xlane.f32.xlu0 %v1422
      %v1424 = vpop.xlane.xlu0 %1423
      %v1425 = vmul.f32 %v1418, %v691
      %v1426 = vmul.f32 %v1421, %v691
      %v1427 = vmul.f32 %v1424, %v691
      %v1428 = vadd.f32 %v1425, 1e-05
      %v1429 = vadd.f32 %v1426, 1e-05
      %v1430 = vadd.f32 %v1427, 1e-05
      %v1431 = vrsqrt.pop %v1428
      %v1432 = vmul.f32 %v1431, %v1428
      %v1433 = vmul.f32 %v1432, %v1431
      %v1434 = vmul.f32 0.5, %v1433
      %v1435 = vsub.f32 1.5, %v1434
      %v1436 = vmul.f32 %v1431, %v1435
      %vm1437 = vweird.f32 %v1428
      %vm1438 = vweird.f32 %v1431
      %vm1439 = vmor %vm1437, %vm1438
      %v1440 = vsel %vm1439, %v1431, %v1436
      %v1441 = vrsqrt.pop %v1429
      %v1442 = vmul.f32 %v1441, %v1429
      %v1443 = vmul.f32 %v1442, %v1441
      %v1444 = vmul.f32 0.5, %v1443
      %v1445 = vsub.f32 1.5, %v1444
      %v1446 = vmul.f32 %v1441, %v1445
      %vm1447 = vweird.f32 %v1429
      %vm1448 = vweird.f32 %v1441
      %vm1449 = vmor %vm1447, %vm1448
      %v1450 = vsel %vm1449, %v1441, %v1446
      %v1451 = vrsqrt.pop %v1430
      %v1452 = vmul.f32 %v1451, %v1430
      %v1453 = vmul.f32 %v1452, %v1451
      %v1454 = vmul.f32 0.5, %v1453
      %v1455 = vsub.f32 1.5, %v1454
      %v1456 = vmul.f32 %v1451, %v1455
      %vm1457 = vweird.f32 %v1430
      %vm1458 = vweird.f32 %v1451
      %vm1459 = vmor %vm1457, %vm1458
      %v1460 = vsel %vm1459, %v1451, %v1456
      %v1461 = vmul.f32 %v1410, %v1440
      %v1462 = vmul.f32 %v1411, %v1450
      %v1463 = vmul.f32 %v1412, %v1460
      %v1464 = vperm.slane %v1395, 0
      %v1465 = vmul.f32 %v1461, %v1464
      %v1466 = vmul.f32 %v1462, %v1464
      %v1467 = vmul.f32 %v1463, %v1464
      %v1468 = vperm.slane %v1397, 0
      %v1469 = vadd.f32 %v1465, %v1468
      %v1470 = vadd.f32 %v1466, %v1468
      %v1471 = vadd.f32 %v1467, %v1468
      %v1472 = vpack.c.bf16 %v1470, %v1469
      %v1473 = vpack.c.bf16 %v1471, %v1471
      %v1474 = vld [vmem:[%s633] sm:$0xff]
      %v1475 = vld [vmem:[%s633 + $0x8] sm:$0xff]
      %v1476 = vld [vmem:[%s633 + $0x10] sm:$0xff]
      %v1477 = vld [vmem:[%s633 + $0x18] sm:$0xff]
      %v1478 = vld [vmem:[%s633 + $0x20] sm:$0xff]
      %v1479 = vld [vmem:[%s633 + $0x28] sm:$0xff]
      %v1480 = vld [vmem:[%s633 + $0x30] sm:$0xff]
      %v1481 = vld [vmem:[%s633 + $0x38] sm:$0xff]
      %v1482 = vld [vmem:[%s637] sm:$0x3]
      %v1483 = vunpack.c.l.bf16 %v1482
      %v1485 = vperm.slane %v1483, 0
      %v1486 = vperm.slane %v1483, 2
      %v1489 = vperm.slane %v1485, 0
      %v1490 = vperm.slane %v1486, 0
      %v1499 = vunpack.c.l.b16 %v1474
      %v1500 = vunpack.c.h.b16 %v1474
      %v1501 = vunpack.c.l.b16 %v1475
      %v1502 = vunpack.c.h.b16 %v1475
      %v1503 = vunpack.c.l.b16 %v1476
      %v1504 = vunpack.c.h.b16 %v1476
      %v1505 = vunpack.c.l.b16 %v1477
      %v1506 = vunpack.c.h.b16 %v1477
      %v1507 = vunpack.c.l.b16 %v1478
      %v1508 = vunpack.c.h.b16 %v1478
      %v1509 = vunpack.c.l.b16 %v1479
      %v1510 = vunpack.c.h.b16 %v1479
      %v1511 = vunpack.c.l.b16 %v1480
      %v1512 = vunpack.c.h.b16 %v1480
      %v1513 = vunpack.c.l.b16 %v1481
      %v1514 = vunpack.c.h.b16 %v1481
      %v1515 = vpack.c.b16 %v1501, %v1499
      %v1516 = vpack.c.b16 %v1502, %v1500
      %v1517 = vpack.c.b16 %v1505, %v1503
      %v1518 = vpack.c.b16 %v1506, %v1504
      %v1519 = vpack.c.b16 %v1509, %v1507
      %v1520 = vpack.c.b16 %v1510, %v1508
      %v1521 = vpack.c.b16 %v1513, %v1511
      %v1522 = vpack.c.b16 %v1514, %v1512
      %v1532 = vsel %vm674, %v1472, 0
      %v1535 = vsel %vm674, %v1473, 0
      %1537 = vmatpush.bf16.msra.mxu0 0
      %1538 = vmatpush.bf16.msra.mxu0 0
      %1539 = vmatpush.bf16.msra.mxu0 0
      %1540 = vmatpush.bf16.msra.mxu0 0
      %1541 = vmatpush.bf16.msra.mxu0 %v1521
      %1542 = vmatpush.bf16.msra.mxu0 %v1519
      %1543 = vmatpush.bf16.msra.mxu0 %v1517
      %1544 = vmatpush.bf16.msra.mxu0 %v1515
      %1545 = vmatmul.bf16.gmra.mxu0 %v1532
      %v1546 = vpop.f32.mrf.mxu0
      %v1547 = vadd.f32 %v1489, %v1546
      %v1548 = vpop.f32.mrf.mxu0
      %v1549 = vadd.f32 %v1489, %v1548
      %1550 = vmatmul.bf16.gmra.mxu0 %v1535
      %v1551 = vpop.f32.mrf.mxu0
      %v1552 = vadd.f32 %v1489, %v1551
      %v1553 = vpop.f32.mrf.mxu0
      %1554 = vdwg.mxu0
      %1555 = vmatpush.bf16.msra.mxu0 0
      %1556 = vmatpush.bf16.msra.mxu0 0
      %1557 = vmatpush.bf16.msra.mxu0 0
      %1558 = vmatpush.bf16.msra.mxu0 0
      %1559 = vmatpush.bf16.msra.mxu0 %v1522
      %1560 = vmatpush.bf16.msra.mxu0 %v1520
      %1561 = vmatpush.bf16.msra.mxu0 %v1518
      %1562 = vmatpush.bf16.msra.mxu0 %v1516
      %1563 = vmatmul.bf16.gmra.mxu0 %v1532
      %v1564 = vpop.f32.mrf.mxu0
      %v1565 = vadd.f32 %v1490, %v1564
      %v1566 = vpop.f32.mrf.mxu0
      %v1567 = vadd.f32 %v1490, %v1566
      %1568 = vmatmul.bf16.gmra.mxu0 %v1535
      %v1569 = vpop.f32.mrf.mxu0
      %v1570 = vadd.f32 %v1490, %v1569
      %v1571 = vpop.f32.mrf.mxu0
      %1572 = vdwg.mxu0
      %v1573 = vmul.f32 %v1547, 1.702
      %v1574 = vmul.f32 %v1565, 1.702
      %v1575 = vmul.f32 %v1549, 1.702
      %v1576 = vmul.f32 %v1567, 1.702
      %v1577 = vmul.f32 %v1552, 1.702
      %v1578 = vmul.f32 %v1570, 1.702
      %v1579 = vxor.u32 %v1573, 2147483648
      %v1580 = vxor.u32 %v1574, 2147483648
      %v1581 = vxor.u32 %v1575, 2147483648
      %v1582 = vxor.u32 %v1576, 2147483648
      %v1583 = vxor.u32 %v1577, 2147483648
      %v1584 = vxor.u32 %v1578, 2147483648
      %v1585 = vmul.f32 %v1579, 1.442695
      %v1586 = vpow.pop %v1585
      %v1587 = vmul.f32 %v1580, 1.442695
      %v1588 = vpow.pop %v1587
      %v1589 = vmul.f32 %v1581, 1.442695
      %v1590 = vpow.pop %v1589
      %v1591 = vmul.f32 %v1582, 1.442695
      %v1592 = vpow.pop %v1591
      %v1593 = vmul.f32 %v1583, 1.442695
      %v1594 = vpow.pop %v1593
      %v1595 = vmul.f32 %v1584, 1.442695
      %v1596 = vpow.pop %v1595
      %v1597 = vadd.f32 %v1586, 1.0
      %v1598 = vadd.f32 %v1588, 1.0
      %v1599 = vadd.f32 %v1590, 1.0
      %v1600 = vadd.f32 %v1592, 1.0
      %v1601 = vadd.f32 %v1594, 1.0
      %v1602 = vadd.f32 %v1596, 1.0
      %v1603 = vrcp.pop %v1597
      %v1604 = vmul.f32 %v1597, %v1603
      %v1605 = vsub.f32 1.0, %v1604
      %v1606 = vmul.f32 %v1603, %v1605
      %v1607 = vadd.f32 %v1603, %v1606
      %vm1608 = vweird.f32 %v1597
      %vm1609 = vweird.f32 %v1603
      %vm1610 = vmor %vm1608, %vm1609
      %v1611 = vsel %vm1610, %v1603, %v1607
      %v1612 = vand.u32 2147483647, %v1597
      %vm1613 = vcmp.eq.f32.partialorder %v1612, 8.507059e+37
      %v1614 = vand.u32 %v1597, 2147483648
      %v1615 = vor.u32 1.1754944e-38, %v1614
      %v1616 = vsel %vm1613, %v1615, %v1611
      %v1617 = vmul.f32 1.0, %v1616
      %v1618 = vrcp.pop %v1598
      %v1619 = vmul.f32 %v1598, %v1618
      %v1620 = vsub.f32 1.0, %v1619
      %v1621 = vmul.f32 %v1618, %v1620
      %v1622 = vadd.f32 %v1618, %v1621
      %vm1623 = vweird.f32 %v1598
      %vm1624 = vweird.f32 %v1618
      %vm1625 = vmor %vm1623, %vm1624
      %v1626 = vsel %vm1625, %v1618, %v1622
      %v1627 = vand.u32 2147483647, %v1598
      %vm1628 = vcmp.eq.f32.partialorder %v1627, 8.507059e+37
      %v1629 = vand.u32 %v1598, 2147483648
      %v1630 = vor.u32 1.1754944e-38, %v1629
      %v1631 = vsel %vm1628, %v1630, %v1626
      %v1632 = vmul.f32 1.0, %v1631
      %v1633 = vrcp.pop %v1599
      %v1634 = vmul.f32 %v1599, %v1633
      %v1635 = vsub.f32 1.0, %v1634
      %v1636 = vmul.f32 %v1633, %v1635
      %v1637 = vadd.f32 %v1633, %v1636
      %vm1638 = vweird.f32 %v1599
      %vm1639 = vweird.f32 %v1633
      %vm1640 = vmor %vm1638, %vm1639
      %v1641 = vsel %vm1640, %v1633, %v1637
      %v1642 = vand.u32 2147483647, %v1599
      %vm1643 = vcmp.eq.f32.partialorder %v1642, 8.507059e+37
      %v1644 = vand.u32 %v1599, 2147483648
      %v1645 = vor.u32 1.1754944e-38, %v1644
      %v1646 = vsel %vm1643, %v1645, %v1641
      %v1647 = vmul.f32 1.0, %v1646
      %v1648 = vrcp.pop %v1600
      %v1649 = vmul.f32 %v1600, %v1648
      %v1650 = vsub.f32 1.0, %v1649
      %v1651 = vmul.f32 %v1648, %v1650
      %v1652 = vadd.f32 %v1648, %v1651
      %vm1653 = vweird.f32 %v1600
      %vm1654 = vweird.f32 %v1648
      %vm1655 = vmor %vm1653, %vm1654
      %v1656 = vsel %vm1655, %v1648, %v1652
      %v1657 = vand.u32 2147483647, %v1600
      %vm1658 = vcmp.eq.f32.partialorder %v1657, 8.507059e+37
      %v1659 = vand.u32 %v1600, 2147483648
      %v1660 = vor.u32 1.1754944e-38, %v1659
      %v1661 = vsel %vm1658, %v1660, %v1656
      %v1662 = vmul.f32 1.0, %v1661
      %v1663 = vrcp.pop %v1601
      %v1664 = vmul.f32 %v1601, %v1663
      %v1665 = vsub.f32 1.0, %v1664
      %v1666 = vmul.f32 %v1663, %v1665
      %v1667 = vadd.f32 %v1663, %v1666
      %vm1668 = vweird.f32 %v1601
      %vm1669 = vweird.f32 %v1663
      %vm1670 = vmor %vm1668, %vm1669
      %v1671 = vsel %vm1670, %v1663, %v1667
      %v1672 = vand.u32 2147483647, %v1601
      %vm1673 = vcmp.eq.f32.partialorder %v1672, 8.507059e+37
      %v1674 = vand.u32 %v1601, 2147483648
      %v1675 = vor.u32 1.1754944e-38, %v1674
      %v1676 = vsel %vm1673, %v1675, %v1671
      %v1677 = vmul.f32 1.0, %v1676
      %v1678 = vrcp.pop %v1602
      %v1679 = vmul.f32 %v1602, %v1678
      %v1680 = vsub.f32 1.0, %v1679
      %v1681 = vmul.f32 %v1678, %v1680
      %v1682 = vadd.f32 %v1678, %v1681
      %vm1683 = vweird.f32 %v1602
      %vm1684 = vweird.f32 %v1678
      %vm1685 = vmor %vm1683, %vm1684
      %v1686 = vsel %vm1685, %v1678, %v1682
      %v1687 = vand.u32 2147483647, %v1602
      %vm1688 = vcmp.eq.f32.partialorder %v1687, 8.507059e+37
      %v1689 = vand.u32 %v1602, 2147483648
      %v1690 = vor.u32 1.1754944e-38, %v1689
      %v1691 = vsel %vm1688, %v1690, %v1686
      %v1692 = vmul.f32 1.0, %v1691
      %v1693 = vmul.f32 %v1547, %v1617
      %v1694 = vmul.f32 %v1565, %v1632
      %v1695 = vmul.f32 %v1549, %v1647
      %v1696 = vmul.f32 %v1567, %v1662
      %v1697 = vmul.f32 %v1552, %v1677
      %v1698 = vmul.f32 %v1570, %v1692
      %v1699 = vpack.c.bf16 %v1695, %v1693
      %v1700 = vpack.c.bf16 %v1696, %v1694
      %v1701 = vpack.c.bf16 %v1697, %v1697
      %v1702 = vpack.c.bf16 %v1698, %v1698
      %v1703 = vld [vmem:[%s642] sm:$0xf]
      %v1704 = vld [vmem:[%s642 + $0x4] sm:$0xf]
      %v1705 = vld [vmem:[%s642 + $0x8] sm:$0xf]
      %v1706 = vld [vmem:[%s642 + $0xc] sm:$0xf]
      %v1707 = vld [vmem:[%s642 + $0x10] sm:$0xf]
      %v1708 = vld [vmem:[%s642 + $0x14] sm:$0xf]
      %v1709 = vld [vmem:[%s642 + $0x18] sm:$0xf]
      %v1710 = vld [vmem:[%s642 + $0x1c] sm:$0xf]
      %v1711 = vld [vmem:[%s642 + $0x20] sm:$0xf]
      %v1712 = vld [vmem:[%s642 + $0x24] sm:$0xf]
      %v1713 = vld [vmem:[%s642 + $0x28] sm:$0xf]
      %v1714 = vld [vmem:[%s642 + $0x2c] sm:$0xf]
      %v1715 = vld [vmem:[%s642 + $0x30] sm:$0xf]
      %v1716 = vld [vmem:[%s642 + $0x34] sm:$0xf]
      %v1717 = vld [vmem:[%s642 + $0x38] sm:$0xf]
      %v1718 = vld [vmem:[%s642 + $0x3c] sm:$0xf]
      %v1719 = vld [vmem:[%s642 + $0x40] sm:$0xf]
      %v1720 = vld [vmem:[%s642 + $0x44] sm:$0xf]
      %v1721 = vld [vmem:[%s642 + $0x48] sm:$0xf]
      %v1722 = vld [vmem:[%s642 + $0x4c] sm:$0xf]
      %v1723 = vld [vmem:[%s642 + $0x50] sm:$0xf]
      %v1724 = vld [vmem:[%s642 + $0x54] sm:$0xf]
      %v1725 = vld [vmem:[%s642 + $0x58] sm:$0xf]
      %v1726 = vld [vmem:[%s642 + $0x5c] sm:$0xf]
      %v1727 = vld [vmem:[%s642 + $0x60] sm:$0xf]
      %v1728 = vld [vmem:[%s642 + $0x64] sm:$0xf]
      %v1729 = vld [vmem:[%s642 + $0x68] sm:$0xf]
      %v1730 = vld [vmem:[%s642 + $0x6c] sm:$0xf]
      %v1731 = vld [vmem:[%s642 + $0x70] sm:$0xf]
      %v1732 = vld [vmem:[%s642 + $0x74] sm:$0xf]
      %v1733 = vld [vmem:[%s642 + $0x78] sm:$0xf]
      %v1734 = vld [vmem:[%s642 + $0x7c] sm:$0xf]
      %v1735 = vld [vmem:[%s645] sm:$0x1]
      %v1736 = vunpack.c.l.bf16 %v1735
      %v1737 = vperm.slane %v1736, 0
      %v1770 = vunpack.c.l.b16 %v1703
      %v1771 = vunpack.c.l.b16 %v1704
      %v1772 = vunpack.c.l.b16 %v1705
      %v1773 = vunpack.c.l.b16 %v1706
      %v1774 = vunpack.c.l.b16 %v1707
      %v1775 = vunpack.c.l.b16 %v1708
      %v1776 = vunpack.c.l.b16 %v1709
      %v1777 = vunpack.c.l.b16 %v1710
      %v1778 = vunpack.c.l.b16 %v1711
      %v1779 = vunpack.c.l.b16 %v1712
      %v1780 = vunpack.c.l.b16 %v1713
      %v1781 = vunpack.c.l.b16 %v1714
      %v1782 = vunpack.c.l.b16 %v1715
      %v1783 = vunpack.c.l.b16 %v1716
      %v1784 = vunpack.c.l.b16 %v1717
      %v1785 = vunpack.c.l.b16 %v1718
      %v1786 = vunpack.c.l.b16 %v1719
      %v1787 = vunpack.c.l.b16 %v1720
      %v1788 = vunpack.c.l.b16 %v1721
      %v1789 = vunpack.c.l.b16 %v1722
      %v1790 = vunpack.c.l.b16 %v1723
      %v1791 = vunpack.c.l.b16 %v1724
      %v1792 = vunpack.c.l.b16 %v1725
      %v1793 = vunpack.c.l.b16 %v1726
      %v1794 = vunpack.c.l.b16 %v1727
      %v1795 = vunpack.c.l.b16 %v1728
      %v1796 = vunpack.c.l.b16 %v1729
      %v1797 = vunpack.c.l.b16 %v1730
      %v1798 = vunpack.c.l.b16 %v1731
      %v1799 = vunpack.c.l.b16 %v1732
      %v1800 = vunpack.c.l.b16 %v1733
      %v1801 = vunpack.c.l.b16 %v1734
      %v1802 = vpack.c.b16 %v1771, %v1770
      %v1803 = vpack.c.b16 %v1773, %v1772
      %v1804 = vpack.c.b16 %v1775, %v1774
      %v1805 = vpack.c.b16 %v1777, %v1776
      %v1806 = vpack.c.b16 %v1779, %v1778
      %v1807 = vpack.c.b16 %v1781, %v1780
      %v1808 = vpack.c.b16 %v1783, %v1782
      %v1809 = vpack.c.b16 %v1785, %v1784
      %v1810 = vpack.c.b16 %v1787, %v1786
      %v1811 = vpack.c.b16 %v1789, %v1788
      %v1812 = vpack.c.b16 %v1791, %v1790
      %v1813 = vpack.c.b16 %v1793, %v1792
      %v1814 = vpack.c.b16 %v1795, %v1794
      %v1815 = vpack.c.b16 %v1797, %v1796
      %v1816 = vpack.c.b16 %v1799, %v1798
      %v1817 = vpack.c.b16 %v1801, %v1800
      %1834 = vmatpush.bf16.msra.mxu0 %v1809
      %1835 = vmatpush.bf16.msra.mxu0 %v1808
      %1836 = vmatpush.bf16.msra.mxu0 %v1807
      %1837 = vmatpush.bf16.msra.mxu0 %v1806
      %1838 = vmatpush.bf16.msra.mxu0 %v1805
      %1839 = vmatpush.bf16.msra.mxu0 %v1804
      %1840 = vmatpush.bf16.msra.mxu0 %v1803
      %1841 = vmatpush.bf16.msra.mxu0 %v1802
      %1842 = vmatmul.bf16.gmra.mxu0 %v1699
      %v1843 = vpop.f32.mrf.mxu0
      %v1844 = vadd.f32 %v1737, %v1843
      %v1845 = vpop.f32.mrf.mxu0
      %v1846 = vadd.f32 %v1737, %v1845
      %1847 = vmatmul.bf16.gmra.mxu0 %v1701
      %v1848 = vpop.f32.mrf.mxu0
      %v1849 = vadd.f32 %v1737, %v1848
      %v1850 = vpop.f32.mrf.mxu0
      %1851 = vdwg.mxu0
      %1852 = vmatpush.bf16.msra.mxu0 %v1817
      %1853 = vmatpush.bf16.msra.mxu0 %v1816
      %1854 = vmatpush.bf16.msra.mxu0 %v1815
      %1855 = vmatpush.bf16.msra.mxu0 %v1814
      %1856 = vmatpush.bf16.msra.mxu0 %v1813
      %1857 = vmatpush.bf16.msra.mxu0 %v1812
      %1858 = vmatpush.bf16.msra.mxu0 %v1811
      %1859 = vmatpush.bf16.msra.mxu0 %v1810
      %1860 = vmatmul.bf16.gmra.mxu0 %v1700
      %v1861 = vpop.f32.mrf.mxu0
      %v1862 = vadd.f32 %v1844, %v1861
      %v1863 = vpop.f32.mrf.mxu0
      %v1864 = vadd.f32 %v1846, %v1863
      %1865 = vmatmul.bf16.gmra.mxu0 %v1702
      %v1866 = vpop.f32.mrf.mxu0
      %v1867 = vadd.f32 %v1849, %v1866
      %v1868 = vpop.f32.mrf.mxu0
      %1869 = vdwg.mxu0
      %v1870 = vadd.f32 %v1391, %v1862
      %v1871 = vadd.f32 %v1392, %v1864
      %v1872 = vadd.f32 %v1393, %v1867
      %1873 = vst.msk [vmem:[#allocation2] sm:$0xff] %vm674, %v1870
      %1874 = vst.msk [vmem:[#allocation2 + $0x8] sm:$0xff] %vm674, %v1871
      %1875 = vst.msk [vmem:[#allocation2 + $0x10] sm:$0x1] %vm681, %v1872
      %p1876 = scmp.eq.s32.totalorder %s29, 1
      // Predicated region
      $region77: #{clip_feature_extract.6} parent=71 // pred_check
        %p1877 = pneg %p1876
      $region78: #{clip_feature_extract.6} parent=71 // pred_check_branch
        %1879 = sbr.rel (%p1877) target = $region80
      $region79: #{clip_feature_extract.6} parent=71 // pred_region
        %v1880 = vpack.c.bf16 %v1870, %v1870
        %v1881 = vpack.c.bf16 %v1871, %v1871
        %v1882 = vpack.c.bf16 %v1872, %v1872
        %vm1883 = vcmask 519168
        %1884 = vst.msk [vmem:[%s650] sm:$0xf] %vm1883, %v1880
        %1885 = vst.msk [vmem:[%s650 + $0x4] sm:$0xf] %vm1883, %v1881
        %vm1886 = vcmask 516096
        %vm1887 = vsmask.f32 256
        %vm1888 = vmand %vm1886, %vm1887
        %v1889 = vld [vmem:[%s650 + $0x8] sm:$0x1]
        %v1890 = vsel %vm1888, %v1882, %v1889
        %1891 = vst [vmem:[%s650 + $0x8] sm:$0x1] %v1890
      $region80: #{clip_feature_extract.6} parent=71 // pred_fallthru
        _
      %p1892 = scmp.lt.s32.totalorder %s28, 1
      %s1893 = scalar_select %p1892, %s28, 1
      %s1894 = smul.addr %s1893, 3
      %s1895 = smul.addr %s1894, 4
      %s1896 = scalar_lea.vmem %s13, %s1895
      // Predicated region
      $region81: #{clip_feature_extract.6} parent=71 // pred_check
        %p1897 = pneg %p392
      $region82: #{clip_feature_extract.6} parent=71 // pred_check_branch
        %1899 = sbr.rel (%p1897) target = $region84
      $region83: #{clip_feature_extract.6} parent=71 // pred_region
        _
      $region84: #{clip_feature_extract.6} parent=71 // pred_fallthru
        _
    $region72: #{clip_feature_extract.6} parent=5 // pred_fallthru
      _
    %p1900 = scmp.le.s32.totalorder 2, %s19
    // Predicated region
    $region85: #{clip_feature_extract.6} parent=5 // pred_check
      %p1901 = pneg %p1900
    $region86: #{clip_feature_extract.6} parent=5 // pred_check_branch
      %1903 = sbr.rel (%p1901) target = $region88
    $region87: #{clip_feature_extract.6} parent=5 // pred_region
      %s1904 = ssub.s32 %s19, 2
      // Predicated region
      $region89: #{clip_feature_extract.6} parent=87 // pred_check
        %p1905 = pneg %p398
      $region90: #{clip_feature_extract.6} parent=87 // pred_check_branch
        %1907 = sbr.rel (%p1905) target = $region92
      $region91: #{clip_feature_extract.6} parent=87 // pred_region
        %p1908 = scmp.lt.s32.totalorder %s30, 1
        %s1909 = scalar_select %p1908, %s30, 1
        %s1910 = smul.addr %s1909, 3
        %s1911 = smul.addr %s1910, 4
        %s1912 = scalar_lea.vmem %s13, %s1911
      $region92: #{clip_feature_extract.6} parent=87 // pred_fallthru
        _
    $region88: #{clip_feature_extract.6} parent=5 // pred_fallthru
      _
  $region6: #{clip_feature_extract.6} parent=0 // loop_footer
    %s23 = sadd.s32 1, %s19
  $region7: #{clip_feature_extract.6} parent=0 // loop_footer_branch
    %18 = sbr.rel target = $region3
  $region8: #{clip_feature_extract.6} parent=0 // loop_exit
    _

// kernel: clip_feature_extract.8
$region0: #{clip_feature_extract.8}
  #allocation0 [shape = 'u32[]', space=smem, size = 0x4, offset = 0x4, fixed_abs, tag = 'smem constant byte address 0x4 - core index']
  #allocation1 [shape = 'u32[72,128]{1,0:T(1,128)}', space=vmem, size = 0x9000, scoped, tag = 'internal scratch']
  #allocation2 [shape = 'f32[8,64]{1,0:T(8,128)}', space=vmem, size = 0x1000, scoped, tag = 'scratch operand']
  %s0 = inlined_call_operand.vmem [shape: bf16[2,8,64], index: 0, kind: input, shape index: {}]
  %s1 = inlined_call_operand.vmem [shape: bf16[2,1,64], index: 1, kind: input, shape index: {}]
  %s2 = inlined_call_operand.vmem [shape: bf16[2,1,64], index: 2, kind: input, shape index: {}]
  %s3 = inlined_call_operand.vmem [shape: bf16[2,64,192], index: 3, kind: input, shape index: {}]
  %s4 = inlined_call_operand.vmem [shape: bf16[2,1,192], index: 4, kind: input, shape index: {}]
  %s5 = inlined_call_operand.vmem [shape: bf16[2,64,64], index: 5, kind: input, shape index: {}]
  %s6 = inlined_call_operand.vmem [shape: bf16[2,1,64], index: 6, kind: input, shape index: {}]
  %s7 = inlined_call_operand.vmem [shape: bf16[2,1,64], index: 7, kind: input, shape index: {}]
  %s8 = inlined_call_operand.vmem [shape: bf16[2,1,64], index: 8, kind: input, shape index: {}]
  %s9 = inlined_call_operand.vmem [shape: bf16[2,64,256], index: 9, kind: input, shape index: {}]
  %s10 = inlined_call_operand.vmem [shape: bf16[2,1,256], index: 10, kind: input, shape index: {}]
  %s11 = inlined_call_operand.vmem [shape: bf16[2,256,64], index: 11, kind: input, shape index: {}]
  %s12 = inlined_call_operand.vmem [shape: bf16[2,1,64], index: 12, kind: input, shape index: {}]
  %s13 = inlined_call_operand.vmem [shape: bf16[2,8,64], index: 13, kind: output, shape index: {}]
  %s14 = sld [smem:[#allocation0]]
  $region93: #{clip_feature_extract.8} parent=0
    _
  %s16 = ssub.s32 1, %s14
  %s17 = scalar_select 0, %s16, %s14
  loop: start=0, step=1, limit=6
  $region2: #{clip_feature_extract.8} parent=0 // loop_pre_header
    _
  $region3: #{clip_feature_extract.8} parent=0 // loop_header
    %s19 = sphi 0, %s23
    %p20 = scmp.ge.s32.totalorder %s19, 6
    %s26 = sphi 0, %s38
    %s27 = sphi 0, %s34
    %s28 = sphi 0, %s26
    %s29 = sphi 0, %s27
    %s30 = sphi 0, %s28
    %s31 = sphi 0, %s29
    %s41 = sphi 0, %s43
    %s44 = sphi 0, %s41
    %s45 = sphi 0, %s44
    %s61 = sphi 0, %s45
    %s67 = sphi 0, %s69
    %s70 = sphi 0, %s67
    %s71 = sphi 0, %s70
    %s87 = sphi 0, %s71
    %s93 = sphi 0, %s95
    %s96 = sphi 0, %s93
    %s97 = sphi 0, %s96
    %s113 = sphi 0, %s97
    %s119 = sphi 0, %s121
    %s122 = sphi 0, %s119
    %s123 = sphi 0, %s122
    %s139 = sphi 0, %s123
    %s145 = sphi 0, %s147
    %s148 = sphi 0, %s145
    %s149 = sphi 0, %s148
    %s165 = sphi 0, %s149
    %s171 = sphi 0, %s173
    %s174 = sphi 0, %s171
    %s175 = sphi 0, %s174
    %s191 = sphi 0, %s175
    %s197 = sphi 0, %s199
    %s200 = sphi 0, %s197
    %s201 = sphi 0, %s200
    %s217 = sphi 0, %s201
    %s223 = sphi 0, %s225
    %s226 = sphi 0, %s223
    %s227 = sphi 0, %s226
    %s243 = sphi 0, %s227
    %s249 = sphi 0, %s251
    %s252 = sphi 0, %s249
    %s253 = sphi 0, %s252
    %s269 = sphi 0, %s253
    %s275 = sphi 0, %s277
    %s278 = sphi 0, %s275
    %s279 = sphi 0, %s278
    %s295 = sphi 0, %s279
    %s301 = sphi 0, %s303
    %s304 = sphi 0, %s301
    %s305 = sphi 0, %s304
    %s321 = sphi 0, %s305
    %s327 = sphi 0, %s329
    %s330 = sphi 0, %s327
    %s331 = sphi 0, %s330
    %s347 = sphi 0, %s331
    %s353 = sphi 0, %s355
    %s356 = sphi 0, %s353
    %s357 = sphi 0, %s356
    %s373 = sphi 0, %s357
    %s379 = sphi 0, %s381
    %s382 = sphi 0, %s379
    %s383 = sphi 0, %s382
    %s399 = sphi 0, %s383
  $region4: #{clip_feature_extract.8} parent=0 // loop_header_branch
    %22 = sbr.rel (%p20) target = $region8
  $region5: #{clip_feature_extract.8} parent=0 // loop_body
    %s24 = ssub.s32 %s19, 1
    %s25 = ssub.s32 %s19, 2
    %s32 = sadd.s32 1, %s27
    %p33 = scmp.ge.s32.totalorder %s32, 2
    %s34 = scalar_select %p33, 0, %s32
    %s35 = sadd.s32 1, %s26
    %s36 = scalar_select %p33, %s35, %s26
    %p37 = scmp.ge.s32.totalorder %s36, 2
    %s38 = scalar_select %p37, 0, %s36
    %s39 = ssub.s32 %s26, %s38
    %p40 = scmp.eq.s32.totalorder %s39, 0
    %s42 = sadd.s32 %s41, 1
    %s43 = scalar_select %p40, %s41, %s42
    %p46 = pneg %p40
    %p47 = scmp.eq.s32.totalorder %s19, 3
    %p48 = por %p46, %p47
    %p49 = scmp.ne.s32.totalorder %s41, %s44
    %p50 = scmp.eq.s32.totalorder %s19, 0
    %p51 = por %p49, %p50
    %p52 = scmp.ne.s32.totalorder %s41, %s44
    %p53 = scmp.eq.s32.totalorder %s24, 3
    %p54 = por %p52, %p53
    %p55 = scmp.ne.s32.totalorder %s44, %s45
    %p56 = scmp.eq.s32.totalorder %s24, 0
    %p57 = por %p55, %p56
    %p58 = scmp.ne.s32.totalorder %s44, %s45
    %p59 = scmp.eq.s32.totalorder %s25, 3
    %p60 = por %p58, %p59
    %p62 = scmp.ne.s32.totalorder %s45, %s61
    %p63 = scmp.eq.s32.totalorder %s25, 0
    %p64 = por %p62, %p63
    %s65 = ssub.s32 %s27, %s34
    %p66 = scmp.eq.s32.totalorder %s65, 0
    %s68 = sadd.s32 %s67, 1
    %s69 = scalar_select %p66, %s67, %s68
    %p72 = pneg %p66
    %p73 = scmp.eq.s32.totalorder %s19, 3
    %p74 = por %p72, %p73
    %p75 = scmp.ne.s32.totalorder %s67, %s70
    %p76 = scmp.eq.s32.totalorder %s19, 0
    %p77 = por %p75, %p76
    %p78 = scmp.ne.s32.totalorder %s67, %s70
    %p79 = scmp.eq.s32.totalorder %s24, 3
    %p80 = por %p78, %p79
    %p81 = scmp.ne.s32.totalorder %s70, %s71
    %p82 = scmp.eq.s32.totalorder %s24, 0
    %p83 = por %p81, %p82
    %p84 = scmp.ne.s32.totalorder %s70, %s71
    %p85 = scmp.eq.s32.totalorder %s25, 3
    %p86 = por %p84, %p85
    %p88 = scmp.ne.s32.totalorder %s71, %s87
    %p89 = scmp.eq.s32.totalorder %s25, 0
    %p90 = por %p88, %p89
    %s91 = ssub.s32 %s27, %s34
    %p92 = scmp.eq.s32.totalorder %s91, 0
    %s94 = sadd.s32 %s93, 1
    %s95 = scalar_select %p92, %s93, %s94
    %p98 = pneg %p92
    %p99 = scmp.eq.s32.totalorder %s19, 3
    %p100 = por %p98, %p99
    %p101 = scmp.ne.s32.totalorder %s93, %s96
    %p102 = scmp.eq.s32.totalorder %s19, 0
    %p103 = por %p101, %p102
    %p104 = scmp.ne.s32.totalorder %s93, %s96
    %p105 = scmp.eq.s32.totalorder %s24, 3
    %p106 = por %p104, %p105
    %p107 = scmp.ne.s32.totalorder %s96, %s97
    %p108 = scmp.eq.s32.totalorder %s24, 0
    %p109 = por %p107, %p108
    %p110 = scmp.ne.s32.totalorder %s96, %s97
    %p111 = scmp.eq.s32.totalorder %s25, 3
    %p112 = por %p110, %p111
    %p114 = scmp.ne.s32.totalorder %s97, %s113
    %p115 = scmp.eq.s32.totalorder %s25, 0
    %p116 = por %p114, %p115
    %s117 = ssub.s32 %s27, %s34
    %p118 = scmp.eq.s32.totalorder %s117, 0
    %s120 = sadd.s32 %s119, 1
    %s121 = scalar_select %p118, %s119, %s120
    %p124 = pneg %p118
    %p125 = scmp.eq.s32.totalorder %s19, 3
    %p126 = por %p124, %p125
    %p127 = scmp.ne.s32.totalorder %s119, %s122
    %p128 = scmp.eq.s32.totalorder %s19, 0
    %p129 = por %p127, %p128
    %p130 = scmp.ne.s32.totalorder %s119, %s122
    %p131 = scmp.eq.s32.totalorder %s24, 3
    %p132 = por %p130, %p131
    %p133 = scmp.ne.s32.totalorder %s122, %s123
    %p134 = scmp.eq.s32.totalorder %s24, 0
    %p135 = por %p133, %p134
    %p136 = scmp.ne.s32.totalorder %s122, %s123
    %p137 = scmp.eq.s32.totalorder %s25, 3
    %p138 = por %p136, %p137
    %p140 = scmp.ne.s32.totalorder %s123, %s139
    %p141 = scmp.eq.s32.totalorder %s25, 0
    %p142 = por %p140, %p141
    %s143 = ssub.s32 %s27, %s34
    %p144 = scmp.eq.s32.totalorder %s143, 0
    %s146 = sadd.s32 %s145, 1
    %s147 = scalar_select %p144, %s145, %s146
    %p150 = pneg %p144
    %p151 = scmp.eq.s32.totalorder %s19, 3
    %p152 = por %p150, %p151
    %p153 = scmp.ne.s32.totalorder %s145, %s148
    %p154 = scmp.eq.s32.totalorder %s19, 0
    %p155 = por %p153, %p154
    %p156 = scmp.ne.s32.totalorder %s145, %s148
    %p157 = scmp.eq.s32.totalorder %s24, 3
    %p158 = por %p156, %p157
    %p159 = scmp.ne.s32.totalorder %s148, %s149
    %p160 = scmp.eq.s32.totalorder %s24, 0
    %p161 = por %p159, %p160
    %p162 = scmp.ne.s32.totalorder %s148, %s149
    %p163 = scmp.eq.s32.totalorder %s25, 3
    %p164 = por %p162, %p163
    %p166 = scmp.ne.s32.totalorder %s149, %s165
    %p167 = scmp.eq.s32.totalorder %s25, 0
    %p168 = por %p166, %p167
    %s169 = ssub.s32 %s27, %s34
    %p170 = scmp.eq.s32.totalorder %s169, 0
    %s172 = sadd.s32 %s171, 1
    %s173 = scalar_select %p170, %s171, %s172
    %p176 = pneg %p170
    %p177 = scmp.eq.s32.totalorder %s19, 3
    %p178 = por %p176, %p177
    %p179 = scmp.ne.s32.totalorder %s171, %s174
    %p180 = scmp.eq.s32.totalorder %s19, 0
    %p181 = por %p179, %p180
    %p182 = scmp.ne.s32.totalorder %s171, %s174
    %p183 = scmp.eq.s32.totalorder %s24, 3
    %p184 = por %p182, %p183
    %p185 = scmp.ne.s32.totalorder %s174, %s175
    %p186 = scmp.eq.s32.totalorder %s24, 0
    %p187 = por %p185, %p186
    %p188 = scmp.ne.s32.totalorder %s174, %s175
    %p189 = scmp.eq.s32.totalorder %s25, 3
    %p190 = por %p188, %p189
    %p192 = scmp.ne.s32.totalorder %s175, %s191
    %p193 = scmp.eq.s32.totalorder %s25, 0
    %p194 = por %p192, %p193
    %s195 = ssub.s32 %s27, %s34
    %p196 = scmp.eq.s32.totalorder %s195, 0
    %s198 = sadd.s32 %s197, 1
    %s199 = scalar_select %p196, %s197, %s198
    %p202 = pneg %p196
    %p203 = scmp.eq.s32.totalorder %s19, 3
    %p204 = por %p202, %p203
    %p205 = scmp.ne.s32.totalorder %s197, %s200
    %p206 = scmp.eq.s32.totalorder %s19, 0
    %p207 = por %p205, %p206
    %p208 = scmp.ne.s32.totalorder %s197, %s200
    %p209 = scmp.eq.s32.totalorder %s24, 3
    %p210 = por %p208, %p209
    %p211 = scmp.ne.s32.totalorder %s200, %s201
    %p212 = scmp.eq.s32.totalorder %s24, 0
    %p213 = por %p211, %p212
    %p214 = scmp.ne.s32.totalorder %s200, %s201
    %p215 = scmp.eq.s32.totalorder %s25, 3
    %p216 = por %p214, %p215
    %p218 = scmp.ne.s32.totalorder %s201, %s217
    %p219 = scmp.eq.s32.totalorder %s25, 0
    %p220 = por %p218, %p219
    %s221 = ssub.s32 %s27, %s34
    %p222 = scmp.eq.s32.totalorder %s221, 0
    %s224 = sadd.s32 %s223, 1
    %s225 = scalar_select %p222, %s223, %s224
    %p228 = pneg %p222
    %p229 = scmp.eq.s32.totalorder %s19, 3
    %p230 = por %p228, %p229
    %p231 = scmp.ne.s32.totalorder %s223, %s226
    %p232 = scmp.eq.s32.totalorder %s19, 0
    %p233 = por %p231, %p232
    %p234 = scmp.ne.s32.totalorder %s223, %s226
    %p235 = scmp.eq.s32.totalorder %s24, 3
    %p236 = por %p234, %p235
    %p237 = scmp.ne.s32.totalorder %s226, %s227
    %p238 = scmp.eq.s32.totalorder %s24, 0
    %p239 = por %p237, %p238
    %p240 = scmp.ne.s32.totalorder %s226, %s227
    %p241 = scmp.eq.s32.totalorder %s25, 3
    %p242 = por %p240, %p241
    %p244 = scmp.ne.s32.totalorder %s227, %s243
    %p245 = scmp.eq.s32.totalorder %s25, 0
    %p246 = por %p244, %p245
    %s247 = ssub.s32 %s27, %s34
    %p248 = scmp.eq.s32.totalorder %s247, 0
    %s250 = sadd.s32 %s249, 1
    %s251 = scalar_select %p248, %s249, %s250
    %p254 = pneg %p248
    %p255 = scmp.eq.s32.totalorder %s19, 3
    %p256 = por %p254, %p255
    %p257 = scmp.ne.s32.totalorder %s249, %s252
    %p258 = scmp.eq.s32.totalorder %s19, 0
    %p259 = por %p257, %p258
    %p260 = scmp.ne.s32.totalorder %s249, %s252
    %p261 = scmp.eq.s32.totalorder %s24, 3
    %p262 = por %p260, %p261
    %p263 = scmp.ne.s32.totalorder %s252, %s253
    %p264 = scmp.eq.s32.totalorder %s24, 0
    %p265 = por %p263, %p264
    %p266 = scmp.ne.s32.totalorder %s252, %s253
    %p267 = scmp.eq.s32.totalorder %s25, 3
    %p268 = por %p266, %p267
    %p270 = scmp.ne.s32.totalorder %s253, %s269
    %p271 = scmp.eq.s32.totalorder %s25, 0
    %p272 = por %p270, %p271
    %s273 = ssub.s32 %s27, %s34
    %p274 = scmp.eq.s32.totalorder %s273, 0
    %s276 = sadd.s32 %s275, 1
    %s277 = scalar_select %p274, %s275, %s276
    %p280 = pneg %p274
    %p281 = scmp.eq.s32.totalorder %s19, 3
    %p282 = por %p280, %p281
    %p283 = scmp.ne.s32.totalorder %s275, %s278
    %p284 = scmp.eq.s32.totalorder %s19, 0
    %p285 = por %p283, %p284
    %p286 = scmp.ne.s32.totalorder %s275, %s278
    %p287 = scmp.eq.s32.totalorder %s24, 3
    %p288 = por %p286, %p287
    %p289 = scmp.ne.s32.totalorder %s278, %s279
    %p290 = scmp.eq.s32.totalorder %s24, 0
    %p291 = por %p289, %p290
    %p292 = scmp.ne.s32.totalorder %s278, %s279
    %p293 = scmp.eq.s32.totalorder %s25, 3
    %p294 = por %p292, %p293
    %p296 = scmp.ne.s32.totalorder %s279, %s295
    %p297 = scmp.eq.s32.totalorder %s25, 0
    %p298 = por %p296, %p297
    %s299 = ssub.s32 %s27, %s34
    %p300 = scmp.eq.s32.totalorder %s299, 0
    %s302 = sadd.s32 %s301, 1
    %s303 = scalar_select %p300, %s301, %s302
    %p306 = pneg %p300
    %p307 = scmp.eq.s32.totalorder %s19, 3
    %p308 = por %p306, %p307
    %p309 = scmp.ne.s32.totalorder %s301, %s304
    %p310 = scmp.eq.s32.totalorder %s19, 0
    %p311 = por %p309, %p310
    %p312 = scmp.ne.s32.totalorder %s301, %s304
    %p313 = scmp.eq.s32.totalorder %s24, 3
    %p314 = por %p312, %p313
    %p315 = scmp.ne.s32.totalorder %s304, %s305
    %p316 = scmp.eq.s32.totalorder %s24, 0
    %p317 = por %p315, %p316
    %p318 = scmp.ne.s32.totalorder %s304, %s305
    %p319 = scmp.eq.s32.totalorder %s25, 3
    %p320 = por %p318, %p319
    %p322 = scmp.ne.s32.totalorder %s305, %s321
    %p323 = scmp.eq.s32.totalorder %s25, 0
    %p324 = por %p322, %p323
    %s325 = ssub.s32 %s27, %s34
    %p326 = scmp.eq.s32.totalorder %s325, 0
    %s328 = sadd.s32 %s327, 1
    %s329 = scalar_select %p326, %s327, %s328
    %p332 = pneg %p326
    %p333 = scmp.eq.s32.totalorder %s19, 3
    %p334 = por %p332, %p333
    %p335 = scmp.ne.s32.totalorder %s327, %s330
    %p336 = scmp.eq.s32.totalorder %s19, 0
    %p337 = por %p335, %p336
    %p338 = scmp.ne.s32.totalorder %s327, %s330
    %p339 = scmp.eq.s32.totalorder %s24, 3
    %p340 = por %p338, %p339
    %p341 = scmp.ne.s32.totalorder %s330, %s331
    %p342 = scmp.eq.s32.totalorder %s24, 0
    %p343 = por %p341, %p342
    %p344 = scmp.ne.s32.totalorder %s330, %s331
    %p345 = scmp.eq.s32.totalorder %s25, 3
    %p346 = por %p344, %p345
    %p348 = scmp.ne.s32.totalorder %s331, %s347
    %p349 = scmp.eq.s32.totalorder %s25, 0
    %p350 = por %p348, %p349
    %s351 = ssub.s32 %s27, %s34
    %p352 = scmp.eq.s32.totalorder %s351, 0
    %s354 = sadd.s32 %s353, 1
    %s355 = scalar_select %p352, %s353, %s354
    %p358 = pneg %p352
    %p359 = scmp.eq.s32.totalorder %s19, 3
    %p360 = por %p358, %p359
    %p361 = scmp.ne.s32.totalorder %s353, %s356
    %p362 = scmp.eq.s32.totalorder %s19, 0
    %p363 = por %p361, %p362
    %p364 = scmp.ne.s32.totalorder %s353, %s356
    %p365 = scmp.eq.s32.totalorder %s24, 3
    %p366 = por %p364, %p365
    %p367 = scmp.ne.s32.totalorder %s356, %s357
    %p368 = scmp.eq.s32.totalorder %s24, 0
    %p369 = por %p367, %p368
    %p370 = scmp.ne.s32.totalorder %s356, %s357
    %p371 = scmp.eq.s32.totalorder %s25, 3
    %p372 = por %p370, %p371
    %p374 = scmp.ne.s32.totalorder %s357, %s373
    %p375 = scmp.eq.s32.totalorder %s25, 0
    %p376 = por %p374, %p375
    %s377 = ssub.s32 %s26, %s38
    %p378 = scmp.eq.s32.totalorder %s377, 0
    %s380 = sadd.s32 %s379, 1
    %s381 = scalar_select %p378, %s379, %s380
    %p384 = pneg %p378
    %p385 = scmp.eq.s32.totalorder %s19, 3
    %p386 = por %p384, %p385
    %p387 = scmp.ne.s32.totalorder %s379, %s382
    %p388 = scmp.eq.s32.totalorder %s19, 0
    %p389 = por %p387, %p388
    %p390 = scmp.ne.s32.totalorder %s379, %s382
    %p391 = scmp.eq.s32.totalorder %s24, 3
    %p392 = por %p390, %p391
    %p393 = scmp.ne.s32.totalorder %s382, %s383
    %p394 = scmp.eq.s32.totalorder %s24, 0
    %p395 = por %p393, %p394
    %p396 = scmp.ne.s32.totalorder %s382, %s383
    %p397 = scmp.eq.s32.totalorder %s25, 3
    %p398 = por %p396, %p397
    %p400 = scmp.ne.s32.totalorder %s383, %s399
    %p401 = scmp.eq.s32.totalorder %s25, 0
    %p402 = por %p400, %p401
    %p403 = scmp.le.s32.totalorder 1, %s19
    %p404 = scmp.lt.s32.totalorder %s19, 5
    %p405 = pnand %p403, %p404
    %p406 = pneg %p405
    // Predicated region
    $region9: #{clip_feature_extract.8} parent=5 // pred_check
      _
    $region10: #{clip_feature_extract.8} parent=5 // pred_check_branch
      %408 = sbr.rel (%p405) target = $region12
    $region11: #{clip_feature_extract.8} parent=5 // pred_region
      %s409 = ssub.s32 %s19, 1
    $region12: #{clip_feature_extract.8} parent=5 // pred_fallthru
      _
    %p410 = scmp.lt.s32.totalorder %s19, 4
    // Predicated region
    $region13: #{clip_feature_extract.8} parent=5 // pred_check
      %p411 = pneg %p410
    $region14: #{clip_feature_extract.8} parent=5 // pred_check_branch
      %413 = sbr.rel (%p411) target = $region16
    $region15: #{clip_feature_extract.8} parent=5 // pred_region
      // Predicated region
      $region17: #{clip_feature_extract.8} parent=15 // pred_check
        %p414 = pneg %p51
      $region18: #{clip_feature_extract.8} parent=15 // pred_check_branch
        %416 = sbr.rel (%p414) target = $region20
      $region19: #{clip_feature_extract.8} parent=15 // pred_region
        %p417 = scmp.lt.s32.totalorder %s26, 1
        %s418 = scalar_select %p417, %s26, 1
        %s419 = smul.addr %s418, 4
        %s420 = scalar_lea.vmem %s0, %s419
      $region20: #{clip_feature_extract.8} parent=15 // pred_fallthru
        _
      // Predicated region
      $region21: #{clip_feature_extract.8} parent=15 // pred_check
        %p421 = pneg %p77
      $region22: #{clip_feature_extract.8} parent=15 // pred_check_branch
        %423 = sbr.rel (%p421) target = $region24
      $region23: #{clip_feature_extract.8} parent=15 // pred_region
        %p424 = scmp.lt.s32.totalorder %s27, 1
        %s425 = scalar_select %p424, %s27, 1
        %s426 = scalar_lea.vmem %s1, %s425
      $region24: #{clip_feature_extract.8} parent=15 // pred_fallthru
        _
      // Predicated region
      $region25: #{clip_feature_extract.8} parent=15 // pred_check
        %p427 = pneg %p103
      $region26: #{clip_feature_extract.8} parent=15 // pred_check_branch
        %429 = sbr.rel (%p427) target = $region28
      $region27: #{clip_feature_extract.8} parent=15 // pred_region
        %p430 = scmp.lt.s32.totalorder %s27, 1
        %s431 = scalar_select %p430, %s27, 1
        %s432 = scalar_lea.vmem %s2, %s431
      $region28: #{clip_feature_extract.8} parent=15 // pred_fallthru
        _
      // Predicated region
      $region29: #{clip_feature_extract.8} parent=15 // pred_check
        %p433 = pneg %p129
      $region30: #{clip_feature_extract.8} parent=15 // pred_check_branch
        %435 = sbr.rel (%p433) target = $region32
      $region31: #{clip_feature_extract.8} parent=15 // pred_region
        %p436 = scmp.lt.s32.totalorder %s27, 1
        %s437 = scalar_select %p436, %s27, 1
        %s438 = smul.addr %s437, 16
        %s439 = smul.addr %s438, 4
        %s440 = scalar_lea.vmem %s3, %s439
      $region32: #{clip_feature_extract.8} parent=15 // pred_fallthru
        _
      // Predicated region
      $region33: #{clip_feature_extract.8} parent=15 // pred_check
        %p441 = pneg %p155
      $region34: #{clip_feature_extract.8} parent=15 // pred_check_branch
        %443 = sbr.rel (%p441) target = $region36
      $region35: #{clip_feature_extract.8} parent=15 // pred_region
        %p444 = scmp.lt.s32.totalorder %s27, 1
        %s445 = scalar_select %p444, %s27, 1
        %s446 = smul.addr %s445, 2
        %s447 = scalar_lea.vmem %s4, %s446
      $region36: #{clip_feature_extract.8} parent=15 // pred_fallthru
        _
      // Predicated region
      $region37: #{clip_feature_extract.8} parent=15 // pred_check
        %p448 = pneg %p181
      $region38: #{clip_feature_extract.8} parent=15 // pred_check_branch
        %450 = sbr.rel (%p448) target = $region40
      $region39: #{clip_feature_extract.8} parent=15 // pred_region
        %p451 = scmp.lt.s32.totalorder %s27, 1
        %s452 = scalar_select %p451, %s27, 1
        %s453 = smul.addr %s452, 8
        %s454 = smul.addr %s453, 4
        %s455 = scalar_lea.vmem %s5, %s454
      $region40: #{clip_feature_extract.8} parent=15 // pred_fallthru
        _
      // Predicated region
      $region41: #{clip_feature_extract.8} parent=15 // pred_check
        %p456 = pneg %p207
      $region42: #{clip_feature_extract.8} parent=15 // pred_check_branch
        %458 = sbr.rel (%p456) target = $region44
      $region43: #{clip_feature_extract.8} parent=15 // pred_region
        %p459 = scmp.lt.s32.totalorder %s27, 1
        %s460 = scalar_select %p459, %s27, 1
        %s461 = scalar_lea.vmem %s6, %s460
      $region44: #{clip_feature_extract.8} parent=15 // pred_fallthru
        _
      // Predicated region
      $region45: #{clip_feature_extract.8} parent=15 // pred_check
        %p462 = pneg %p233
      $region46: #{clip_feature_extract.8} parent=15 // pred_check_branch
        %464 = sbr.rel (%p462) target = $region48
      $region47: #{clip_feature_extract.8} parent=15 // pred_region
        %p465 = scmp.lt.s32.totalorder %s27, 1
        %s466 = scalar_select %p465, %s27, 1
        %s467 = scalar_lea.vmem %s7, %s466
      $region48: #{clip_feature_extract.8} parent=15 // pred_fallthru
        _
      // Predicated region
      $region49: #{clip_feature_extract.8} parent=15 // pred_check
        %p468 = pneg %p259
      $region50: #{clip_feature_extract.8} parent=15 // pred_check_branch
        %470 = sbr.rel (%p468) target = $region52
      $region51: #{clip_feature_extract.8} parent=15 // pred_region
        %p471 = scmp.lt.s32.totalorder %s27, 1
        %s472 = scalar_select %p471, %s27, 1
        %s473 = scalar_lea.vmem %s8, %s472
      $region52: #{clip_feature_extract.8} parent=15 // pred_fallthru
        _
      // Predicated region
      $region53: #{clip_feature_extract.8} parent=15 // pred_check
        %p474 = pneg %p285
      $region54: #{clip_feature_extract.8} parent=15 // pred_check_branch
        %476 = sbr.rel (%p474) target = $region56
      $region55: #{clip_feature_extract.8} parent=15 // pred_region
        %p477 = scmp.lt.s32.totalorder %s27, 1
        %s478 = scalar_select %p477, %s27, 1
        %s479 = smul.addr %s478, 16
        %s480 = smul.addr %s479, 4
        %s481 = scalar_lea.vmem %s9, %s480
      $region56: #{clip_feature_extract.8} parent=15 // pred_fallthru
        _
      // Predicated region
      $region57: #{clip_feature_extract.8} parent=15 // pred_check
        %p482 = pneg %p311
      $region58: #{clip_feature_extract.8} parent=15 // pred_check_branch
        %484 = sbr.rel (%p482) target = $region60
      $region59: #{clip_feature_extract.8} parent=15 // pred_region
        %p485 = scmp.lt.s32.totalorder %s27, 1
        %s486 = scalar_select %p485, %s27, 1
        %s487 = smul.addr %s486, 2
        %s488 = scalar_lea.vmem %s10, %s487
      $region60: #{clip_feature_extract.8} parent=15 // pred_fallthru
        _
      // Predicated region
      $region61: #{clip_feature_extract.8} parent=15 // pred_check
        %p489 = pneg %p337
      $region62: #{clip_feature_extract.8} parent=15 // pred_check_branch
        %491 = sbr.rel (%p489) target = $region64
      $region63: #{clip_feature_extract.8} parent=15 // pred_region
        %p492 = scmp.lt.s32.totalorder %s27, 1
        %s493 = scalar_select %p492, %s27, 1
        %s494 = smul.addr %s493, 32
        %s495 = smul.addr %s494, 4
        %s496 = scalar_lea.vmem %s11, %s495
      $region64: #{clip_feature_extract.8} parent=15 // pred_fallthru
        _
      // Predicated region
      $region65: #{clip_feature_extract.8} parent=15 // pred_check
        %p497 = pneg %p363
      $region66: #{clip_feature_extract.8} parent=15 // pred_check_branch
        %499 = sbr.rel (%p497) target = $region68
      $region67: #{clip_feature_extract.8} parent=15 // pred_region
        %p500 = scmp.lt.s32.totalorder %s27, 1
        %s501 = scalar_select %p500, %s27, 1
        %s502 = scalar_lea.vmem %s12, %s501
      $region68: #{clip_feature_extract.8} parent=15 // pred_fallthru
        _
    $region16: #{clip_feature_extract.8} parent=5 // pred_fallthru
      _
    %p503 = scmp.le.s32.totalorder 1, %s19
    %p504 = scmp.lt.s32.totalorder %s19, 5
    %p505 = pnand %p503, %p504
    %p506 = pneg %p505
    // Predicated region
    $region69: #{clip_feature_extract.8} parent=5 // pred_check
      _
    $region70: #{clip_feature_extract.8} parent=5 // pred_check_branch
      %508 = sbr.rel (%p505) target = $region72
    $region71: #{clip_feature_extract.8} parent=5 // pred_region
      %s509 = ssub.s32 %s19, 1
      %p510 = scmp.lt.s32.totalorder %s28, 1
      %s511 = scalar_select %p510, %s28, 1
      %s512 = smul.addr %s511, 4
      %s513 = scalar_lea.vmem %s0, %s512
      %p514 = pneg %p57
      %p515 = pneg %p54
      %p516 = scmp.lt.s32.totalorder %s29, 1
      %s517 = scalar_select %p516, %s29, 1
      %s518 = scalar_lea.vmem %s1, %s517
      %p519 = pneg %p83
      %p520 = pneg %p80
      %p521 = scmp.lt.s32.totalorder %s29, 1
      %s522 = scalar_select %p521, %s29, 1
      %s523 = scalar_lea.vmem %s2, %s522
      %p524 = pneg %p109
      %p525 = pneg %p106
      %p526 = scmp.lt.s32.totalorder %s29, 1
      %s527 = scalar_select %p526, %s29, 1
      %s528 = smul.addr %s527, 16
      %s529 = smul.addr %s528, 4
      %s530 = scalar_lea.vmem %s3, %s529
      %p531 = pneg %p135
      %p532 = pneg %p132
      %p533 = scmp.lt.s32.totalorder %s29, 1
      %s534 = scalar_select %p533, %s29, 1
      %s535 = smul.addr %s534, 2
      %s536 = scalar_lea.vmem %s4, %s535
      %p537 = pneg %p161
      %p538 = pneg %p158
      %p539 = scmp.lt.s32.totalorder %s29, 1
      %s540 = scalar_select %p539, %s29, 1
      %s541 = smul.addr %s540, 8
      %s542 = smul.addr %s541, 4
      %s543 = scalar_lea.vmem %s5, %s542
      %p544 = pneg %p187
      %p545 = pneg %p184
      %p546 = scmp.lt.s32.totalorder %s29, 1
      %s547 = scalar_select %p546, %s29, 1
      %s548 = scalar_lea.vmem %s6, %s547
      %p549 = pneg %p213
      %p550 = pneg %p210
      %p551 = scmp.lt.s32.totalorder %s29, 1
      %s552 = scalar_select %p551, %s29, 1
      %s553 = scalar_lea.vmem %s7, %s552
      %p554 = pneg %p239
      %p555 = pneg %p236
      %p556 = scmp.lt.s32.totalorder %s29, 1
      %s557 = scalar_select %p556, %s29, 1
      %s558 = scalar_lea.vmem %s8, %s557
      %p559 = pneg %p265
      %p560 = pneg %p262
      %p561 = scmp.lt.s32.totalorder %s29, 1
      %s562 = scalar_select %p561, %s29, 1
      %s563 = smul.addr %s562, 16
      %s564 = smul.addr %s563, 4
      %s565 = scalar_lea.vmem %s9, %s564
      %p566 = pneg %p291
      %p567 = pneg %p288
      %p568 = scmp.lt.s32.totalorder %s29, 1
      %s569 = scalar_select %p568, %s29, 1
      %s570 = smul.addr %s569, 2
      %s571 = scalar_lea.vmem %s10, %s570
      %p572 = pneg %p317
      %p573 = pneg %p314
      %p574 = scmp.lt.s32.totalorder %s29, 1
      %s575 = scalar_select %p574, %s29, 1
      %s576 = smul.addr %s575, 32
      %s577 = smul.addr %s576, 4
      %s578 = scalar_lea.vmem %s11, %s577
      %p579 = pneg %p343
      %p580 = pneg %p340
      %p581 = scmp.lt.s32.totalorder %s29, 1
      %s582 = scalar_select %p581, %s29, 1
      %s583 = scalar_lea.vmem %s12, %s582
      %p584 = pneg %p369
      %p585 = pneg %p366
      %p586 = pneg %p395
      %p587 = pneg %p392
      %p588 = scmp.lt.s32.totalorder %s28, 1
      %s589 = scalar_select %p588, %s28, 1
      %s590 = smul.addr %s589, 4
      %s591 = scalar_lea.vmem %s13, %s590
      %p592 = scmp.lt.s32.totalorder %s28, 1
      %s593 = scalar_select %p592, %s28, 1
      %s594 = smul.addr %s593, 4
      %s595 = scalar_lea.vmem %s0, %s594
      %p596 = scmp.lt.s32.totalorder %s29, 1
      %s597 = scalar_select %p596, %s29, 1
      %s598 = scalar_lea.vmem %s1, %s597
      %p599 = scmp.lt.s32.totalorder %s29, 1
      %s600 = scalar_select %p599, %s29, 1
      %s601 = scalar_lea.vmem %s2, %s600
      %p602 = scmp.lt.s32.totalorder %s29, 1
      %s603 = scalar_select %p602, %s29, 1
      %s604 = smul.addr %s603, 16
      %s605 = smul.addr %s604, 4
      %s606 = scalar_lea.vmem %s3, %s605
      %p607 = scmp.lt.s32.totalorder %s29, 1
      %s608 = scalar_select %p607, %s29, 1
      %s609 = smul.addr %s608, 2
      %s610 = scalar_lea.vmem %s4, %s609
      %p611 = scmp.lt.s32.totalorder %s29, 1
      %s612 = scalar_select %p611, %s29, 1
      %s613 = smul.addr %s612, 8
      %s614 = smul.addr %s613, 4
      %s615 = scalar_lea.vmem %s5, %s614
      %p616 = scmp.lt.s32.totalorder %s29, 1
      %s617 = scalar_select %p616, %s29, 1
      %s618 = scalar_lea.vmem %s6, %s617
      %p619 = scmp.lt.s32.totalorder %s29, 1
      %s620 = scalar_select %p619, %s29, 1
      %s621 = scalar_lea.vmem %s7, %s620
      %p622 = scmp.lt.s32.totalorder %s29, 1
      %s623 = scalar_select %p622, %s29, 1
      %s624 = scalar_lea.vmem %s8, %s623
      %p625 = scmp.lt.s32.totalorder %s29, 1
      %s626 = scalar_select %p625, %s29, 1
      %s627 = smul.addr %s626, 16
      %s628 = smul.addr %s627, 4
      %s629 = scalar_lea.vmem %s9, %s628
      %p630 = scmp.lt.s32.totalorder %s29, 1
      %s631 = scalar_select %p630, %s29, 1
      %s632 = smul.addr %s631, 2
      %s633 = scalar_lea.vmem %s10, %s632
      %p634 = scmp.lt.s32.totalorder %s29, 1
      %s635 = scalar_select %p634, %s29, 1
      %s636 = smul.addr %s635, 32
      %s637 = smul.addr %s636, 4
      %s638 = scalar_lea.vmem %s11, %s637
      %p639 = scmp.lt.s32.totalorder %s29, 1
      %s640 = scalar_select %p639, %s29, 1
      %s641 = scalar_lea.vmem %s12, %s640
      %p642 = scmp.lt.s32.totalorder %s28, 1
      %s643 = scalar_select %p642, %s28, 1
      %s644 = smul.addr %s643, 4
      %s645 = scalar_lea.vmem %s13, %s644
      %p647 = scmp.eq.s32.totalorder %s29, 0
      // Predicated region
      $region73: #{clip_feature_extract.8} parent=71 // pred_check
        %p648 = pneg %p647
      $region74: #{clip_feature_extract.8} parent=71 // pred_check_branch
        %650 = sbr.rel (%p648) target = $region76
      $region75: #{clip_feature_extract.8} parent=71 // pred_region
        %v651 = vld [vmem:[%s595] sm:$0xf]
        %v652 = vunpack.c.l.bf16 %v651
        %vm653 = vcmask 523264
        %654 = vst.msk [vmem:[#allocation2] sm:$0xff] %vm653, %v652
      $region76: #{clip_feature_extract.8} parent=71 // pred_fallthru
        _
      %v655 = vld [vmem:[#allocation2] sm:$0xff]
      %v656 = vld [vmem:[%s598] sm:$0x1]
      %v657 = vunpack.c.l.bf16 %v656
      %v658 = vld [vmem:[%s601] sm:$0x1]
      %v659 = vunpack.c.l.bf16 %v658
      %vm660 = vcmask 523264
      %v661 = vsel %vm660, %v655, 0.0
      %662 = vadd.xlane.f32.xlu0 %v661
      %v663 = vpop.xlane.xlu0 %662
      %v664 = vrcp.pop 64.0
      %v665 = vmul.f32 64.0, %v664
      %v666 = vsub.f32 1.0, %v665
      %v667 = vmul.f32 %v664, %v666
      %v668 = vadd.f32 %v664, %v667
      %vm669 = vweird.f32 %v664
      %v670 = vsel %vm669, %v664, %v668
      %v671 = vmul.f32 %v663, %v670
      %v672 = vsub.f32 %v655, %v671
      %v673 = vmul.f32 %v672, %v672
      %v674 = vsel %vm660, %v673, 0.0
      %675 = vadd.xlane.f32.xlu0 %v674
      %v676 = vpop.xlane.xlu0 %675
      %v677 = vmul.f32 %v676, %v670
      %v678 = vadd.f32 %v677, 1e-05
      %v679 = vrsqrt.pop %v678
      %v680 = vmul.f32 %v679, %v678
      %v681 = vmul.f32 %v680, %v679
      %v682 = vmul.f32 0.5, %v681
      %v683 = vsub.f32 1.5, %v682
      %v684 = vmul.f32 %v679, %v683
      %vm685 = vweird.f32 %v678
      %vm686 = vweird.f32 %v679
      %vm687 = vmor %vm685, %vm686
      %v688 = vsel %vm687, %v679, %v684
      %v689 = vmul.f32 %v672, %v688
      %v690 = vperm.slane %v657, 0
      %v691 = vmul.f32 %v689, %v690
      %v692 = vperm.slane %v659, 0
      %v693 = vadd.f32 %v691, %v692
      %v694 = vpack.c.bf16 %v693, %v693
      %v695 = vld [vmem:[%s606] sm:$0xff]
      %v696 = vld [vmem:[%s606 + $0x8] sm:$0xff]
      %v697 = vld [vmem:[%s606 + $0x10] sm:$0xff]
      %v698 = vld [vmem:[%s606 + $0x18] sm:$0xff]
      %v699 = vld [vmem:[%s606 + $0x20] sm:$0xff]
      %v700 = vld [vmem:[%s606 + $0x28] sm:$0xff]
      %v701 = vld [vmem:[%s606 + $0x30] sm:$0xff]
      %v702 = vld [vmem:[%s606 + $0x38] sm:$0xff]
      %v703 = vld [vmem:[%s610] sm:$0x3]
      %v704 = vunpack.c.l.bf16 %v703
      %v706 = vperm.slane %v704, 0
      %v707 = vperm.slane %v704, 2
      %v710 = vperm.slane %v706, 0
      %v711 = vperm.slane %v707, 0
      %v720 = vunpack.c.l.b16 %v695
      %v721 = vunpack.c.h.b16 %v695
      %v722 = vunpack.c.l.b16 %v696
      %v723 = vunpack.c.h.b16 %v696
      %v724 = vunpack.c.l.b16 %v697
      %v725 = vunpack.c.h.b16 %v697
      %v726 = vunpack.c.l.b16 %v698
      %v727 = vunpack.c.h.b16 %v698
      %v728 = vunpack.c.l.b16 %v699
      %v729 = vunpack.c.h.b16 %v699
      %v730 = vunpack.c.l.b16 %v700
      %v731 = vunpack.c.h.b16 %v700
      %v732 = vunpack.c.l.b16 %v701
      %v733 = vunpack.c.h.b16 %v701
      %v734 = vunpack.c.l.b16 %v702
      %v735 = vunpack.c.h.b16 %v702
      %v736 = vpack.c.b16 %v722, %v720
      %v737 = vpack.c.b16 %v723, %v721
      %v738 = vpack.c.b16 %v726, %v724
      %v739 = vpack.c.b16 %v727, %v725
      %v740 = vpack.c.b16 %v730, %v728
      %v741 = vpack.c.b16 %v731, %v729
      %v742 = vpack.c.b16 %v734, %v732
      %v743 = vpack.c.b16 %v735, %v733
      %v753 = vsel %vm660, %v694, 0
      %755 = vmatpush.bf16.msra.mxu0 0
      %756 = vmatpush.bf16.msra.mxu0 0
      %757 = vmatpush.bf16.msra.mxu0 0
      %758 = vmatpush.bf16.msra.mxu0 0
      %759 = vmatpush.bf16.msra.mxu0 %v742
      %760 = vmatpush.bf16.msra.mxu0 %v740
      %761 = vmatpush.bf16.msra.mxu0 %v738
      %762 = vmatpush.bf16.msra.mxu0 %v736
      %763 = vmatmul.bf16.gmra.mxu0 %v753
      %v764 = vpop.f32.mrf.mxu0
      %v765 = vadd.f32 %v710, %v764
      %v766 = vpop.f32.mrf.mxu0
      %767 = vdwg.mxu0
      %768 = vmatpush.bf16.msra.mxu0 0
      %769 = vmatpush.bf16.msra.mxu0 0
      %770 = vmatpush.bf16.msra.mxu0 0
      %771 = vmatpush.bf16.msra.mxu0 0
      %772 = vmatpush.bf16.msra.mxu0 %v743
      %773 = vmatpush.bf16.msra.mxu0 %v741
      %774 = vmatpush.bf16.msra.mxu0 %v739
      %775 = vmatpush.bf16.msra.mxu0 %v737
      %776 = vmatmul.bf16.gmra.mxu0 %v753
      %v777 = vpop.f32.mrf.mxu0
      %v778 = vadd.f32 %v711, %v777
      %v779 = vpop.f32.mrf.mxu0
      %780 = vdwg.mxu0
      %v781 = vlaneseq
      %v782 = vshrl.u32 %v781, 7
      %v783 = vlaneseq
      %v784 = vand.u32 %v783, 127
      %vm785 = vcmp.le.s32.totalorder %v784, %v782
      %v786 = vpack.c.bf16 %v765, %v765
      %788 = vrot.lane.b32.xlu0 %v786, 64
      %v789 = vpop.permute.xlu0 %788
      %vm790 = vcmask 130048
      %v792 = vsel %vm790, %v786, 0
      %v795 = vsel %vm790, %v789, 0
      %797 = vmatpush.bf16.xpose.msra.mxu0 0
      %798 = vmatpush.bf16.xpose.msra.mxu0 0
      %799 = vmatpush.bf16.xpose.msra.mxu0 0
      %800 = vmatpush.bf16.xpose.msra.mxu0 0
      %801 = vmatpush.bf16.xpose.msra.mxu0 0
      %802 = vmatpush.bf16.xpose.msra.mxu0 0
      %803 = vmatpush.bf16.xpose.msra.mxu0 0
      %804 = vmatpush.bf16.xpose.msra.mxu0 %v795
      %805 = vmatmul.bf16.gmra.mxu0 %v792
      %v806 = vpop.f32.mrf.mxu0
      %v807 = vadd.f32 0.0, %v806
      %v808 = vpop.f32.mrf.mxu0
      %809 = vdwg.mxu0
      %v810 = vsel %vm785, %v807, -1e+30
      %vm811 = vcmask 64512
      %v812 = vsel %vm811, %v810, -inf
      %813 = vmax.xlane.f32.xlu0 %v812
      %v814 = vpop.xlane.xlu0 %813
      %v815 = vsub.f32 %v810, %v814
      %v816 = vmul.f32 %v815, 1.442695
      %v817 = vpow.pop %v816
      %v818 = vsel %vm811, %v817, 0.0
      %819 = vadd.xlane.f32.xlu0 %v818
      %v820 = vpop.xlane.xlu0 %819
      %v821 = vrcp.pop %v820
      %v822 = vmul.f32 %v817, %v821
      %v823 = vpack.c.bf16 %v822, %v822
      %v824 = vpack.c.bf16 %v778, %v778
      %v826 = vsel %vm811, %v823, 0
      %vm828 = vcmask 1043456
      %v830 = vsel %vm828, %v824, 0
      %832 = vmatpush.bf16.msra.mxu0 0
      %833 = vmatpush.bf16.msra.mxu0 0
      %834 = vmatpush.bf16.msra.mxu0 0
      %835 = vmatpush.bf16.msra.mxu0 0
      %836 = vmatpush.bf16.msra.mxu0 0
      %837 = vmatpush.bf16.msra.mxu0 0
      %838 = vmatpush.bf16.msra.mxu0 0
      %839 = vmatpush.bf16.msra.mxu0 %v830
      %840 = vmatmul.bf16.gmra.mxu0 %v826
      %v841 = vpop.f32.mrf.mxu0
      %v842 = vadd.f32 0.0, %v841
      %v843 = vpop.f32.mrf.mxu0
      %844 = vdwg.mxu0
      %845 = vrot.lane.b32.xlu0 %v786, 112
      %v846 = vpop.permute.xlu0 %845
      %847 = vrot.lane.b32.xlu0 %v786, 48
      %v848 = vpop.permute.xlu0 %847
      %v850 = vsel %vm790, %v846, 0
      %v853 = vsel %vm790, %v848, 0
      %855 = vmatpush.bf16.xpose.msra.mxu0 0
      %856 = vmatpush.bf16.xpose.msra.mxu0 0
      %857 = vmatpush.bf16.xpose.msra.mxu0 0
      %858 = vmatpush.bf16.xpose.msra.mxu0 0
      %859 = vmatpush.bf16.xpose.msra.mxu0 0
      %860 = vmatpush.bf16.xpose.msra.mxu0 0
      %861 = vmatpush.bf16.xpose.msra.mxu0 0
      %862 = vmatpush.bf16.xpose.msra.mxu0 %v853
      %863 = vmatmul.bf16.gmra.mxu0 %v850
      %v864 = vpop.f32.mrf.mxu0
      %v865 = vadd.f32 0.0, %v864
      %v866 = vpop.f32.mrf.mxu0
      %867 = vdwg.mxu0
      %v868 = vsel %vm785, %v865, -1e+30
      %v869 = vsel %vm811, %v868, -inf
      %870 = vmax.xlane.f32.xlu0 %v869
      %v871 = vpop.xlane.xlu0 %870
      %v872 = vsub.f32 %v868, %v871
      %v873 = vmul.f32 %v872, 1.442695
      %v874 = vpow.pop %v873
      %v875 = vsel %vm811, %v874, 0.0
      %876 = vadd.xlane.f32.xlu0 %v875
      %v877 = vpop.xlane.xlu0 %876
      %v878 = vrcp.pop %v877
      %v879 = vmul.f32 %v874, %v878
      %v880 = vpack.c.bf16 %v879, %v879
      %882 = vrot.lane.b32.xlu0 %v824, 112
      %v883 = vpop.permute.xlu0 %882
      %v885 = vsel %vm811, %v880, 0
      %v888 = vsel %vm828, %v883, 0
      %890 = vmatpush.bf16.msra.mxu0 0
      %891 = vmatpush.bf16.msra.mxu0 0
      %892 = vmatpush.bf16.msra.mxu0 0
      %893 = vmatpush.bf16.msra.mxu0 0
      %894 = vmatpush.bf16.msra.mxu0 0
      %895 = vmatpush.bf16.msra.mxu0 0
      %896 = vmatpush.bf16.msra.mxu0 0
      %897 = vmatpush.bf16.msra.mxu0 %v888
      %898 = vmatmul.bf16.gmra.mxu0 %v885
      %v899 = vpop.f32.mrf.mxu0
      %v900 = vadd.f32 0.0, %v899
      %v901 = vpop.f32.mrf.mxu0
      %902 = vdwg.mxu0
      %903 = vrot.lane.b32.xlu0 %v786, 96
      %v904 = vpop.permute.xlu0 %903
      %905 = vrot.lane.b32.xlu0 %v786, 32
      %v906 = vpop.permute.xlu0 %905
      %v908 = vsel %vm790, %v904, 0
      %v911 = vsel %vm790, %v906, 0
      %913 = vmatpush.bf16.xpose.msra.mxu0 0
      %914 = vmatpush.bf16.xpose.msra.mxu0 0
      %915 = vmatpush.bf16.xpose.msra.mxu0 0
      %916 = vmatpush.bf16.xpose.msra.mxu0 0
      %917 = vmatpush.bf16.xpose.msra.mxu0 0
      %918 = vmatpush.bf16.xpose.msra.mxu0 0
      %919 = vmatpush.bf16.xpose.msra.mxu0 0
      %920 = vmatpush.bf16.xpose.msra.mxu0 %v911
      %921 = vmatmul.bf16.gmra.mxu0 %v908
      %v922 = vpop.f32.mrf.mxu0
      %v923 = vadd.f32 0.0, %v922
      %v924 = vpop.f32.mrf.mxu0
      %925 = vdwg.mxu0
      %v926 = vsel %vm785, %v923, -1e+30
      %v927 = vsel %vm811, %v926, -inf
      %928 = vmax.xlane.f32.xlu0 %v927
      %v929 = vpop.xlane.xlu0 %928
      %v930 = vsub.f32 %v926, %v929
      %v931 = vmul.f32 %v930, 1.442695
      %v932 = vpow.pop %v931
      %v933 = vsel %vm811, %v932, 0.0
      %934 = vadd.xlane.f32.xlu0 %v933
      %v935 = vpop.xlane.xlu0 %934
      %v936 = vrcp.pop %v935
      %v937 = vmul.f32 %v932, %v936
      %v938 = vpack.c.bf16 %v937, %v937
      %939 = vrot.lane.b32.xlu0 %v824, 96
      %v940 = vpop.permute.xlu0 %939
      %v942 = vsel %vm811, %v938, 0
      %v945 = vsel %vm828, %v940, 0
      %947 = vmatpush.bf16.msra.mxu0 0
      %948 = vmatpush.bf16.msra.mxu0 0
      %949 = vmatpush.bf16.msra.mxu0 0
      %950 = vmatpush.bf16.msra.mxu0 0
      %951 = vmatpush.bf16.msra.mxu0 0
      %952 = vmatpush.bf16.msra.mxu0 0
      %953 = vmatpush.bf16.msra.mxu0 0
      %954 = vmatpush.bf16.msra.mxu0 %v945
      %955 = vmatmul.bf16.gmra.mxu0 %v942
      %v956 = vpop.f32.mrf.mxu0
      %v957 = vadd.f32 0.0, %v956
      %v958 = vpop.f32.mrf.mxu0
      %959 = vdwg.mxu0
      %960 = vrot.lane.b32.xlu0 %v786, 80
      %v961 = vpop.permute.xlu0 %960
      %962 = vrot.lane.b32.xlu0 %v786, 16
      %v963 = vpop.permute.xlu0 %962
      %v965 = vsel %vm790, %v961, 0
      %v968 = vsel %vm790, %v963, 0
      %970 = vmatpush.bf16.xpose.msra.mxu0 0
      %971 = vmatpush.bf16.xpose.msra.mxu0 0
      %972 = vmatpush.bf16.xpose.msra.mxu0 0
      %973 = vmatpush.bf16.xpose.msra.mxu0 0
      %974 = vmatpush.bf16.xpose.msra.mxu0 0
      %975 = vmatpush.bf16.xpose.msra.mxu0 0
      %976 = vmatpush.bf16.xpose.msra.mxu0 0
      %977 = vmatpush.bf16.xpose.msra.mxu0 %v968
      %978 = vmatmul.bf16.gmra.mxu0 %v965
      %v979 = vpop.f32.mrf.mxu0
      %v980 = vadd.f32 0.0, %v979
      %v981 = vpop.f32.mrf.mxu0
      %982 = vdwg.mxu0
      %v983 = vsel %vm785, %v980, -1e+30
      %v984 = vsel %vm811, %v983, -inf
      %985 = vmax.xlane.f32.xlu0 %v984
      %v986 = vpop.xlane.xlu0 %985
      %v987 = vsub.f32 %v983, %v986
      %v988 = vmul.f32 %v987, 1.442695
      %v989 = vpow.pop %v988
      %v990 = vsel %vm811, %v989, 0.0
      %991 = vadd.xlane.f32.xlu0 %v990
      %v992 = vpop.xlane.xlu0 %991
      %v993 = vrcp.pop %v992
      %v994 = vmul.f32 %v989, %v993
      %v995 = vpack.c.bf16 %v994, %v994
      %996 = vrot.lane.b32.xlu0 %v824, 80
      %v997 = vpop.permute.xlu0 %996
      %v999 = vsel %vm811, %v995, 0
      %v1002 = vsel %vm828, %v997, 0
      %1004 = vmatpush.bf16.msra.mxu0 0
      %1005 = vmatpush.bf16.msra.mxu0 0
      %1006 = vmatpush.bf16.msra.mxu0 0
      %1007 = vmatpush.bf16.msra.mxu0 0
      %1008 = vmatpush.bf16.msra.mxu0 0
      %1009 = vmatpush.bf16.msra.mxu0 0
      %1010 = vmatpush.bf16.msra.mxu0 0
      %1011 = vmatpush.bf16.msra.mxu0 %v1002
      %1012 = vmatmul.bf16.gmra.mxu0 %v999
      %v1013 = vpop.f32.mrf.mxu0
      %v1014 = vadd.f32 0.0, %v1013
      %v1015 = vpop.f32.mrf.mxu0
      %1016 = vdwg.mxu0
      %1018 = vrot.lane.b32.xlu0 %v900, 16
      %v1019 = vpop.permute.xlu0 %1018
      %1022 = vrot.lane.b32.xlu0 %v957, 32
      %v1023 = vpop.permute.xlu0 %1022
      %1026 = vrot.lane.b32.xlu0 %v1014, 48
      %v1027 = vpop.permute.xlu0 %1026
      %v1029 = vsel %vm790, %v842, %v1019
      %vm1030 = vcmask 261120
      %v1031 = vsel %vm1030, %v1029, %v1023
      %vm1032 = vcmask 392192
      %v1033 = vsel %vm1032, %v1031, %v1027
      %v1034 = vpack.c.bf16 %v1033, %v1033
      %v1035 = vld [vmem:[%s615] sm:$0xf]
      %v1036 = vld [vmem:[%s615 + $0x4] sm:$0xf]
      %v1037 = vld [vmem:[%s615 + $0x8] sm:$0xf]
      %v1038 = vld [vmem:[%s615 + $0xc] sm:$0xf]
      %v1039 = vld [vmem:[%s615 + $0x10] sm:$0xf]
      %v1040 = vld [vmem:[%s615 + $0x14] sm:$0xf]
      %v1041 = vld [vmem:[%s615 + $0x18] sm:$0xf]
      %v1042 = vld [vmem:[%s615 + $0x1c] sm:$0xf]
      %v1043 = vld [vmem:[%s618] sm:$0x1]
      %v1044 = vunpack.c.l.bf16 %v1043
      %v1045 = vperm.slane %v1044, 0
      %v1054 = vunpack.c.l.b16 %v1035
      %v1055 = vunpack.c.l.b16 %v1036
      %v1056 = vunpack.c.l.b16 %v1037
      %v1057 = vunpack.c.l.b16 %v1038
      %v1058 = vunpack.c.l.b16 %v1039
      %v1059 = vunpack.c.l.b16 %v1040
      %v1060 = vunpack.c.l.b16 %v1041
      %v1061 = vunpack.c.l.b16 %v1042
      %v1062 = vpack.c.b16 %v1055, %v1054
      %v1063 = vpack.c.b16 %v1057, %v1056
      %v1064 = vpack.c.b16 %v1059, %v1058
      %v1065 = vpack.c.b16 %v1061, %v1060
      %v1071 = vsel %vm660, %v1034, 0
      %1073 = vmatpush.bf16.msra.mxu0 0
      %1074 = vmatpush.bf16.msra.mxu0 0
      %1075 = vmatpush.bf16.msra.mxu0 0
      %1076 = vmatpush.bf16.msra.mxu0 0
      %1077 = vmatpush.bf16.msra.mxu0 %v1065
      %1078 = vmatpush.bf16.msra.mxu0 %v1064
      %1079 = vmatpush.bf16.msra.mxu0 %v1063
      %1080 = vmatpush.bf16.msra.mxu0 %v1062
      %1081 = vmatmul.bf16.gmra.mxu0 %v1071
      %v1082 = vpop.f32.mrf.mxu0
      %v1083 = vadd.f32 %v1045, %v1082
      %v1084 = vpop.f32.mrf.mxu0
      %1085 = vdwg.mxu0
      %v1086 = vadd.f32 %v655, %v1083
      %v1087 = vld [vmem:[%s621] sm:$0x1]
      %v1088 = vunpack.c.l.bf16 %v1087
      %v1089 = vld [vmem:[%s624] sm:$0x1]
      %v1090 = vunpack.c.l.bf16 %v1089
      %v1091 = vsel %vm660, %v1086, 0.0
      %1092 = vadd.xlane.f32.xlu0 %v1091
      %v1093 = vpop.xlane.xlu0 %1092
      %v1094 = vmul.f32 %v1093, %v670
      %v1095 = vsub.f32 %v1086, %v1094
      %v1096 = vmul.f32 %v1095, %v1095
      %v1097 = vsel %vm660, %v1096, 0.0
      %1098 = vadd.xlane.f32.xlu0 %v1097
      %v1099 = vpop.xlane.xlu0 %1098
      %v1100 = vmul.f32 %v1099, %v670
      %v1101 = vadd.f32 %v1100, 1e-05
      %v1102 = vrsqrt.pop %v1101
      %v1103 = vmul.f32 %v1102, %v1101
      %v1104 = vmul.f32 %v1103, %v1102
      %v1105 = vmul.f32 0.5, %v1104
      %v1106 = vsub.f32 1.5, %v1105
      %v1107 = vmul.f32 %v1102, %v1106
      %vm1108 = vweird.f32 %v1101
      %vm1109 = vweird.f32 %v1102
      %vm1110 = vmor %vm1108, %vm1109
      %v1111 = vsel %vm1110, %v1102, %v1107
      %v1112 = vmul.f32 %v1095, %v1111
      %v1113 = vperm.slane %v1088, 0
      %v1114 = vmul.f32 %v1112, %v1113
      %v1115 = vperm.slane %v1090, 0
      %v1116 = vadd.f32 %v1114, %v1115
      %v1117 = vpack.c.bf16 %v1116, %v1116
      %v1118 = vld [vmem:[%s629] sm:$0xff]
      %v1119 = vld [vmem:[%s629 + $0x8] sm:$0xff]
      %v1120 = vld [vmem:[%s629 + $0x10] sm:$0xff]
      %v1121 = vld [vmem:[%s629 + $0x18] sm:$0xff]
      %v1122 = vld [vmem:[%s629 + $0x20] sm:$0xff]
      %v1123 = vld [vmem:[%s629 + $0x28] sm:$0xff]
      %v1124 = vld [vmem:[%s629 + $0x30] sm:$0xff]
      %v1125 = vld [vmem:[%s629 + $0x38] sm:$0xff]
      %v1126 = vld [vmem:[%s633] sm:$0x3]
      %v1127 = vunpack.c.l.bf16 %v1126
      %v1129 = vperm.slane %v1127, 0
      %v1130 = vperm.slane %v1127, 2
      %v1133 = vperm.slane %v1129, 0
      %v1134 = vperm.slane %v1130, 0
      %v1143 = vunpack.c.l.b16 %v1118
      %v1144 = vunpack.c.h.b16 %v1118
      %v1145 = vunpack.c.l.b16 %v1119
      %v1146 = vunpack.c.h.b16 %v1119
      %v1147 = vunpack.c.l.b16 %v1120
      %v1148 = vunpack.c.h.b16 %v1120
      %v1149 = vunpack.c.l.b16 %v1121
      %v1150 = vunpack.c.h.b16 %v1121
      %v1151 = vunpack.c.l.b16 %v1122
      %v1152 = vunpack.c.h.b16 %v1122
      %v1153 = vunpack.c.l.b16 %v1123
      %v1154 = vunpack.c.h.b16 %v1123
      %v1155 = vunpack.c.l.b16 %v1124
      %v1156 = vunpack.c.h.b16 %v1124
      %v1157 = vunpack.c.l.b16 %v1125
      %v1158 = vunpack.c.h.b16 %v1125
      %v1159 = vpack.c.b16 %v1145, %v1143
      %v1160 = vpack.c.b16 %v1146, %v1144
      %v1161 = vpack.c.b16 %v1149, %v1147
      %v1162 = vpack.c.b16 %v1150, %v1148
      %v1163 = vpack.c.b16 %v1153, %v1151
      %v1164 = vpack.c.b16 %v1154, %v1152
      %v1165 = vpack.c.b16 %v1157, %v1155
      %v1166 = vpack.c.b16 %v1158, %v1156
      %v1176 = vsel %vm660, %v1117, 0
      %1178 = vmatpush.bf16.msra.mxu0 0
      %1179 = vmatpush.bf16.msra.mxu0 0
      %1180 = vmatpush.bf16.msra.mxu0 0
      %1181 = vmatpush.bf16.msra.mxu0 0
      %1182 = vmatpush.bf16.msra.mxu0 %v1165
      %1183 = vmatpush.bf16.msra.mxu0 %v1163
      %1184 = vmatpush.bf16.msra.mxu0 %v1161
      %1185 = vmatpush.bf16.msra.mxu0 %v1159
      %1186 = vmatmul.bf16.gmra.mxu0 %v1176
      %v1187 = vpop.f32.mrf.mxu0
      %v1188 = vadd.f32 %v1133, %v1187
      %v1189 = vpop.f32.mrf.mxu0
      %1190 = vdwg.mxu0
      %1191 = vmatpush.bf16.msra.mxu0 0
      %1192 = vmatpush.bf16.msra.mxu0 0
      %1193 = vmatpush.bf16.msra.mxu0 0
      %1194 = vmatpush.bf16.msra.mxu0 0
      %1195 = vmatpush.bf16.msra.mxu0 %v1166
      %1196 = vmatpush.bf16.msra.mxu0 %v1164
      %1197 = vmatpush.bf16.msra.mxu0 %v1162
      %1198 = vmatpush.bf16.msra.mxu0 %v1160
      %1199 = vmatmul.bf16.gmra.mxu0 %v1176
      %v1200 = vpop.f32.mrf.mxu0
      %v1201 = vadd.f32 %v1134, %v1200
      %v1202 = vpop.f32.mrf.mxu0
      %1203 = vdwg.mxu0
      %v1204 = vmul.f32 %v1188, 1.702
      %v1205 = vmul.f32 %v1201, 1.702
      %v1206 = vxor.u32 %v1204, 2147483648
      %v1207 = vxor.u32 %v1205, 2147483648
      %v1208 = vmul.f32 %v1206, 1.442695
      %v1209 = vpow.pop %v1208
      %v1210 = vmul.f32 %v1207, 1.442695
      %v1211 = vpow.pop %v1210
      %v1212 = vadd.f32 %v1209, 1.0
      %v1213 = vadd.f32 %v1211, 1.0
      %v1214 = vrcp.pop %v1212
      %v1215 = vmul.f32 %v1212, %v1214
      %v1216 = vsub.f32 1.0, %v1215
      %v1217 = vmul.f32 %v1214, %v1216
      %v1218 = vadd.f32 %v1214, %v1217
      %vm1219 = vweird.f32 %v1212
      %vm1220 = vweird.f32 %v1214
      %vm1221 = vmor %vm1219, %vm1220
      %v1222 = vsel %vm1221, %v1214, %v1218
      %v1223 = vand.u32 2147483647, %v1212
      %vm1224 = vcmp.eq.f32.partialorder %v1223, 8.507059e+37
      %v1225 = vand.u32 %v1212, 2147483648
      %v1226 = vor.u32 1.1754944e-38, %v1225
      %v1227 = vsel %vm1224, %v1226, %v1222
      %v1228 = vmul.f32 1.0, %v1227
      %v1229 = vrcp.pop %v1213
      %v1230 = vmul.f32 %v1213, %v1229
      %v1231 = vsub.f32 1.0, %v1230
      %v1232 = vmul.f32 %v1229, %v1231
      %v1233 = vadd.f32 %v1229, %v1232
      %vm1234 = vweird.f32 %v1213
      %vm1235 = vweird.f32 %v1229
      %vm1236 = vmor %vm1234, %vm1235
      %v1237 = vsel %vm1236, %v1229, %v1233
      %v1238 = vand.u32 2147483647, %v1213
      %vm1239 = vcmp.eq.f32.partialorder %v1238, 8.507059e+37
      %v1240 = vand.u32 %v1213, 2147483648
      %v1241 = vor.u32 1.1754944e-38, %v1240
      %v1242 = vsel %vm1239, %v1241, %v1237
      %v1243 = vmul.f32 1.0, %v1242
      %v1244 = vmul.f32 %v1188, %v1228
      %v1245 = vmul.f32 %v1201, %v1243
      %v1246 = vpack.c.bf16 %v1244, %v1244
      %v1247 = vpack.c.bf16 %v1245, %v1245
      %v1248 = vld [vmem:[%s638] sm:$0xf]
      %v1249 = vld [vmem:[%s638 + $0x4] sm:$0xf]
      %v1250 = vld [vmem:[%s638 + $0x8] sm:$0xf]
      %v1251 = vld [vmem:[%s638 + $0xc] sm:$0xf]
      %v1252 = vld [vmem:[%s638 + $0x10] sm:$0xf]
      %v1253 = vld [vmem:[%s638 + $0x14] sm:$0xf]
      %v1254 = vld [vmem:[%s638 + $0x18] sm:$0xf]
      %v1255 = vld [vmem:[%s638 + $0x1c] sm:$0xf]
      %v1256 = vld [vmem:[%s638 + $0x20] sm:$0xf]
      %v1257 = vld [vmem:[%s638 + $0x24] sm:$0xf]
      %v1258 = vld [vmem:[%s638 + $0x28] sm:$0xf]
      %v1259 = vld [vmem:[%s638 + $0x2c] sm:$0xf]
      %v1260 = vld [vmem:[%s638 + $0x30] sm:$0xf]
      %v1261 = vld [vmem:[%s638 + $0x34] sm:$0xf]
      %v1262 = vld [vmem:[%s638 + $0x38] sm:$0xf]
      %v1263 = vld [vmem:[%s638 + $0x3c] sm:$0xf]
      %v1264 = vld [vmem:[%s638 + $0x40] sm:$0xf]
      %v1265 = vld [vmem:[%s638 + $0x44] sm:$0xf]
      %v1266 = vld [vmem:[%s638 + $0x48] sm:$0xf]
      %v1267 = vld [vmem:[%s638 + $0x4c] sm:$0xf]
      %v1268 = vld [vmem:[%s638 + $0x50] sm:$0xf]
      %v1269 = vld [vmem:[%s638 + $0x54] sm:$0xf]
      %v1270 = vld [vmem:[%s638 + $0x58] sm:$0xf]
      %v1271 = vld [vmem:[%s638 + $0x5c] sm:$0xf]
      %v1272 = vld [vmem:[%s638 + $0x60] sm:$0xf]
      %v1273 = vld [vmem:[%s638 + $0x64] sm:$0xf]
      %v1274 = vld [vmem:[%s638 + $0x68] sm:$0xf]
      %v1275 = vld [vmem:[%s638 + $0x6c] sm:$0xf]
      %v1276 = vld [vmem:[%s638 + $0x70] sm:$0xf]
      %v1277 = vld [vmem:[%s638 + $0x74] sm:$0xf]
      %v1278 = vld [vmem:[%s638 + $0x78] sm:$0xf]
      %v1279 = vld [vmem:[%s638 + $0x7c] sm:$0xf]
      %v1280 = vld [vmem:[%s641] sm:$0x1]
      %v1281 = vunpack.c.l.bf16 %v1280
      %v1282 = vperm.slane %v1281, 0
      %v1315 = vunpack.c.l.b16 %v1248
      %v1316 = vunpack.c.l.b16 %v1249
      %v1317 = vunpack.c.l.b16 %v1250
      %v1318 = vunpack.c.l.b16 %v1251
      %v1319 = vunpack.c.l.b16 %v1252
      %v1320 = vunpack.c.l.b16 %v1253
      %v1321 = vunpack.c.l.b16 %v1254
      %v1322 = vunpack.c.l.b16 %v1255
      %v1323 = vunpack.c.l.b16 %v1256
      %v1324 = vunpack.c.l.b16 %v1257
      %v1325 = vunpack.c.l.b16 %v1258
      %v1326 = vunpack.c.l.b16 %v1259
      %v1327 = vunpack.c.l.b16 %v1260
      %v1328 = vunpack.c.l.b16 %v1261
      %v1329 = vunpack.c.l.b16 %v1262
      %v1330 = vunpack.c.l.b16 %v1263
      %v1331 = vunpack.c.l.b16 %v1264
      %v1332 = vunpack.c.l.b16 %v1265
      %v1333 = vunpack.c.l.b16 %v1266
      %v1334 = vunpack.c.l.b16 %v1267
      %v1335 = vunpack.c.l.b16 %v1268
      %v1336 = vunpack.c.l.b16 %v1269
      %v1337 = vunpack.c.l.b16 %v1270
      %v1338 = vunpack.c.l.b16 %v1271
      %v1339 = vunpack.c.l.b16 %v1272
      %v1340 = vunpack.c.l.b16 %v1273
      %v1341 = vunpack.c.l.b16 %v1274
      %v1342 = vunpack.c.l.b16 %v1275
      %v1343 = vunpack.c.l.b16 %v1276
      %v1344 = vunpack.c.l.b16 %v1277
      %v1345 = vunpack.c.l.b16 %v1278
      %v1346 = vunpack.c.l.b16 %v1279
      %v1347 = vpack.c.b16 %v1316, %v1315
      %v1348 = vpack.c.b16 %v1318, %v1317
      %v1349 = vpack.c.b16 %v1320, %v1319
      %v1350 = vpack.c.b16 %v1322, %v1321
      %v1351 = vpack.c.b16 %v1324, %v1323
      %v1352 = vpack.c.b16 %v1326, %v1325
      %v1353 = vpack.c.b16 %v1328, %v1327
      %v1354 = vpack.c.b16 %v1330, %v1329
      %v1355 = vpack.c.b16 %v1332, %v1331
      %v1356 = vpack.c.b16 %v1334, %v1333
      %v1357 = vpack.c.b16 %v1336, %v1335
      %v1358 = vpack.c.b16 %v1338, %v1337
      %v1359 = vpack.c.b16 %v1340, %v1339
      %v1360 = vpack.c.b16 %v1342, %v1341
      %v1361 = vpack.c.b16 %v1344, %v1343
      %v1362 = vpack.c.b16 %v1346, %v1345
      %1379 = vmatpush.bf16.msra.mxu0 %v1354
      %1380 = vmatpush.bf16.msra.mxu0 %v1353
      %1381 = vmatpush.bf16.msra.mxu0 %v1352
      %1382 = vmatpush.bf16.msra.mxu0 %v1351
      %1383 = vmatpush.bf16.msra.mxu0 %v1350
      %1384 = vmatpush.bf16.msra.mxu0 %v1349
      %1385 = vmatpush.bf16.msra.mxu0 %v1348
      %1386 = vmatpush.bf16.msra.mxu0 %v1347
      %1387 = vmatmul.bf16.gmra.mxu0 %v1246
      %v1388 = vpop.f32.mrf.mxu0
      %v1389 = vadd.f32 %v1282, %v1388
      %v1390 = vpop.f32.mrf.mxu0
      %1391 = vdwg.mxu0
      %1392 = vmatpush.bf16.msra.mxu0 %v1362
      %1393 = vmatpush.bf16.msra.mxu0 %v1361
      %1394 = vmatpush.bf16.msra.mxu0 %v1360
      %1395 = vmatpush.bf16.msra.mxu0 %v1359
      %1396 = vmatpush.bf16.msra.mxu0 %v1358
      %1397 = vmatpush.bf16.msra.mxu0 %v1357
      %1398 = vmatpush.bf16.msra.mxu0 %v1356
      %1399 = vmatpush.bf16.msra.mxu0 %v1355
      %1400 = vmatmul.bf16.gmra.mxu0 %v1247
      %v1401 = vpop.f32.mrf.mxu0
      %v1402 = vadd.f32 %v1389, %v1401
      %v1403 = vpop.f32.mrf.mxu0
      %1404 = vdwg.mxu0
      %v1405 = vadd.f32 %v1086, %v1402
      %1406 = vst.msk [vmem:[#allocation2] sm:$0xff] %vm660, %v1405
      %p1407 = scmp.eq.s32.totalorder %s29, 1
      // Predicated region
      $region77: #{clip_feature_extract.8} parent=71 // pred_check
        %p1408 = pneg %p1407
      $region78: #{clip_feature_extract.8} parent=71 // pred_check_branch
        %1410 = sbr.rel (%p1408) target = $region80
      $region79: #{clip_feature_extract.8} parent=71 // pred_region
        %v1411 = vpack.c.bf16 %v1405, %v1405
        %vm1412 = vcmask 519168
        %1413 = vst.msk [vmem:[%s645] sm:$0xf] %vm1412, %v1411
      $region80: #{clip_feature_extract.8} parent=71 // pred_fallthru
        _
      %p1414 = scmp.lt.s32.totalorder %s28, 1
      %s1415 = scalar_select %p1414, %s28, 1
      %s1416 = smul.addr %s1415, 4
      %s1417 = scalar_lea.vmem %s13, %s1416
      // Predicated region
      $region81: #{clip_feature_extract.8} parent=71 // pred_check
        %p1418 = pneg %p392
      $region82: #{clip_feature_extract.8} parent=71 // pred_check_branch
        %1420 = sbr.rel (%p1418) target = $region84
      $region83: #{clip_feature_extract.8} parent=71 // pred_region
        _
      $region84: #{clip_feature_extract.8} parent=71 // pred_fallthru
        _
    $region72: #{clip_feature_extract.8} parent=5 // pred_fallthru
      _
    %p1421 = scmp.le.s32.totalorder 2, %s19
    // Predicated region
    $region85: #{clip_feature_extract.8} parent=5 // pred_check
      %p1422 = pneg %p1421
    $region86: #{clip_feature_extract.8} parent=5 // pred_check_branch
      %1424 = sbr.rel (%p1422) target = $region88
    $region87: #{clip_feature_extract.8} parent=5 // pred_region
      %s1425 = ssub.s32 %s19, 2
      // Predicated region
      $region89: #{clip_feature_extract.8} parent=87 // pred_check
        %p1426 = pneg %p398
      $region90: #{clip_feature_extract.8} parent=87 // pred_check_branch
        %1428 = sbr.rel (%p1426) target = $region92
      $region91: #{clip_feature_extract.8} parent=87 // pred_region
        %p1429 = scmp.lt.s32.totalorder %s30, 1
        %s1430 = scalar_select %p1429, %s30, 1
        %s1431 = smul.addr %s1430, 4
        %s1432 = scalar_lea.vmem %s13, %s1431
      $region92: #{clip_feature_extract.8} parent=87 // pred_fallthru
        _
    $region88: #{clip_feature_extract.8} parent=5 // pred_fallthru
      _
  $region6: #{clip_feature_extract.8} parent=0 // loop_footer
    %s23 = sadd.s32 1, %s19
  $region7: #{clip_feature_extract.8} parent=0 // loop_footer_branch
    %18 = sbr.rel target = $region3
  $region8: #{clip_feature_extract.8} parent=0 // loop_exit
    _

</llo_original>
